<compile_context>
chip_gen: v7x
topology: tpu7x:2x2x1
jax: 0.10.0
libtpu: 0.0.40
codegen_flags: <defaults>
</compile_context>

<pallas_src>
import math

import jax
import jax.numpy as jnp
from jax.experimental import pallas as pl
from jax.experimental.pallas import tpu as pltpu

# ----------------------------- small ViT config ------------------------------
# (Small shapes consistent with the module; the real config is dim=768 etc.)
IMAGE_SIZE = 32
PATCH_SIZE = 16
NUM_CLASSES = 16
DIM = 64
DEPTH = 2
HEADS = 4
MLP_DIM = 128
HEAD_DIM = DIM // HEADS
N_PATCHES = (IMAGE_SIZE // PATCH_SIZE) ** 2           # 4
SEQ = N_PATCHES + 1                                   # 5 (cls token + patches)
SEQ_PAD = 8                                           # pad to the f32 sublane tile
PATCH_PIX = 3 * PATCH_SIZE * PATCH_SIZE               # 768
LN_EPS = 1e-5
LANE = 128                                            # lane-dense logits pad width


# ------------------------------ kernel helpers --------------------------------
def _layernorm(v, gamma, beta):
    mu = jnp.mean(v, axis=-1, keepdims=True)
    var = jnp.mean((v - mu) ** 2, axis=-1, keepdims=True)
    return (v - mu) * jax.lax.rsqrt(var + LN_EPS) * gamma + beta


def _gelu_exact(v):
    # torch.gelu default = exact erf-based GeLU (kept exact on purpose).
    return 0.5 * v * (1.0 + jax.lax.erf(v * (1.0 / math.sqrt(2.0))))


# ------------------------------ fused ViT kernel ------------------------------
# One grid step == one image: token rows are [cls, p0, p1, p2, p3, pad, pad, pad].
def vit_fused_kernel(
    patches_ref,               # (SEQ_PAD, PATCH_PIX) f32; zero rows at cls/pad slots
    w_patch_ref, b_patch_ref,  # (PATCH_PIX, DIM) bf16, (1, DIM) f32
    base_tok_ref,              # (SEQ_PAD, DIM) f32: pos embed (+ cls tok on row 0), 0 on pads
    is_patch_ref,              # (SEQ_PAD, 1) f32: 1.0 on patch rows, else 0.0
    g1_ref, b1_ref,            # (DEPTH, 1, DIM) f32
    wqkv_ref,                  # (DEPTH, DIM, 3*DIM) bf16
    wproj_ref,                 # (DEPTH, DIM, DIM) bf16
    bproj_ref,                 # (DEPTH, 1, DIM) f32
    g2_ref, b2_ref,            # (DEPTH, 1, DIM) f32
    wfc1_ref, bfc1_ref,        # (DEPTH, DIM, MLP_DIM) bf16, (DEPTH, 1, MLP_DIM) f32
    wfc2_ref, bfc2_ref,        # (DEPTH, MLP_DIM, DIM) bf16, (DEPTH, 1, DIM) f32
    w_head_ref, b_head_ref,    # (DIM, LANE) bf16, (1, LANE) f32 (zero past NUM_CLASSES)
    o_ref,                     # (SEQ_PAD, LANE) f32
):
    f32 = jnp.float32
    bf16 = jnp.bfloat16
    scale = HEAD_DIM ** (-0.5)

    # ---- patch embedding + cls token + positional embedding ------------------
    emb = jnp.dot(patches_ref[...].astype(bf16), w_patch_ref[...],
                  preferred_element_type=f32)
    emb = emb + b_patch_ref[...]
    x = emb * is_patch_ref[...] + base_tok_ref[...]            # (SEQ_PAD, DIM) f32

    # key-padding additive bias, generated in-kernel (no O(S^2) HBM array).
    kidx = jax.lax.broadcasted_iota(jnp.int32, (1, SEQ_PAD), 1)
    key_bias = jnp.where(kidx < SEQ, 0.0, -1e30).astype(f32)   # (1, SEQ_PAD)

    for d in range(DEPTH):                                     # static unroll
        # ---- attention branch (pre-LN) ---------------------------------------
        h = _layernorm(x, g1_ref[d], b1_ref[d])                # (S, D) f32
        # single lane-dense qkv matmul (bf16 MXU path, f32 accumulate)
        qkv = jnp.dot(h.astype(bf16), wqkv_ref[d], preferred_element_type=f32)  # (S, 3D)

        heads_out = []
        for hh in range(HEADS):                                # static per-head slices
            q = qkv[:, hh * HEAD_DIM:(hh + 1) * HEAD_DIM]                      # (S, hd)
            k = qkv[:, DIM + hh * HEAD_DIM:DIM + (hh + 1) * HEAD_DIM]          # (S, hd)
            v = qkv[:, 2 * DIM + hh * HEAD_DIM:2 * DIM + (hh + 1) * HEAD_DIM]  # (S, hd)
            s = jax.lax.dot_general(                           # q @ k.T, no explicit .T
                q, k, (((1,), (1,)), ((), ())), preferred_element_type=f32) * scale
            s = s + key_bias
            s = s - jnp.max(s, axis=-1, keepdims=True)
            p = jnp.exp(s)
            p = p * pl.reciprocal(jnp.sum(p, axis=-1, keepdims=True), approx=True)
            heads_out.append(jnp.dot(p, v, preferred_element_type=f32))        # (S, hd)

        attn_out = jnp.concatenate(heads_out, axis=-1)          # (S, D) == torch concat
        proj = jnp.dot(attn_out.astype(bf16), wproj_ref[d], preferred_element_type=f32)
        x = x + proj + bproj_ref[d]

        # ---- MLP branch (pre-LN) ----------------------------------------------
        h2 = _layernorm(x, g2_ref[d], b2_ref[d])
        m = jnp.dot(h2.astype(bf16), wfc1_ref[d], preferred_element_type=f32) + bfc1_ref[d]
        m = _gelu_exact(m)
        m = jnp.dot(m.astype(bf16), wfc2_ref[d], preferred_element_type=f32) + bfc2_ref[d]
        x = x + m

    # ---- classification head into a lane-dense padded slab -------------------
    logits = jnp.dot(x.astype(bf16), w_head_ref[...], preferred_element_type=f32)
    logits = logits + b_head_ref[...]
    o_ref[...] = logits.astype(o_ref.dtype)


# --------------------------- parameter construction --------------------------
def make_params(key):
    keys = jax.random.split(key, 8 + DEPTH)
    p = {}
    p["w_patch"] = 0.02 * jax.random.normal(keys[0], (PATCH_PIX, DIM), jnp.float32)
    p["b_patch"] = 0.02 * jax.random.normal(keys[1], (1, DIM), jnp.float32)
    p["cls_token"] = jax.random.normal(keys[2], (1, 1, DIM), jnp.float32)
    p["pos_embed"] = jax.random.normal(keys[3], (1, SEQ, DIM), jnp.float32)
    p["w_head"] = 0.02 * jax.random.normal(keys[4], (DIM, NUM_CLASSES), jnp.float32)
    p["b_head"] = 0.02 * jax.random.normal(keys[5], (1, NUM_CLASSES), jnp.float32)

    blocks = []
    for d in range(DEPTH):
        bk = jax.random.split(keys[8 + d], 8)
        blocks.append({
            "g1": jnp.ones((1, DIM), jnp.float32),
            "b1": jnp.zeros((1, DIM), jnp.float32),
            "wqkv": 0.02 * jax.random.normal(bk[0], (DIM, 3 * DIM), jnp.float32),
            "wproj": 0.02 * jax.random.normal(bk[1], (DIM, DIM), jnp.float32),
            "bproj": 0.02 * jax.random.normal(bk[2], (1, DIM), jnp.float32),
            "g2": jnp.ones((1, DIM), jnp.float32),
            "b2": jnp.zeros((1, DIM), jnp.float32),
            "wfc1": 0.02 * jax.random.normal(bk[3], (DIM, MLP_DIM), jnp.float32),
            "bfc1": 0.02 * jax.random.normal(bk[4], (1, MLP_DIM), jnp.float32),
            "wfc2": 0.02 * jax.random.normal(bk[5], (MLP_DIM, DIM), jnp.float32),
            "bfc2": 0.02 * jax.random.normal(bk[6], (1, DIM), jnp.float32),
        })
    p["blocks"] = blocks
    return p


def prepare_params(params):
    """One-time repack of module-style params into kernel-ready stacked weights.

    Matmul weights go to bf16 (lane-dense, natural layouts); LN params, biases
    and token constants stay f32.
    """
    f32, bf16 = jnp.float32, jnp.bfloat16
    blocks = params["blocks"]

    def stack(name, dtype):
        return jnp.stack([b[name] for b in blocks], axis=0).astype(dtype)

    # base token rows: [pos0+cls, pos1..pos4, 0, 0, 0]
    base_tok = jnp.zeros((SEQ_PAD, DIM), f32)
    base_tok = base_tok.at[:SEQ].set(params["pos_embed"][0].astype(f32))
    base_tok = base_tok.at[0].add(params["cls_token"][0, 0].astype(f32))
    is_patch = jnp.zeros((SEQ_PAD, 1), f32).at[1:SEQ].set(1.0)

    w_head = jnp.zeros((DIM, LANE), f32).at[:, :NUM_CLASSES].set(
        params["w_head"].astype(f32))
    b_head = jnp.zeros((1, LANE), f32).at[:, :NUM_CLASSES].set(
        params["b_head"].astype(f32))

    return {
        "w_patch": params["w_patch"].astype(bf16),
        "b_patch": params["b_patch"].astype(f32),
        "base_tok": base_tok,
        "is_patch": is_patch,
        "g1": stack("g1", f32), "b1": stack("b1", f32),
        "wqkv": stack("wqkv", bf16),          # (DEPTH, DIM, 3*DIM)
        "wproj": stack("wproj", bf16),        # (DEPTH, DIM, DIM)
        "bproj": stack("bproj", f32),
        "g2": stack("g2", f32), "b2": stack("b2", f32),
        "wfc1": stack("wfc1", bf16), "bfc1": stack("bfc1", f32),
        "wfc2": stack("wfc2", bf16), "bfc2": stack("bfc2", f32),
        "w_head": w_head.astype(bf16),
        "b_head": b_head,
    }


# --------------------------------- forward -----------------------------------
@jax.jit
def vit_forward(x_nchw, kp):
    B = x_nchw.shape[0]
    p = PATCH_SIZE
    gh = IMAGE_SIZE // p

    # patch extraction (layout glue): NCHW -> (B, N_PATCHES, C*ph*pw),
    # pixel order (C, ph, pw) matches the PyTorch conv-weight flatten order.
    patches = x_nchw.reshape(B, 3, gh, p, gh, p)
    patches = patches.transpose(0, 2, 4, 1, 3, 5).reshape(B, N_PATCHES, PATCH_PIX)
    # token rows per batch: [cls(zero), p0..p3, pad(zero) x3]; flatten batch*seq.
    patches_tok = jnp.zeros((B, SEQ_PAD, PATCH_PIX), jnp.float32)
    patches_tok = patches_tok.at[:, 1:1 + N_PATCHES, :].set(patches)
    patches_tok = patches_tok.reshape(B * SEQ_PAD, PATCH_PIX)

    args = (
        patches_tok, kp["w_patch"], kp["b_patch"], kp["base_tok"], kp["is_patch"],
        kp["g1"], kp["b1"], kp["wqkv"], kp["wproj"], kp["bproj"],
        kp["g2"], kp["b2"], kp["wfc1"], kp["bfc1"], kp["wfc2"], kp["bfc2"],
        kp["w_head"], kp["b_head"],
    )

    # Specs: patches/output are sliced per batch; everything else is a full
    # array with a constant block index (DMA'd once, stays resident in VMEM).
    def full_spec(a):
        n = a.ndim
        return pl.BlockSpec(a.shape, lambda b, _n=n: (0,) * _n)

    in_specs = [pl.BlockSpec((SEQ_PAD, PATCH_PIX), lambda b: (b, 0))]
    in_specs += [full_spec(a) for a in args[1:]]
    out_spec = pl.BlockSpec((SEQ_PAD, LANE), lambda b: (b, 0))

    # advisory cost estimate for XLA scheduling around the fused custom call
    ntok = B * SEQ_PAD
    flops = 2 * ntok * PATCH_PIX * DIM
    flops += DEPTH * (
        2 * ntok * DIM * 3 * DIM                 # fused qkv
        + 2 * 2 * ntok * SEQ_PAD * DIM           # scores + attn@v (all heads)
        + 2 * ntok * DIM * DIM                   # output proj
        + 2 * 2 * ntok * DIM * MLP_DIM           # mlp fc1 + fc2
    )
    flops += 2 * ntok * DIM * LANE               # head
    transcendentals = DEPTH * (B * HEADS * SEQ_PAD * SEQ_PAD + ntok * MLP_DIM)
    bytes_accessed = sum(int(a.size) * a.dtype.itemsize for a in args)
    bytes_accessed += ntok * LANE * 4

    out = pl.pallas_call(
        vit_fused_kernel,
        out_shape=jax.ShapeDtypeStruct((B * SEQ_PAD, LANE), jnp.float32),
        grid=(B,),
        in_specs=in_specs,
        out_specs=out_spec,
        compiler_params=pltpu.CompilerParams(
            dimension_semantics=("parallel",)),
        cost_estimate=pl.CostEstimate(
            flops=flops, transcendentals=transcendentals,
            bytes_accessed=bytes_accessed),
    )(*args)

    # cls row (token 0 of each batch block) + real classes from the padded slab
    return out.reshape(B, SEQ_PAD, LANE)[:, 0, :NUM_CLASSES]


if __name__ == "__main__":
    key = jax.random.PRNGKey(0)
    k_img, k_par = jax.random.split(key)
    img = jax.random.normal(k_img, (2, 3, IMAGE_SIZE, IMAGE_SIZE), jnp.float32)
    params = make_params(k_par)
    kernel_params = prepare_params(params)

    logits = vit_forward(img, kernel_params)
    jax.block_until_ready(logits)
    assert logits.shape == (2, NUM_CLASSES)
    assert bool(jnp.all(jnp.isfinite(logits)))
    print("KERNEL_OK")
</pallas_src>

<mosaic_0001>
module attributes {stable_mosaic.version = 11 : i64} {
  func.func @vit_fused_kernel(%arg0: i32, %arg1: memref<8x768xf32, #tpu.memory_space<vmem>>, %arg2: memref<768x64xbf16, #tpu.memory_space<vmem>>, %arg3: memref<1x64xf32, #tpu.memory_space<vmem>>, %arg4: memref<8x64xf32, #tpu.memory_space<vmem>>, %arg5: memref<8x1xf32, #tpu.memory_space<vmem>>, %arg6: memref<2x1x64xf32, #tpu.memory_space<vmem>>, %arg7: memref<2x1x64xf32, #tpu.memory_space<vmem>>, %arg8: memref<2x64x192xbf16, #tpu.memory_space<vmem>>, %arg9: memref<2x64x64xbf16, #tpu.memory_space<vmem>>, %arg10: memref<2x1x64xf32, #tpu.memory_space<vmem>>, %arg11: memref<2x1x64xf32, #tpu.memory_space<vmem>>, %arg12: memref<2x1x64xf32, #tpu.memory_space<vmem>>, %arg13: memref<2x64x128xbf16, #tpu.memory_space<vmem>>, %arg14: memref<2x1x128xf32, #tpu.memory_space<vmem>>, %arg15: memref<2x128x64xbf16, #tpu.memory_space<vmem>>, %arg16: memref<2x1x64xf32, #tpu.memory_space<vmem>>, %arg17: memref<64x128xbf16, #tpu.memory_space<vmem>>, %arg18: memref<1x128xf32, #tpu.memory_space<vmem>>, %arg19: memref<8x128xf32, #tpu.memory_space<vmem>>) attributes {dimension_semantics = [#tpu.dimension_semantics<parallel>], iteration_bounds = array<i64: 2>, scalar_prefetch = 0 : i64, scratch_operands = 0 : i64, tpu.core_type = #tpu.core_type<tc>, window_params = [{transform_indices = @transform_0, window_bounds = array<i64: 8, 768>}, {pipeline_mode = #tpu.pipeline_mode<synchronous>, transform_indices = @transform_1, window_bounds = array<i64: 768, 64>}, {pipeline_mode = #tpu.pipeline_mode<synchronous>, transform_indices = @transform_2, window_bounds = array<i64: 1, 64>}, {pipeline_mode = #tpu.pipeline_mode<synchronous>, transform_indices = @transform_3, window_bounds = array<i64: 8, 64>}, {pipeline_mode = #tpu.pipeline_mode<synchronous>, transform_indices = @transform_4, window_bounds = array<i64: 8, 1>}, {pipeline_mode = #tpu.pipeline_mode<synchronous>, transform_indices = @transform_5, window_bounds = array<i64: 2, 1, 64>}, {pipeline_mode = #tpu.pipeline_mode<synchronous>, transform_indices = @transform_6, window_bounds = array<i64: 2, 1, 64>}, {pipeline_mode = #tpu.pipeline_mode<synchronous>, transform_indices = @transform_7, window_bounds = array<i64: 2, 64, 192>}, {pipeline_mode = #tpu.pipeline_mode<synchronous>, transform_indices = @transform_8, window_bounds = array<i64: 2, 64, 64>}, {pipeline_mode = #tpu.pipeline_mode<synchronous>, transform_indices = @transform_9, window_bounds = array<i64: 2, 1, 64>}, {pipeline_mode = #tpu.pipeline_mode<synchronous>, transform_indices = @transform_10, window_bounds = array<i64: 2, 1, 64>}, {pipeline_mode = #tpu.pipeline_mode<synchronous>, transform_indices = @transform_11, window_bounds = array<i64: 2, 1, 64>}, {pipeline_mode = #tpu.pipeline_mode<synchronous>, transform_indices = @transform_12, window_bounds = array<i64: 2, 64, 128>}, {pipeline_mode = #tpu.pipeline_mode<synchronous>, transform_indices = @transform_13, window_bounds = array<i64: 2, 1, 128>}, {pipeline_mode = #tpu.pipeline_mode<synchronous>, transform_indices = @transform_14, window_bounds = array<i64: 2, 128, 64>}, {pipeline_mode = #tpu.pipeline_mode<synchronous>, transform_indices = @transform_15, window_bounds = array<i64: 2, 1, 64>}, {pipeline_mode = #tpu.pipeline_mode<synchronous>, transform_indices = @transform_16, window_bounds = array<i64: 64, 128>}, {pipeline_mode = #tpu.pipeline_mode<synchronous>, transform_indices = @transform_17, window_bounds = array<i64: 1, 128>}, {transform_indices = @transform_18, window_bounds = array<i64: 8, 128>}]} {
    %c0 = arith.constant 0 : index
    %c0_0 = arith.constant 0 : index
    %0 = vector.load %arg1[%c0, %c0_0] : memref<8x768xf32, #tpu.memory_space<vmem>>, vector<8x768xf32>
    %1 = arith.truncf %0 : vector<8x768xf32> to vector<8x768xbf16>
    %c0_1 = arith.constant 0 : index
    %c0_2 = arith.constant 0 : index
    %2 = vector.load %arg2[%c0_1, %c0_2] : memref<768x64xbf16, #tpu.memory_space<vmem>>, vector<768x64xbf16>
    %cst = arith.constant dense<0.000000e+00> : vector<8x64xf32>
    %3 = tpu.matmul %1, %2, %cst {dimension_numbers = #tpu.dot_dimension_numbers<[1], [0], [0], [1], [0, 0, 1, 1], [], []>} : vector<8x768xbf16>, vector<768x64xbf16>, vector<8x64xf32> -> vector<8x64xf32>
    %c0_3 = arith.constant 0 : index
    %c0_4 = arith.constant 0 : index
    %4 = vector.load %arg3[%c0_3, %c0_4] : memref<1x64xf32, #tpu.memory_space<vmem>>, vector<1x64xf32>
    %5 = vector.broadcast %4 : vector<1x64xf32> to vector<8x64xf32>
    %6 = arith.addf %3, %5 : vector<8x64xf32>
    %c0_5 = arith.constant 0 : index
    %c0_6 = arith.constant 0 : index
    %7 = vector.load %arg5[%c0_5, %c0_6] : memref<8x1xf32, #tpu.memory_space<vmem>>, vector<8x1xf32>
    %8 = vector.broadcast %7 : vector<8x1xf32> to vector<8x64xf32>
    %9 = arith.mulf %6, %8 : vector<8x64xf32>
    %c0_7 = arith.constant 0 : index
    %c0_8 = arith.constant 0 : index
    %10 = vector.load %arg4[%c0_7, %c0_8] : memref<8x64xf32, #tpu.memory_space<vmem>>, vector<8x64xf32>
    %11 = arith.addf %9, %10 : vector<8x64xf32>
    %12 = tpu.iota {dimensions = array<i32: 1>} : vector<1x8xi32>
    %c5_i32 = arith.constant 5 : i32
    %13 = vector.broadcast %c5_i32 : i32 to vector<1x8xi32>
    %14 = arith.cmpi slt, %12, %13 : vector<1x8xi32>
    %cst_9 = arith.constant 0.000000e+00 : f32
    %cst_10 = arith.constant -1.000000e+30 : f32
    %15 = vector.broadcast %cst_9 : f32 to vector<1x8xf32>
    %16 = vector.broadcast %cst_10 : f32 to vector<1x8xf32>
    %17 = arith.select %14, %15, %16 : vector<1x8xi1>, vector<1x8xf32>
    %c0_11 = arith.constant 0 : index
    %c0_12 = arith.constant 0 : index
    %c0_13 = arith.constant 0 : index
    %18 = vector.load %arg6[%c0_11, %c0_12, %c0_13] : memref<2x1x64xf32, #tpu.memory_space<vmem>>, vector<1x1x64xf32>
    %19 = vector.shape_cast %18 : vector<1x1x64xf32> to vector<1x64xf32>
    %c0_14 = arith.constant 0 : index
    %c0_15 = arith.constant 0 : index
    %c0_16 = arith.constant 0 : index
    %20 = vector.load %arg7[%c0_14, %c0_15, %c0_16] : memref<2x1x64xf32, #tpu.memory_space<vmem>>, vector<1x1x64xf32>
    %21 = vector.shape_cast %20 : vector<1x1x64xf32> to vector<1x64xf32>
    %cst_17 = arith.constant dense<0.000000e+00> : vector<8xf32>
    %22 = vector.multi_reduction <add>, %11, %cst_17 [1] : vector<8x64xf32> to vector<8xf32>
    %23 = vector.shape_cast %22 : vector<8xf32> to vector<8x1xf32>
    %cst_18 = arith.constant 6.400000e+01 : f32
    %24 = vector.broadcast %cst_18 : f32 to vector<8x1xf32>
    %25 = arith.divf %23, %24 : vector<8x1xf32>
    %26 = vector.broadcast %25 : vector<8x1xf32> to vector<8x64xf32>
    %27 = arith.subf %11, %26 : vector<8x64xf32>
    %28 = arith.mulf %27, %27 : vector<8x64xf32>
    %cst_19 = arith.constant dense<0.000000e+00> : vector<8xf32>
    %29 = vector.multi_reduction <add>, %28, %cst_19 [1] : vector<8x64xf32> to vector<8xf32>
    %30 = vector.shape_cast %29 : vector<8xf32> to vector<8x1xf32>
    %cst_20 = arith.constant 6.400000e+01 : f32
    %31 = vector.broadcast %cst_20 : f32 to vector<8x1xf32>
    %32 = arith.divf %30, %31 : vector<8x1xf32>
    %33 = vector.broadcast %25 : vector<8x1xf32> to vector<8x64xf32>
    %34 = arith.subf %11, %33 : vector<8x64xf32>
    %cst_21 = arith.constant 9.99999974E-6 : f32
    %35 = vector.broadcast %cst_21 : f32 to vector<8x1xf32>
    %36 = arith.addf %32, %35 : vector<8x1xf32>
    %37 = math.rsqrt %36 : vector<8x1xf32>
    %38 = vector.broadcast %37 : vector<8x1xf32> to vector<8x64xf32>
    %39 = arith.mulf %34, %38 : vector<8x64xf32>
    %40 = vector.broadcast %19 : vector<1x64xf32> to vector<8x64xf32>
    %41 = arith.mulf %39, %40 : vector<8x64xf32>
    %42 = vector.broadcast %21 : vector<1x64xf32> to vector<8x64xf32>
    %43 = arith.addf %41, %42 : vector<8x64xf32>
    %44 = arith.truncf %43 : vector<8x64xf32> to vector<8x64xbf16>
    %c0_22 = arith.constant 0 : index
    %c0_23 = arith.constant 0 : index
    %c0_24 = arith.constant 0 : index
    %45 = vector.load %arg8[%c0_22, %c0_23, %c0_24] : memref<2x64x192xbf16, #tpu.memory_space<vmem>>, vector<1x64x192xbf16>
    %46 = vector.shape_cast %45 : vector<1x64x192xbf16> to vector<64x192xbf16>
    %cst_25 = arith.constant dense<0.000000e+00> : vector<8x192xf32>
    %47 = tpu.matmul %44, %46, %cst_25 {dimension_numbers = #tpu.dot_dimension_numbers<[1], [0], [0], [1], [0, 0, 1, 1], [], []>} : vector<8x64xbf16>, vector<64x192xbf16>, vector<8x192xf32> -> vector<8x192xf32>
    %48 = vector.extract_strided_slice %47 {offsets = [0, 0], sizes = [8, 16], strides = [1, 1]} : vector<8x192xf32> to vector<8x16xf32>
    %49 = vector.extract_strided_slice %47 {offsets = [0, 64], sizes = [8, 16], strides = [1, 1]} : vector<8x192xf32> to vector<8x16xf32>
    %50 = vector.extract_strided_slice %47 {offsets = [0, 128], sizes = [8, 16], strides = [1, 1]} : vector<8x192xf32> to vector<8x16xf32>
    %cst_26 = arith.constant dense<0.000000e+00> : vector<8x8xf32>
    %51 = tpu.matmul %48, %49, %cst_26 {dimension_numbers = #tpu.dot_dimension_numbers<[1], [1], [0], [0], [0, 0, 1, 0], [], []>} : vector<8x16xf32>, vector<8x16xf32>, vector<8x8xf32> -> vector<8x8xf32>
    %cst_27 = arith.constant 2.500000e-01 : f32
    %52 = vector.broadcast %cst_27 : f32 to vector<8x8xf32>
    %53 = arith.mulf %51, %52 : vector<8x8xf32>
    %54 = vector.broadcast %17 : vector<1x8xf32> to vector<8x8xf32>
    %55 = arith.addf %53, %54 : vector<8x8xf32>
    %cst_28 = arith.constant dense<0xFF800000> : vector<8xf32>
    %56 = vector.multi_reduction <maximumf>, %55, %cst_28 [1] : vector<8x8xf32> to vector<8xf32>
    %57 = vector.shape_cast %56 : vector<8xf32> to vector<8x1xf32>
    %58 = vector.broadcast %57 : vector<8x1xf32> to vector<8x8xf32>
    %59 = arith.subf %55, %58 : vector<8x8xf32>
    %60 = math.exp %59 : vector<8x8xf32>
    %cst_29 = arith.constant dense<0.000000e+00> : vector<8xf32>
    %61 = vector.multi_reduction <add>, %60, %cst_29 [1] : vector<8x8xf32> to vector<8xf32>
    %62 = vector.shape_cast %61 : vector<8xf32> to vector<8x1xf32>
    %63 = tpu.reciprocal %62 {approx = true} : vector<8x1xf32> -> vector<8x1xf32>
    %64 = vector.broadcast %63 : vector<8x1xf32> to vector<8x8xf32>
    %65 = arith.mulf %60, %64 : vector<8x8xf32>
    %cst_30 = arith.constant dense<0.000000e+00> : vector<8x16xf32>
    %66 = tpu.matmul %65, %50, %cst_30 {dimension_numbers = #tpu.dot_dimension_numbers<[1], [0], [0], [1], [0, 0, 1, 1], [], []>} : vector<8x8xf32>, vector<8x16xf32>, vector<8x16xf32> -> vector<8x16xf32>
    %67 = vector.extract_strided_slice %47 {offsets = [0, 16], sizes = [8, 16], strides = [1, 1]} : vector<8x192xf32> to vector<8x16xf32>
    %68 = vector.extract_strided_slice %47 {offsets = [0, 80], sizes = [8, 16], strides = [1, 1]} : vector<8x192xf32> to vector<8x16xf32>
    %69 = vector.extract_strided_slice %47 {offsets = [0, 144], sizes = [8, 16], strides = [1, 1]} : vector<8x192xf32> to vector<8x16xf32>
    %cst_31 = arith.constant dense<0.000000e+00> : vector<8x8xf32>
    %70 = tpu.matmul %67, %68, %cst_31 {dimension_numbers = #tpu.dot_dimension_numbers<[1], [1], [0], [0], [0, 0, 1, 0], [], []>} : vector<8x16xf32>, vector<8x16xf32>, vector<8x8xf32> -> vector<8x8xf32>
    %cst_32 = arith.constant 2.500000e-01 : f32
    %71 = vector.broadcast %cst_32 : f32 to vector<8x8xf32>
    %72 = arith.mulf %70, %71 : vector<8x8xf32>
    %73 = vector.broadcast %17 : vector<1x8xf32> to vector<8x8xf32>
    %74 = arith.addf %72, %73 : vector<8x8xf32>
    %cst_33 = arith.constant dense<0xFF800000> : vector<8xf32>
    %75 = vector.multi_reduction <maximumf>, %74, %cst_33 [1] : vector<8x8xf32> to vector<8xf32>
    %76 = vector.shape_cast %75 : vector<8xf32> to vector<8x1xf32>
    %77 = vector.broadcast %76 : vector<8x1xf32> to vector<8x8xf32>
    %78 = arith.subf %74, %77 : vector<8x8xf32>
    %79 = math.exp %78 : vector<8x8xf32>
    %cst_34 = arith.constant dense<0.000000e+00> : vector<8xf32>
    %80 = vector.multi_reduction <add>, %79, %cst_34 [1] : vector<8x8xf32> to vector<8xf32>
    %81 = vector.shape_cast %80 : vector<8xf32> to vector<8x1xf32>
    %82 = tpu.reciprocal %81 {approx = true} : vector<8x1xf32> -> vector<8x1xf32>
    %83 = vector.broadcast %82 : vector<8x1xf32> to vector<8x8xf32>
    %84 = arith.mulf %79, %83 : vector<8x8xf32>
    %cst_35 = arith.constant dense<0.000000e+00> : vector<8x16xf32>
    %85 = tpu.matmul %84, %69, %cst_35 {dimension_numbers = #tpu.dot_dimension_numbers<[1], [0], [0], [1], [0, 0, 1, 1], [], []>} : vector<8x8xf32>, vector<8x16xf32>, vector<8x16xf32> -> vector<8x16xf32>
    %86 = vector.extract_strided_slice %47 {offsets = [0, 32], sizes = [8, 16], strides = [1, 1]} : vector<8x192xf32> to vector<8x16xf32>
    %87 = vector.extract_strided_slice %47 {offsets = [0, 96], sizes = [8, 16], strides = [1, 1]} : vector<8x192xf32> to vector<8x16xf32>
    %88 = vector.extract_strided_slice %47 {offsets = [0, 160], sizes = [8, 16], strides = [1, 1]} : vector<8x192xf32> to vector<8x16xf32>
    %cst_36 = arith.constant dense<0.000000e+00> : vector<8x8xf32>
    %89 = tpu.matmul %86, %87, %cst_36 {dimension_numbers = #tpu.dot_dimension_numbers<[1], [1], [0], [0], [0, 0, 1, 0], [], []>} : vector<8x16xf32>, vector<8x16xf32>, vector<8x8xf32> -> vector<8x8xf32>
    %cst_37 = arith.constant 2.500000e-01 : f32
    %90 = vector.broadcast %cst_37 : f32 to vector<8x8xf32>
    %91 = arith.mulf %89, %90 : vector<8x8xf32>
    %92 = vector.broadcast %17 : vector<1x8xf32> to vector<8x8xf32>
    %93 = arith.addf %91, %92 : vector<8x8xf32>
    %cst_38 = arith.constant dense<0xFF800000> : vector<8xf32>
    %94 = vector.multi_reduction <maximumf>, %93, %cst_38 [1] : vector<8x8xf32> to vector<8xf32>
    %95 = vector.shape_cast %94 : vector<8xf32> to vector<8x1xf32>
    %96 = vector.broadcast %95 : vector<8x1xf32> to vector<8x8xf32>
    %97 = arith.subf %93, %96 : vector<8x8xf32>
    %98 = math.exp %97 : vector<8x8xf32>
    %cst_39 = arith.constant dense<0.000000e+00> : vector<8xf32>
    %99 = vector.multi_reduction <add>, %98, %cst_39 [1] : vector<8x8xf32> to vector<8xf32>
    %100 = vector.shape_cast %99 : vector<8xf32> to vector<8x1xf32>
    %101 = tpu.reciprocal %100 {approx = true} : vector<8x1xf32> -> vector<8x1xf32>
    %102 = vector.broadcast %101 : vector<8x1xf32> to vector<8x8xf32>
    %103 = arith.mulf %98, %102 : vector<8x8xf32>
    %cst_40 = arith.constant dense<0.000000e+00> : vector<8x16xf32>
    %104 = tpu.matmul %103, %88, %cst_40 {dimension_numbers = #tpu.dot_dimension_numbers<[1], [0], [0], [1], [0, 0, 1, 1], [], []>} : vector<8x8xf32>, vector<8x16xf32>, vector<8x16xf32> -> vector<8x16xf32>
    %105 = vector.extract_strided_slice %47 {offsets = [0, 48], sizes = [8, 16], strides = [1, 1]} : vector<8x192xf32> to vector<8x16xf32>
    %106 = vector.extract_strided_slice %47 {offsets = [0, 112], sizes = [8, 16], strides = [1, 1]} : vector<8x192xf32> to vector<8x16xf32>
    %107 = vector.extract_strided_slice %47 {offsets = [0, 176], sizes = [8, 16], strides = [1, 1]} : vector<8x192xf32> to vector<8x16xf32>
    %cst_41 = arith.constant dense<0.000000e+00> : vector<8x8xf32>
    %108 = tpu.matmul %105, %106, %cst_41 {dimension_numbers = #tpu.dot_dimension_numbers<[1], [1], [0], [0], [0, 0, 1, 0], [], []>} : vector<8x16xf32>, vector<8x16xf32>, vector<8x8xf32> -> vector<8x8xf32>
    %cst_42 = arith.constant 2.500000e-01 : f32
    %109 = vector.broadcast %cst_42 : f32 to vector<8x8xf32>
    %110 = arith.mulf %108, %109 : vector<8x8xf32>
    %111 = vector.broadcast %17 : vector<1x8xf32> to vector<8x8xf32>
    %112 = arith.addf %110, %111 : vector<8x8xf32>
    %cst_43 = arith.constant dense<0xFF800000> : vector<8xf32>
    %113 = vector.multi_reduction <maximumf>, %112, %cst_43 [1] : vector<8x8xf32> to vector<8xf32>
    %114 = vector.shape_cast %113 : vector<8xf32> to vector<8x1xf32>
    %115 = vector.broadcast %114 : vector<8x1xf32> to vector<8x8xf32>
    %116 = arith.subf %112, %115 : vector<8x8xf32>
    %117 = math.exp %116 : vector<8x8xf32>
    %cst_44 = arith.constant dense<0.000000e+00> : vector<8xf32>
    %118 = vector.multi_reduction <add>, %117, %cst_44 [1] : vector<8x8xf32> to vector<8xf32>
    %119 = vector.shape_cast %118 : vector<8xf32> to vector<8x1xf32>
    %120 = tpu.reciprocal %119 {approx = true} : vector<8x1xf32> -> vector<8x1xf32>
    %121 = vector.broadcast %120 : vector<8x1xf32> to vector<8x8xf32>
    %122 = arith.mulf %117, %121 : vector<8x8xf32>
    %cst_45 = arith.constant dense<0.000000e+00> : vector<8x16xf32>
    %123 = tpu.matmul %122, %107, %cst_45 {dimension_numbers = #tpu.dot_dimension_numbers<[1], [0], [0], [1], [0, 0, 1, 1], [], []>} : vector<8x8xf32>, vector<8x16xf32>, vector<8x16xf32> -> vector<8x16xf32>
    %124 = tpu.concatenate %66, %85, %104, %123 in 1 : vector<8x16xf32>, vector<8x16xf32>, vector<8x16xf32>, vector<8x16xf32> -> vector<8x64xf32>
    %125 = arith.truncf %124 : vector<8x64xf32> to vector<8x64xbf16>
    %c0_46 = arith.constant 0 : index
    %c0_47 = arith.constant 0 : index
    %c0_48 = arith.constant 0 : index
    %126 = vector.load %arg9[%c0_46, %c0_47, %c0_48] : memref<2x64x64xbf16, #tpu.memory_space<vmem>>, vector<1x64x64xbf16>
    %127 = vector.shape_cast %126 : vector<1x64x64xbf16> to vector<64x64xbf16>
    %cst_49 = arith.constant dense<0.000000e+00> : vector<8x64xf32>
    %128 = tpu.matmul %125, %127, %cst_49 {dimension_numbers = #tpu.dot_dimension_numbers<[1], [0], [0], [1], [0, 0, 1, 1], [], []>} : vector<8x64xbf16>, vector<64x64xbf16>, vector<8x64xf32> -> vector<8x64xf32>
    %129 = arith.addf %11, %128 : vector<8x64xf32>
    %c0_50 = arith.constant 0 : index
    %c0_51 = arith.constant 0 : index
    %c0_52 = arith.constant 0 : index
    %130 = vector.load %arg10[%c0_50, %c0_51, %c0_52] : memref<2x1x64xf32, #tpu.memory_space<vmem>>, vector<1x1x64xf32>
    %131 = vector.shape_cast %130 : vector<1x1x64xf32> to vector<1x64xf32>
    %132 = vector.broadcast %131 : vector<1x64xf32> to vector<8x64xf32>
    %133 = arith.addf %129, %132 : vector<8x64xf32>
    %c0_53 = arith.constant 0 : index
    %c0_54 = arith.constant 0 : index
    %c0_55 = arith.constant 0 : index
    %134 = vector.load %arg11[%c0_53, %c0_54, %c0_55] : memref<2x1x64xf32, #tpu.memory_space<vmem>>, vector<1x1x64xf32>
    %135 = vector.shape_cast %134 : vector<1x1x64xf32> to vector<1x64xf32>
    %c0_56 = arith.constant 0 : index
    %c0_57 = arith.constant 0 : index
    %c0_58 = arith.constant 0 : index
    %136 = vector.load %arg12[%c0_56, %c0_57, %c0_58] : memref<2x1x64xf32, #tpu.memory_space<vmem>>, vector<1x1x64xf32>
    %137 = vector.shape_cast %136 : vector<1x1x64xf32> to vector<1x64xf32>
    %cst_59 = arith.constant dense<0.000000e+00> : vector<8xf32>
    %138 = vector.multi_reduction <add>, %133, %cst_59 [1] : vector<8x64xf32> to vector<8xf32>
    %139 = vector.shape_cast %138 : vector<8xf32> to vector<8x1xf32>
    %cst_60 = arith.constant 6.400000e+01 : f32
    %140 = vector.broadcast %cst_60 : f32 to vector<8x1xf32>
    %141 = arith.divf %139, %140 : vector<8x1xf32>
    %142 = vector.broadcast %141 : vector<8x1xf32> to vector<8x64xf32>
    %143 = arith.subf %133, %142 : vector<8x64xf32>
    %144 = arith.mulf %143, %143 : vector<8x64xf32>
    %cst_61 = arith.constant dense<0.000000e+00> : vector<8xf32>
    %145 = vector.multi_reduction <add>, %144, %cst_61 [1] : vector<8x64xf32> to vector<8xf32>
    %146 = vector.shape_cast %145 : vector<8xf32> to vector<8x1xf32>
    %cst_62 = arith.constant 6.400000e+01 : f32
    %147 = vector.broadcast %cst_62 : f32 to vector<8x1xf32>
    %148 = arith.divf %146, %147 : vector<8x1xf32>
    %149 = vector.broadcast %141 : vector<8x1xf32> to vector<8x64xf32>
    %150 = arith.subf %133, %149 : vector<8x64xf32>
    %cst_63 = arith.constant 9.99999974E-6 : f32
    %151 = vector.broadcast %cst_63 : f32 to vector<8x1xf32>
    %152 = arith.addf %148, %151 : vector<8x1xf32>
    %153 = math.rsqrt %152 : vector<8x1xf32>
    %154 = vector.broadcast %153 : vector<8x1xf32> to vector<8x64xf32>
    %155 = arith.mulf %150, %154 : vector<8x64xf32>
    %156 = vector.broadcast %135 : vector<1x64xf32> to vector<8x64xf32>
    %157 = arith.mulf %155, %156 : vector<8x64xf32>
    %158 = vector.broadcast %137 : vector<1x64xf32> to vector<8x64xf32>
    %159 = arith.addf %157, %158 : vector<8x64xf32>
    %160 = arith.truncf %159 : vector<8x64xf32> to vector<8x64xbf16>
    %c0_64 = arith.constant 0 : index
    %c0_65 = arith.constant 0 : index
    %c0_66 = arith.constant 0 : index
    %161 = vector.load %arg13[%c0_64, %c0_65, %c0_66] : memref<2x64x128xbf16, #tpu.memory_space<vmem>>, vector<1x64x128xbf16>
    %162 = vector.shape_cast %161 : vector<1x64x128xbf16> to vector<64x128xbf16>
    %cst_67 = arith.constant dense<0.000000e+00> : vector<8x128xf32>
    %163 = tpu.matmul %160, %162, %cst_67 {dimension_numbers = #tpu.dot_dimension_numbers<[1], [0], [0], [1], [0, 0, 1, 1], [], []>} : vector<8x64xbf16>, vector<64x128xbf16>, vector<8x128xf32> -> vector<8x128xf32>
    %c0_68 = arith.constant 0 : index
    %c0_69 = arith.constant 0 : index
    %c0_70 = arith.constant 0 : index
    %164 = vector.load %arg14[%c0_68, %c0_69, %c0_70] : memref<2x1x128xf32, #tpu.memory_space<vmem>>, vector<1x1x128xf32>
    %165 = vector.shape_cast %164 : vector<1x1x128xf32> to vector<1x128xf32>
    %166 = vector.broadcast %165 : vector<1x128xf32> to vector<8x128xf32>
    %167 = arith.addf %163, %166 : vector<8x128xf32>
    %cst_71 = arith.constant 5.000000e-01 : f32
    %168 = vector.broadcast %cst_71 : f32 to vector<8x128xf32>
    %169 = arith.mulf %168, %167 : vector<8x128xf32>
    %cst_72 = arith.constant 0.707106769 : f32
    %170 = vector.broadcast %cst_72 : f32 to vector<8x128xf32>
    %171 = arith.mulf %167, %170 : vector<8x128xf32>
    %172 = math.erf %171 : vector<8x128xf32>
    %cst_73 = arith.constant 1.000000e+00 : f32
    %173 = vector.broadcast %cst_73 : f32 to vector<8x128xf32>
    %174 = arith.addf %173, %172 : vector<8x128xf32>
    %175 = arith.mulf %169, %174 : vector<8x128xf32>
    %176 = arith.truncf %175 : vector<8x128xf32> to vector<8x128xbf16>
    %c0_74 = arith.constant 0 : index
    %c0_75 = arith.constant 0 : index
    %c0_76 = arith.constant 0 : index
    %177 = vector.load %arg15[%c0_74, %c0_75, %c0_76] : memref<2x128x64xbf16, #tpu.memory_space<vmem>>, vector<1x128x64xbf16>
    %178 = vector.shape_cast %177 : vector<1x128x64xbf16> to vector<128x64xbf16>
    %cst_77 = arith.constant dense<0.000000e+00> : vector<8x64xf32>
    %179 = tpu.matmul %176, %178, %cst_77 {dimension_numbers = #tpu.dot_dimension_numbers<[1], [0], [0], [1], [0, 0, 1, 1], [], []>} : vector<8x128xbf16>, vector<128x64xbf16>, vector<8x64xf32> -> vector<8x64xf32>
    %c0_78 = arith.constant 0 : index
    %c0_79 = arith.constant 0 : index
    %c0_80 = arith.constant 0 : index
    %180 = vector.load %arg16[%c0_78, %c0_79, %c0_80] : memref<2x1x64xf32, #tpu.memory_space<vmem>>, vector<1x1x64xf32>
    %181 = vector.shape_cast %180 : vector<1x1x64xf32> to vector<1x64xf32>
    %182 = vector.broadcast %181 : vector<1x64xf32> to vector<8x64xf32>
    %183 = arith.addf %179, %182 : vector<8x64xf32>
    %184 = arith.addf %133, %183 : vector<8x64xf32>
    %c1 = arith.constant 1 : index
    %c0_81 = arith.constant 0 : index
    %c0_82 = arith.constant 0 : index
    %185 = vector.load %arg6[%c1, %c0_81, %c0_82] : memref<2x1x64xf32, #tpu.memory_space<vmem>>, vector<1x1x64xf32>
    %186 = vector.shape_cast %185 : vector<1x1x64xf32> to vector<1x64xf32>
    %c1_83 = arith.constant 1 : index
    %c0_84 = arith.constant 0 : index
    %c0_85 = arith.constant 0 : index
    %187 = vector.load %arg7[%c1_83, %c0_84, %c0_85] : memref<2x1x64xf32, #tpu.memory_space<vmem>>, vector<1x1x64xf32>
    %188 = vector.shape_cast %187 : vector<1x1x64xf32> to vector<1x64xf32>
    %cst_86 = arith.constant dense<0.000000e+00> : vector<8xf32>
    %189 = vector.multi_reduction <add>, %184, %cst_86 [1] : vector<8x64xf32> to vector<8xf32>
    %190 = vector.shape_cast %189 : vector<8xf32> to vector<8x1xf32>
    %cst_87 = arith.constant 6.400000e+01 : f32
    %191 = vector.broadcast %cst_87 : f32 to vector<8x1xf32>
    %192 = arith.divf %190, %191 : vector<8x1xf32>
    %193 = vector.broadcast %192 : vector<8x1xf32> to vector<8x64xf32>
    %194 = arith.subf %184, %193 : vector<8x64xf32>
    %195 = arith.mulf %194, %194 : vector<8x64xf32>
    %cst_88 = arith.constant dense<0.000000e+00> : vector<8xf32>
    %196 = vector.multi_reduction <add>, %195, %cst_88 [1] : vector<8x64xf32> to vector<8xf32>
    %197 = vector.shape_cast %196 : vector<8xf32> to vector<8x1xf32>
    %cst_89 = arith.constant 6.400000e+01 : f32
    %198 = vector.broadcast %cst_89 : f32 to vector<8x1xf32>
    %199 = arith.divf %197, %198 : vector<8x1xf32>
    %200 = vector.broadcast %192 : vector<8x1xf32> to vector<8x64xf32>
    %201 = arith.subf %184, %200 : vector<8x64xf32>
    %cst_90 = arith.constant 9.99999974E-6 : f32
    %202 = vector.broadcast %cst_90 : f32 to vector<8x1xf32>
    %203 = arith.addf %199, %202 : vector<8x1xf32>
    %204 = math.rsqrt %203 : vector<8x1xf32>
    %205 = vector.broadcast %204 : vector<8x1xf32> to vector<8x64xf32>
    %206 = arith.mulf %201, %205 : vector<8x64xf32>
    %207 = vector.broadcast %186 : vector<1x64xf32> to vector<8x64xf32>
    %208 = arith.mulf %206, %207 : vector<8x64xf32>
    %209 = vector.broadcast %188 : vector<1x64xf32> to vector<8x64xf32>
    %210 = arith.addf %208, %209 : vector<8x64xf32>
    %211 = arith.truncf %210 : vector<8x64xf32> to vector<8x64xbf16>
    %c1_91 = arith.constant 1 : index
    %c0_92 = arith.constant 0 : index
    %c0_93 = arith.constant 0 : index
    %212 = vector.load %arg8[%c1_91, %c0_92, %c0_93] : memref<2x64x192xbf16, #tpu.memory_space<vmem>>, vector<1x64x192xbf16>
    %213 = vector.shape_cast %212 : vector<1x64x192xbf16> to vector<64x192xbf16>
    %cst_94 = arith.constant dense<0.000000e+00> : vector<8x192xf32>
    %214 = tpu.matmul %211, %213, %cst_94 {dimension_numbers = #tpu.dot_dimension_numbers<[1], [0], [0], [1], [0, 0, 1, 1], [], []>} : vector<8x64xbf16>, vector<64x192xbf16>, vector<8x192xf32> -> vector<8x192xf32>
    %215 = vector.extract_strided_slice %214 {offsets = [0, 0], sizes = [8, 16], strides = [1, 1]} : vector<8x192xf32> to vector<8x16xf32>
    %216 = vector.extract_strided_slice %214 {offsets = [0, 64], sizes = [8, 16], strides = [1, 1]} : vector<8x192xf32> to vector<8x16xf32>
    %217 = vector.extract_strided_slice %214 {offsets = [0, 128], sizes = [8, 16], strides = [1, 1]} : vector<8x192xf32> to vector<8x16xf32>
    %cst_95 = arith.constant dense<0.000000e+00> : vector<8x8xf32>
    %218 = tpu.matmul %215, %216, %cst_95 {dimension_numbers = #tpu.dot_dimension_numbers<[1], [1], [0], [0], [0, 0, 1, 0], [], []>} : vector<8x16xf32>, vector<8x16xf32>, vector<8x8xf32> -> vector<8x8xf32>
    %cst_96 = arith.constant 2.500000e-01 : f32
    %219 = vector.broadcast %cst_96 : f32 to vector<8x8xf32>
    %220 = arith.mulf %218, %219 : vector<8x8xf32>
    %221 = vector.broadcast %17 : vector<1x8xf32> to vector<8x8xf32>
    %222 = arith.addf %220, %221 : vector<8x8xf32>
    %cst_97 = arith.constant dense<0xFF800000> : vector<8xf32>
    %223 = vector.multi_reduction <maximumf>, %222, %cst_97 [1] : vector<8x8xf32> to vector<8xf32>
    %224 = vector.shape_cast %223 : vector<8xf32> to vector<8x1xf32>
    %225 = vector.broadcast %224 : vector<8x1xf32> to vector<8x8xf32>
    %226 = arith.subf %222, %225 : vector<8x8xf32>
    %227 = math.exp %226 : vector<8x8xf32>
    %cst_98 = arith.constant dense<0.000000e+00> : vector<8xf32>
    %228 = vector.multi_reduction <add>, %227, %cst_98 [1] : vector<8x8xf32> to vector<8xf32>
    %229 = vector.shape_cast %228 : vector<8xf32> to vector<8x1xf32>
    %230 = tpu.reciprocal %229 {approx = true} : vector<8x1xf32> -> vector<8x1xf32>
    %231 = vector.broadcast %230 : vector<8x1xf32> to vector<8x8xf32>
    %232 = arith.mulf %227, %231 : vector<8x8xf32>
    %cst_99 = arith.constant dense<0.000000e+00> : vector<8x16xf32>
    %233 = tpu.matmul %232, %217, %cst_99 {dimension_numbers = #tpu.dot_dimension_numbers<[1], [0], [0], [1], [0, 0, 1, 1], [], []>} : vector<8x8xf32>, vector<8x16xf32>, vector<8x16xf32> -> vector<8x16xf32>
    %234 = vector.extract_strided_slice %214 {offsets = [0, 16], sizes = [8, 16], strides = [1, 1]} : vector<8x192xf32> to vector<8x16xf32>
    %235 = vector.extract_strided_slice %214 {offsets = [0, 80], sizes = [8, 16], strides = [1, 1]} : vector<8x192xf32> to vector<8x16xf32>
    %236 = vector.extract_strided_slice %214 {offsets = [0, 144], sizes = [8, 16], strides = [1, 1]} : vector<8x192xf32> to vector<8x16xf32>
    %cst_100 = arith.constant dense<0.000000e+00> : vector<8x8xf32>
    %237 = tpu.matmul %234, %235, %cst_100 {dimension_numbers = #tpu.dot_dimension_numbers<[1], [1], [0], [0], [0, 0, 1, 0], [], []>} : vector<8x16xf32>, vector<8x16xf32>, vector<8x8xf32> -> vector<8x8xf32>
    %cst_101 = arith.constant 2.500000e-01 : f32
    %238 = vector.broadcast %cst_101 : f32 to vector<8x8xf32>
    %239 = arith.mulf %237, %238 : vector<8x8xf32>
    %240 = vector.broadcast %17 : vector<1x8xf32> to vector<8x8xf32>
    %241 = arith.addf %239, %240 : vector<8x8xf32>
    %cst_102 = arith.constant dense<0xFF800000> : vector<8xf32>
    %242 = vector.multi_reduction <maximumf>, %241, %cst_102 [1] : vector<8x8xf32> to vector<8xf32>
    %243 = vector.shape_cast %242 : vector<8xf32> to vector<8x1xf32>
    %244 = vector.broadcast %243 : vector<8x1xf32> to vector<8x8xf32>
    %245 = arith.subf %241, %244 : vector<8x8xf32>
    %246 = math.exp %245 : vector<8x8xf32>
    %cst_103 = arith.constant dense<0.000000e+00> : vector<8xf32>
    %247 = vector.multi_reduction <add>, %246, %cst_103 [1] : vector<8x8xf32> to vector<8xf32>
    %248 = vector.shape_cast %247 : vector<8xf32> to vector<8x1xf32>
    %249 = tpu.reciprocal %248 {approx = true} : vector<8x1xf32> -> vector<8x1xf32>
    %250 = vector.broadcast %249 : vector<8x1xf32> to vector<8x8xf32>
    %251 = arith.mulf %246, %250 : vector<8x8xf32>
    %cst_104 = arith.constant dense<0.000000e+00> : vector<8x16xf32>
    %252 = tpu.matmul %251, %236, %cst_104 {dimension_numbers = #tpu.dot_dimension_numbers<[1], [0], [0], [1], [0, 0, 1, 1], [], []>} : vector<8x8xf32>, vector<8x16xf32>, vector<8x16xf32> -> vector<8x16xf32>
    %253 = vector.extract_strided_slice %214 {offsets = [0, 32], sizes = [8, 16], strides = [1, 1]} : vector<8x192xf32> to vector<8x16xf32>
    %254 = vector.extract_strided_slice %214 {offsets = [0, 96], sizes = [8, 16], strides = [1, 1]} : vector<8x192xf32> to vector<8x16xf32>
    %255 = vector.extract_strided_slice %214 {offsets = [0, 160], sizes = [8, 16], strides = [1, 1]} : vector<8x192xf32> to vector<8x16xf32>
    %cst_105 = arith.constant dense<0.000000e+00> : vector<8x8xf32>
    %256 = tpu.matmul %253, %254, %cst_105 {dimension_numbers = #tpu.dot_dimension_numbers<[1], [1], [0], [0], [0, 0, 1, 0], [], []>} : vector<8x16xf32>, vector<8x16xf32>, vector<8x8xf32> -> vector<8x8xf32>
    %cst_106 = arith.constant 2.500000e-01 : f32
    %257 = vector.broadcast %cst_106 : f32 to vector<8x8xf32>
    %258 = arith.mulf %256, %257 : vector<8x8xf32>
    %259 = vector.broadcast %17 : vector<1x8xf32> to vector<8x8xf32>
    %260 = arith.addf %258, %259 : vector<8x8xf32>
    %cst_107 = arith.constant dense<0xFF800000> : vector<8xf32>
    %261 = vector.multi_reduction <maximumf>, %260, %cst_107 [1] : vector<8x8xf32> to vector<8xf32>
    %262 = vector.shape_cast %261 : vector<8xf32> to vector<8x1xf32>
    %263 = vector.broadcast %262 : vector<8x1xf32> to vector<8x8xf32>
    %264 = arith.subf %260, %263 : vector<8x8xf32>
    %265 = math.exp %264 : vector<8x8xf32>
    %cst_108 = arith.constant dense<0.000000e+00> : vector<8xf32>
    %266 = vector.multi_reduction <add>, %265, %cst_108 [1] : vector<8x8xf32> to vector<8xf32>
    %267 = vector.shape_cast %266 : vector<8xf32> to vector<8x1xf32>
    %268 = tpu.reciprocal %267 {approx = true} : vector<8x1xf32> -> vector<8x1xf32>
    %269 = vector.broadcast %268 : vector<8x1xf32> to vector<8x8xf32>
    %270 = arith.mulf %265, %269 : vector<8x8xf32>
    %cst_109 = arith.constant dense<0.000000e+00> : vector<8x16xf32>
    %271 = tpu.matmul %270, %255, %cst_109 {dimension_numbers = #tpu.dot_dimension_numbers<[1], [0], [0], [1], [0, 0, 1, 1], [], []>} : vector<8x8xf32>, vector<8x16xf32>, vector<8x16xf32> -> vector<8x16xf32>
    %272 = vector.extract_strided_slice %214 {offsets = [0, 48], sizes = [8, 16], strides = [1, 1]} : vector<8x192xf32> to vector<8x16xf32>
    %273 = vector.extract_strided_slice %214 {offsets = [0, 112], sizes = [8, 16], strides = [1, 1]} : vector<8x192xf32> to vector<8x16xf32>
    %274 = vector.extract_strided_slice %214 {offsets = [0, 176], sizes = [8, 16], strides = [1, 1]} : vector<8x192xf32> to vector<8x16xf32>
    %cst_110 = arith.constant dense<0.000000e+00> : vector<8x8xf32>
    %275 = tpu.matmul %272, %273, %cst_110 {dimension_numbers = #tpu.dot_dimension_numbers<[1], [1], [0], [0], [0, 0, 1, 0], [], []>} : vector<8x16xf32>, vector<8x16xf32>, vector<8x8xf32> -> vector<8x8xf32>
    %cst_111 = arith.constant 2.500000e-01 : f32
    %276 = vector.broadcast %cst_111 : f32 to vector<8x8xf32>
    %277 = arith.mulf %275, %276 : vector<8x8xf32>
    %278 = vector.broadcast %17 : vector<1x8xf32> to vector<8x8xf32>
    %279 = arith.addf %277, %278 : vector<8x8xf32>
    %cst_112 = arith.constant dense<0xFF800000> : vector<8xf32>
    %280 = vector.multi_reduction <maximumf>, %279, %cst_112 [1] : vector<8x8xf32> to vector<8xf32>
    %281 = vector.shape_cast %280 : vector<8xf32> to vector<8x1xf32>
    %282 = vector.broadcast %281 : vector<8x1xf32> to vector<8x8xf32>
    %283 = arith.subf %279, %282 : vector<8x8xf32>
    %284 = math.exp %283 : vector<8x8xf32>
    %cst_113 = arith.constant dense<0.000000e+00> : vector<8xf32>
    %285 = vector.multi_reduction <add>, %284, %cst_113 [1] : vector<8x8xf32> to vector<8xf32>
    %286 = vector.shape_cast %285 : vector<8xf32> to vector<8x1xf32>
    %287 = tpu.reciprocal %286 {approx = true} : vector<8x1xf32> -> vector<8x1xf32>
    %288 = vector.broadcast %287 : vector<8x1xf32> to vector<8x8xf32>
    %289 = arith.mulf %284, %288 : vector<8x8xf32>
    %cst_114 = arith.constant dense<0.000000e+00> : vector<8x16xf32>
    %290 = tpu.matmul %289, %274, %cst_114 {dimension_numbers = #tpu.dot_dimension_numbers<[1], [0], [0], [1], [0, 0, 1, 1], [], []>} : vector<8x8xf32>, vector<8x16xf32>, vector<8x16xf32> -> vector<8x16xf32>
    %291 = tpu.concatenate %233, %252, %271, %290 in 1 : vector<8x16xf32>, vector<8x16xf32>, vector<8x16xf32>, vector<8x16xf32> -> vector<8x64xf32>
    %292 = arith.truncf %291 : vector<8x64xf32> to vector<8x64xbf16>
    %c1_115 = arith.constant 1 : index
    %c0_116 = arith.constant 0 : index
    %c0_117 = arith.constant 0 : index
    %293 = vector.load %arg9[%c1_115, %c0_116, %c0_117] : memref<2x64x64xbf16, #tpu.memory_space<vmem>>, vector<1x64x64xbf16>
    %294 = vector.shape_cast %293 : vector<1x64x64xbf16> to vector<64x64xbf16>
    %cst_118 = arith.constant dense<0.000000e+00> : vector<8x64xf32>
    %295 = tpu.matmul %292, %294, %cst_118 {dimension_numbers = #tpu.dot_dimension_numbers<[1], [0], [0], [1], [0, 0, 1, 1], [], []>} : vector<8x64xbf16>, vector<64x64xbf16>, vector<8x64xf32> -> vector<8x64xf32>
    %296 = arith.addf %184, %295 : vector<8x64xf32>
    %c1_119 = arith.constant 1 : index
    %c0_120 = arith.constant 0 : index
    %c0_121 = arith.constant 0 : index
    %297 = vector.load %arg10[%c1_119, %c0_120, %c0_121] : memref<2x1x64xf32, #tpu.memory_space<vmem>>, vector<1x1x64xf32>
    %298 = vector.shape_cast %297 : vector<1x1x64xf32> to vector<1x64xf32>
    %299 = vector.broadcast %298 : vector<1x64xf32> to vector<8x64xf32>
    %300 = arith.addf %296, %299 : vector<8x64xf32>
    %c1_122 = arith.constant 1 : index
    %c0_123 = arith.constant 0 : index
    %c0_124 = arith.constant 0 : index
    %301 = vector.load %arg11[%c1_122, %c0_123, %c0_124] : memref<2x1x64xf32, #tpu.memory_space<vmem>>, vector<1x1x64xf32>
    %302 = vector.shape_cast %301 : vector<1x1x64xf32> to vector<1x64xf32>
    %c1_125 = arith.constant 1 : index
    %c0_126 = arith.constant 0 : index
    %c0_127 = arith.constant 0 : index
    %303 = vector.load %arg12[%c1_125, %c0_126, %c0_127] : memref<2x1x64xf32, #tpu.memory_space<vmem>>, vector<1x1x64xf32>
    %304 = vector.shape_cast %303 : vector<1x1x64xf32> to vector<1x64xf32>
    %cst_128 = arith.constant dense<0.000000e+00> : vector<8xf32>
    %305 = vector.multi_reduction <add>, %300, %cst_128 [1] : vector<8x64xf32> to vector<8xf32>
    %306 = vector.shape_cast %305 : vector<8xf32> to vector<8x1xf32>
    %cst_129 = arith.constant 6.400000e+01 : f32
    %307 = vector.broadcast %cst_129 : f32 to vector<8x1xf32>
    %308 = arith.divf %306, %307 : vector<8x1xf32>
    %309 = vector.broadcast %308 : vector<8x1xf32> to vector<8x64xf32>
    %310 = arith.subf %300, %309 : vector<8x64xf32>
    %311 = arith.mulf %310, %310 : vector<8x64xf32>
    %cst_130 = arith.constant dense<0.000000e+00> : vector<8xf32>
    %312 = vector.multi_reduction <add>, %311, %cst_130 [1] : vector<8x64xf32> to vector<8xf32>
    %313 = vector.shape_cast %312 : vector<8xf32> to vector<8x1xf32>
    %cst_131 = arith.constant 6.400000e+01 : f32
    %314 = vector.broadcast %cst_131 : f32 to vector<8x1xf32>
    %315 = arith.divf %313, %314 : vector<8x1xf32>
    %316 = vector.broadcast %308 : vector<8x1xf32> to vector<8x64xf32>
    %317 = arith.subf %300, %316 : vector<8x64xf32>
    %cst_132 = arith.constant 9.99999974E-6 : f32
    %318 = vector.broadcast %cst_132 : f32 to vector<8x1xf32>
    %319 = arith.addf %315, %318 : vector<8x1xf32>
    %320 = math.rsqrt %319 : vector<8x1xf32>
    %321 = vector.broadcast %320 : vector<8x1xf32> to vector<8x64xf32>
    %322 = arith.mulf %317, %321 : vector<8x64xf32>
    %323 = vector.broadcast %302 : vector<1x64xf32> to vector<8x64xf32>
    %324 = arith.mulf %322, %323 : vector<8x64xf32>
    %325 = vector.broadcast %304 : vector<1x64xf32> to vector<8x64xf32>
    %326 = arith.addf %324, %325 : vector<8x64xf32>
    %327 = arith.truncf %326 : vector<8x64xf32> to vector<8x64xbf16>
    %c1_133 = arith.constant 1 : index
    %c0_134 = arith.constant 0 : index
    %c0_135 = arith.constant 0 : index
    %328 = vector.load %arg13[%c1_133, %c0_134, %c0_135] : memref<2x64x128xbf16, #tpu.memory_space<vmem>>, vector<1x64x128xbf16>
    %329 = vector.shape_cast %328 : vector<1x64x128xbf16> to vector<64x128xbf16>
    %cst_136 = arith.constant dense<0.000000e+00> : vector<8x128xf32>
    %330 = tpu.matmul %327, %329, %cst_136 {dimension_numbers = #tpu.dot_dimension_numbers<[1], [0], [0], [1], [0, 0, 1, 1], [], []>} : vector<8x64xbf16>, vector<64x128xbf16>, vector<8x128xf32> -> vector<8x128xf32>
    %c1_137 = arith.constant 1 : index
    %c0_138 = arith.constant 0 : index
    %c0_139 = arith.constant 0 : index
    %331 = vector.load %arg14[%c1_137, %c0_138, %c0_139] : memref<2x1x128xf32, #tpu.memory_space<vmem>>, vector<1x1x128xf32>
    %332 = vector.shape_cast %331 : vector<1x1x128xf32> to vector<1x128xf32>
    %333 = vector.broadcast %332 : vector<1x128xf32> to vector<8x128xf32>
    %334 = arith.addf %330, %333 : vector<8x128xf32>
    %cst_140 = arith.constant 5.000000e-01 : f32
    %335 = vector.broadcast %cst_140 : f32 to vector<8x128xf32>
    %336 = arith.mulf %335, %334 : vector<8x128xf32>
    %cst_141 = arith.constant 0.707106769 : f32
    %337 = vector.broadcast %cst_141 : f32 to vector<8x128xf32>
    %338 = arith.mulf %334, %337 : vector<8x128xf32>
    %339 = math.erf %338 : vector<8x128xf32>
    %cst_142 = arith.constant 1.000000e+00 : f32
    %340 = vector.broadcast %cst_142 : f32 to vector<8x128xf32>
    %341 = arith.addf %340, %339 : vector<8x128xf32>
    %342 = arith.mulf %336, %341 : vector<8x128xf32>
    %343 = arith.truncf %342 : vector<8x128xf32> to vector<8x128xbf16>
    %c1_143 = arith.constant 1 : index
    %c0_144 = arith.constant 0 : index
    %c0_145 = arith.constant 0 : index
    %344 = vector.load %arg15[%c1_143, %c0_144, %c0_145] : memref<2x128x64xbf16, #tpu.memory_space<vmem>>, vector<1x128x64xbf16>
    %345 = vector.shape_cast %344 : vector<1x128x64xbf16> to vector<128x64xbf16>
    %cst_146 = arith.constant dense<0.000000e+00> : vector<8x64xf32>
    %346 = tpu.matmul %343, %345, %cst_146 {dimension_numbers = #tpu.dot_dimension_numbers<[1], [0], [0], [1], [0, 0, 1, 1], [], []>} : vector<8x128xbf16>, vector<128x64xbf16>, vector<8x64xf32> -> vector<8x64xf32>
    %c1_147 = arith.constant 1 : index
    %c0_148 = arith.constant 0 : index
    %c0_149 = arith.constant 0 : index
    %347 = vector.load %arg16[%c1_147, %c0_148, %c0_149] : memref<2x1x64xf32, #tpu.memory_space<vmem>>, vector<1x1x64xf32>
    %348 = vector.shape_cast %347 : vector<1x1x64xf32> to vector<1x64xf32>
    %349 = vector.broadcast %348 : vector<1x64xf32> to vector<8x64xf32>
    %350 = arith.addf %346, %349 : vector<8x64xf32>
    %351 = arith.addf %300, %350 : vector<8x64xf32>
    %352 = arith.truncf %351 : vector<8x64xf32> to vector<8x64xbf16>
    %c0_150 = arith.constant 0 : index
    %c0_151 = arith.constant 0 : index
    %353 = vector.load %arg17[%c0_150, %c0_151] : memref<64x128xbf16, #tpu.memory_space<vmem>>, vector<64x128xbf16>
    %cst_152 = arith.constant dense<0.000000e+00> : vector<8x128xf32>
    %354 = tpu.matmul %352, %353, %cst_152 {dimension_numbers = #tpu.dot_dimension_numbers<[1], [0], [0], [1], [0, 0, 1, 1], [], []>} : vector<8x64xbf16>, vector<64x128xbf16>, vector<8x128xf32> -> vector<8x128xf32>
    %c0_153 = arith.constant 0 : index
    %c0_154 = arith.constant 0 : index
    %355 = vector.load %arg18[%c0_153, %c0_154] : memref<1x128xf32, #tpu.memory_space<vmem>>, vector<1x128xf32>
    %356 = vector.broadcast %355 : vector<1x128xf32> to vector<8x128xf32>
    %357 = arith.addf %354, %356 : vector<8x128xf32>
    %c0_155 = arith.constant 0 : index
    %c0_156 = arith.constant 0 : index
    %358 = vector.load %arg19[%c0_155, %c0_156] : memref<8x128xf32, #tpu.memory_space<vmem>>, vector<8x128xf32>
    tpu.vector_store %arg19[%c0_155, %c0_156], %357 {strides = array<i32>} : memref<8x128xf32, #tpu.memory_space<vmem>>, vector<8x128xf32>,
    return
  }
  func.func @transform_0(%arg0: i32) -> (i32, i32) {
    %c0_i32 = arith.constant 0 : i32
    %c0_i32_0 = arith.constant 0 : i32
    return %arg0, %c0_i32 : i32, i32
  }
  func.func @transform_1(%arg0: i32) -> (i32, i32) {
    %c0_i32 = arith.constant 0 : i32
    %c0_i32_0 = arith.constant 0 : i32
    %c0_i32_1 = arith.constant 0 : i32
    return %c0_i32, %c0_i32_0 : i32, i32
  }
  func.func @transform_2(%arg0: i32) -> (i32, i32) {
    %c0_i32 = arith.constant 0 : i32
    %c0_i32_0 = arith.constant 0 : i32
    %c0_i32_1 = arith.constant 0 : i32
    return %c0_i32, %c0_i32_0 : i32, i32
  }
  func.func @transform_3(%arg0: i32) -> (i32, i32) {
    %c0_i32 = arith.constant 0 : i32
    %c0_i32_0 = arith.constant 0 : i32
    %c0_i32_1 = arith.constant 0 : i32
    return %c0_i32, %c0_i32_0 : i32, i32
  }
  func.func @transform_4(%arg0: i32) -> (i32, i32) {
    %c0_i32 = arith.constant 0 : i32
    %c0_i32_0 = arith.constant 0 : i32
    %c0_i32_1 = arith.constant 0 : i32
    return %c0_i32, %c0_i32_0 : i32, i32
  }
  func.func @transform_5(%arg0: i32) -> (i32, i32, i32) {
    %c0_i32 = arith.constant 0 : i32
    %c0_i32_0 = arith.constant 0 : i32
    %c0_i32_1 = arith.constant 0 : i32
    %c0_i32_2 = arith.constant 0 : i32
    return %c0_i32, %c0_i32_0, %c0_i32_1 : i32, i32, i32
  }
  func.func @transform_6(%arg0: i32) -> (i32, i32, i32) {
    %c0_i32 = arith.constant 0 : i32
    %c0_i32_0 = arith.constant 0 : i32
    %c0_i32_1 = arith.constant 0 : i32
    %c0_i32_2 = arith.constant 0 : i32
    return %c0_i32, %c0_i32_0, %c0_i32_1 : i32, i32, i32
  }
  func.func @transform_7(%arg0: i32) -> (i32, i32, i32) {
    %c0_i32 = arith.constant 0 : i32
    %c0_i32_0 = arith.constant 0 : i32
    %c0_i32_1 = arith.constant 0 : i32
    %c0_i32_2 = arith.constant 0 : i32
    return %c0_i32, %c0_i32_0, %c0_i32_1 : i32, i32, i32
  }
  func.func @transform_8(%arg0: i32) -> (i32, i32, i32) {
    %c0_i32 = arith.constant 0 : i32
    %c0_i32_0 = arith.constant 0 : i32
    %c0_i32_1 = arith.constant 0 : i32
    %c0_i32_2 = arith.constant 0 : i32
    return %c0_i32, %c0_i32_0, %c0_i32_1 : i32, i32, i32
  }
  func.func @transform_9(%arg0: i32) -> (i32, i32, i32) {
    %c0_i32 = arith.constant 0 : i32
    %c0_i32_0 = arith.constant 0 : i32
    %c0_i32_1 = arith.constant 0 : i32
    %c0_i32_2 = arith.constant 0 : i32
    return %c0_i32, %c0_i32_0, %c0_i32_1 : i32, i32, i32
  }
  func.func @transform_10(%arg0: i32) -> (i32, i32, i32) {
    %c0_i32 = arith.constant 0 : i32
    %c0_i32_0 = arith.constant 0 : i32
    %c0_i32_1 = arith.constant 0 : i32
    %c0_i32_2 = arith.constant 0 : i32
    return %c0_i32, %c0_i32_0, %c0_i32_1 : i32, i32, i32
  }
  func.func @transform_11(%arg0: i32) -> (i32, i32, i32) {
    %c0_i32 = arith.constant 0 : i32
    %c0_i32_0 = arith.constant 0 : i32
    %c0_i32_1 = arith.constant 0 : i32
    %c0_i32_2 = arith.constant 0 : i32
    return %c0_i32, %c0_i32_0, %c0_i32_1 : i32, i32, i32
  }
  func.func @transform_12(%arg0: i32) -> (i32, i32, i32) {
    %c0_i32 = arith.constant 0 : i32
    %c0_i32_0 = arith.constant 0 : i32
    %c0_i32_1 = arith.constant 0 : i32
    %c0_i32_2 = arith.constant 0 : i32
    return %c0_i32, %c0_i32_0, %c0_i32_1 : i32, i32, i32
  }
  func.func @transform_13(%arg0: i32) -> (i32, i32, i32) {
    %c0_i32 = arith.constant 0 : i32
    %c0_i32_0 = arith.constant 0 : i32
    %c0_i32_1 = arith.constant 0 : i32
    %c0_i32_2 = arith.constant 0 : i32
    return %c0_i32, %c0_i32_0, %c0_i32_1 : i32, i32, i32
  }
  func.func @transform_14(%arg0: i32) -> (i32, i32, i32) {
    %c0_i32 = arith.constant 0 : i32
    %c0_i32_0 = arith.constant 0 : i32
    %c0_i32_1 = arith.constant 0 : i32
    %c0_i32_2 = arith.constant 0 : i32
    return %c0_i32, %c0_i32_0, %c0_i32_1 : i32, i32, i32
  }
  func.func @transform_15(%arg0: i32) -> (i32, i32, i32) {
    %c0_i32 = arith.constant 0 : i32
    %c0_i32_0 = arith.constant 0 : i32
    %c0_i32_1 = arith.constant 0 : i32
    %c0_i32_2 = arith.constant 0 : i32
    return %c0_i32, %c0_i32_0, %c0_i32_1 : i32, i32, i32
  }
  func.func @transform_16(%arg0: i32) -> (i32, i32) {
    %c0_i32 = arith.constant 0 : i32
    %c0_i32_0 = arith.constant 0 : i32
    %c0_i32_1 = arith.constant 0 : i32
    return %c0_i32, %c0_i32_0 : i32, i32
  }
  func.func @transform_17(%arg0: i32) -> (i32, i32) {
    %c0_i32 = arith.constant 0 : i32
    %c0_i32_0 = arith.constant 0 : i32
    %c0_i32_1 = arith.constant 0 : i32
    return %c0_i32, %c0_i32_0 : i32, i32
  }
  func.func @transform_18(%arg0: i32) -> (i32, i32) {
    %c0_i32 = arith.constant 0 : i32
    %c0_i32_0 = arith.constant 0 : i32
    return %arg0, %c0_i32 : i32, i32
  }
}

</mosaic_0001>

<llo_original>
// kernel: vit_forward.1
$region0: #{vit_forward.1}
  #allocation0 [shape = 'u32[]', space=smem, size = 0x4, offset = 0x4, fixed_abs, tag = 'smem constant byte address 0x4 - core index']
  #allocation1 [shape = 'u32[144,128]{1,0:T(1,128)}', space=vmem, size = 0x12000, scoped, tag = 'internal scratch']
  %s0 = inlined_call_operand.vmem [shape: f32[16,768], index: 0, kind: input, shape index: {}]
  %s1 = inlined_call_operand.vmem [shape: bf16[768,64], index: 1, kind: input, shape index: {}]
  %s2 = inlined_call_operand.vmem [shape: f32[1,64], index: 2, kind: input, shape index: {}]
  %s3 = inlined_call_operand.vmem [shape: f32[8,64], index: 3, kind: input, shape index: {}]
  %s4 = inlined_call_operand.vmem [shape: f32[8,1], index: 4, kind: input, shape index: {}]
  %s5 = inlined_call_operand.vmem [shape: f32[2,1,64], index: 5, kind: input, shape index: {}]
  %s6 = inlined_call_operand.vmem [shape: f32[2,1,64], index: 6, kind: input, shape index: {}]
  %s7 = inlined_call_operand.vmem [shape: bf16[2,64,192], index: 7, kind: input, shape index: {}]
  %s8 = inlined_call_operand.vmem [shape: bf16[2,64,64], index: 8, kind: input, shape index: {}]
  %s9 = inlined_call_operand.vmem [shape: f32[2,1,64], index: 9, kind: input, shape index: {}]
  %s10 = inlined_call_operand.vmem [shape: f32[2,1,64], index: 10, kind: input, shape index: {}]
  %s11 = inlined_call_operand.vmem [shape: f32[2,1,64], index: 11, kind: input, shape index: {}]
  %s12 = inlined_call_operand.vmem [shape: bf16[2,64,128], index: 12, kind: input, shape index: {}]
  %s13 = inlined_call_operand.vmem [shape: f32[2,1,128], index: 13, kind: input, shape index: {}]
  %s14 = inlined_call_operand.vmem [shape: bf16[2,128,64], index: 14, kind: input, shape index: {}]
  %s15 = inlined_call_operand.vmem [shape: f32[2,1,64], index: 15, kind: input, shape index: {}]
  %s16 = inlined_call_operand.vmem [shape: bf16[64,128], index: 16, kind: input, shape index: {}]
  %s17 = inlined_call_operand.vmem [shape: f32[1,128], index: 17, kind: input, shape index: {}]
  %s18 = inlined_call_operand.vmem [shape: f32[16,128], index: 18, kind: output, shape index: {}]
  %s19 = sld [smem:[#allocation0]]
  $region105: #{vit_forward.1} parent=0
    _
  %s21 = ssub.s32 1, %s19
  %s22 = scalar_select 0, %s21, %s19
  loop: start=0, step=1, limit=4
  $region2: #{vit_forward.1} parent=0 // loop_pre_header
    _
  $region3: #{vit_forward.1} parent=0 // loop_header
    %s24 = sphi 0, %s28
    %p25 = scmp.ge.s32.totalorder %s24, 4
    %s34 = sphi 0, %s36
    %s37 = sphi 0, %s34
    %s38 = sphi 0, %s37
    %s54 = sphi 0, %s38
    %s58 = sphi 0, %s58
    %s60 = sphi 0, %s58
    %s61 = sphi 0, %s60
    %s75 = sphi 0, %s61
    %s79 = sphi 0, %s79
    %s81 = sphi 0, %s79
    %s82 = sphi 0, %s81
    %s96 = sphi 0, %s82
    %s100 = sphi 0, %s100
    %s102 = sphi 0, %s100
    %s103 = sphi 0, %s102
    %s117 = sphi 0, %s103
    %s121 = sphi 0, %s121
    %s123 = sphi 0, %s121
    %s124 = sphi 0, %s123
    %s138 = sphi 0, %s124
    %s142 = sphi 0, %s142
    %s144 = sphi 0, %s142
    %s145 = sphi 0, %s144
    %s159 = sphi 0, %s145
    %s163 = sphi 0, %s163
    %s165 = sphi 0, %s163
    %s166 = sphi 0, %s165
    %s180 = sphi 0, %s166
    %s184 = sphi 0, %s184
    %s186 = sphi 0, %s184
    %s187 = sphi 0, %s186
    %s201 = sphi 0, %s187
    %s205 = sphi 0, %s205
    %s207 = sphi 0, %s205
    %s208 = sphi 0, %s207
    %s222 = sphi 0, %s208
    %s226 = sphi 0, %s226
    %s228 = sphi 0, %s226
    %s229 = sphi 0, %s228
    %s243 = sphi 0, %s229
    %s247 = sphi 0, %s247
    %s249 = sphi 0, %s247
    %s250 = sphi 0, %s249
    %s264 = sphi 0, %s250
    %s268 = sphi 0, %s268
    %s270 = sphi 0, %s268
    %s271 = sphi 0, %s270
    %s285 = sphi 0, %s271
    %s289 = sphi 0, %s289
    %s291 = sphi 0, %s289
    %s292 = sphi 0, %s291
    %s306 = sphi 0, %s292
    %s310 = sphi 0, %s310
    %s312 = sphi 0, %s310
    %s313 = sphi 0, %s312
    %s327 = sphi 0, %s313
    %s331 = sphi 0, %s331
    %s333 = sphi 0, %s331
    %s334 = sphi 0, %s333
    %s348 = sphi 0, %s334
    %s352 = sphi 0, %s352
    %s354 = sphi 0, %s352
    %s355 = sphi 0, %s354
    %s369 = sphi 0, %s355
    %s373 = sphi 0, %s373
    %s375 = sphi 0, %s373
    %s376 = sphi 0, %s375
    %s390 = sphi 0, %s376
    %s394 = sphi 0, %s394
    %s396 = sphi 0, %s394
    %s397 = sphi 0, %s396
    %s411 = sphi 0, %s397
    %s417 = sphi 0, %s419
    %s420 = sphi 0, %s417
    %s421 = sphi 0, %s420
    %s437 = sphi 0, %s421
  $region4: #{vit_forward.1} parent=0 // loop_header_branch
    %27 = sbr.rel (%p25) target = $region8
  $region5: #{vit_forward.1} parent=0 // loop_body
    %s29 = ssub.s32 %s24, 1
    %s30 = ssub.s32 %s24, 2
    %s31 = sadd.s32 %s24, 1
    %s32 = ssub.s32 %s24, %s31
    %p33 = scmp.eq.s32.totalorder %s32, 0
    %s35 = sadd.s32 %s34, 1
    %s36 = scalar_select %p33, %s34, %s35
    %p39 = pneg %p33
    %p40 = scmp.eq.s32.totalorder %s24, 1
    %p41 = por %p39, %p40
    %p42 = scmp.ne.s32.totalorder %s34, %s37
    %p43 = scmp.eq.s32.totalorder %s24, 0
    %p44 = por %p42, %p43
    %p45 = scmp.ne.s32.totalorder %s34, %s37
    %p46 = scmp.eq.s32.totalorder %s29, 1
    %p47 = por %p45, %p46
    %p48 = scmp.ne.s32.totalorder %s37, %s38
    %p49 = scmp.eq.s32.totalorder %s29, 0
    %p50 = por %p48, %p49
    %p51 = scmp.ne.s32.totalorder %s37, %s38
    %p52 = scmp.eq.s32.totalorder %s30, 1
    %p53 = por %p51, %p52
    %p55 = scmp.ne.s32.totalorder %s38, %s54
    %p56 = scmp.eq.s32.totalorder %s30, 0
    %p57 = por %p55, %p56
    %s59 = sadd.s32 %s58, 1
    %p62 = scmp.eq.s32.totalorder %s24, 1
    %p63 = scmp.ne.s32.totalorder %s58, %s60
    %p64 = scmp.eq.s32.totalorder %s24, 0
    %p65 = por %p63, %p64
    %p66 = scmp.ne.s32.totalorder %s58, %s60
    %p67 = scmp.eq.s32.totalorder %s29, 1
    %p68 = por %p66, %p67
    %p69 = scmp.ne.s32.totalorder %s60, %s61
    %p70 = scmp.eq.s32.totalorder %s29, 0
    %p71 = por %p69, %p70
    %p72 = scmp.ne.s32.totalorder %s60, %s61
    %p73 = scmp.eq.s32.totalorder %s30, 1
    %p74 = por %p72, %p73
    %p76 = scmp.ne.s32.totalorder %s61, %s75
    %p77 = scmp.eq.s32.totalorder %s30, 0
    %p78 = por %p76, %p77
    %s80 = sadd.s32 %s79, 1
    %p83 = scmp.eq.s32.totalorder %s24, 1
    %p84 = scmp.ne.s32.totalorder %s79, %s81
    %p85 = scmp.eq.s32.totalorder %s24, 0
    %p86 = por %p84, %p85
    %p87 = scmp.ne.s32.totalorder %s79, %s81
    %p88 = scmp.eq.s32.totalorder %s29, 1
    %p89 = por %p87, %p88
    %p90 = scmp.ne.s32.totalorder %s81, %s82
    %p91 = scmp.eq.s32.totalorder %s29, 0
    %p92 = por %p90, %p91
    %p93 = scmp.ne.s32.totalorder %s81, %s82
    %p94 = scmp.eq.s32.totalorder %s30, 1
    %p95 = por %p93, %p94
    %p97 = scmp.ne.s32.totalorder %s82, %s96
    %p98 = scmp.eq.s32.totalorder %s30, 0
    %p99 = por %p97, %p98
    %s101 = sadd.s32 %s100, 1
    %p104 = scmp.eq.s32.totalorder %s24, 1
    %p105 = scmp.ne.s32.totalorder %s100, %s102
    %p106 = scmp.eq.s32.totalorder %s24, 0
    %p107 = por %p105, %p106
    %p108 = scmp.ne.s32.totalorder %s100, %s102
    %p109 = scmp.eq.s32.totalorder %s29, 1
    %p110 = por %p108, %p109
    %p111 = scmp.ne.s32.totalorder %s102, %s103
    %p112 = scmp.eq.s32.totalorder %s29, 0
    %p113 = por %p111, %p112
    %p114 = scmp.ne.s32.totalorder %s102, %s103
    %p115 = scmp.eq.s32.totalorder %s30, 1
    %p116 = por %p114, %p115
    %p118 = scmp.ne.s32.totalorder %s103, %s117
    %p119 = scmp.eq.s32.totalorder %s30, 0
    %p120 = por %p118, %p119
    %s122 = sadd.s32 %s121, 1
    %p125 = scmp.eq.s32.totalorder %s24, 1
    %p126 = scmp.ne.s32.totalorder %s121, %s123
    %p127 = scmp.eq.s32.totalorder %s24, 0
    %p128 = por %p126, %p127
    %p129 = scmp.ne.s32.totalorder %s121, %s123
    %p130 = scmp.eq.s32.totalorder %s29, 1
    %p131 = por %p129, %p130
    %p132 = scmp.ne.s32.totalorder %s123, %s124
    %p133 = scmp.eq.s32.totalorder %s29, 0
    %p134 = por %p132, %p133
    %p135 = scmp.ne.s32.totalorder %s123, %s124
    %p136 = scmp.eq.s32.totalorder %s30, 1
    %p137 = por %p135, %p136
    %p139 = scmp.ne.s32.totalorder %s124, %s138
    %p140 = scmp.eq.s32.totalorder %s30, 0
    %p141 = por %p139, %p140
    %s143 = sadd.s32 %s142, 1
    %p146 = scmp.eq.s32.totalorder %s24, 1
    %p147 = scmp.ne.s32.totalorder %s142, %s144
    %p148 = scmp.eq.s32.totalorder %s24, 0
    %p149 = por %p147, %p148
    %p150 = scmp.ne.s32.totalorder %s142, %s144
    %p151 = scmp.eq.s32.totalorder %s29, 1
    %p152 = por %p150, %p151
    %p153 = scmp.ne.s32.totalorder %s144, %s145
    %p154 = scmp.eq.s32.totalorder %s29, 0
    %p155 = por %p153, %p154
    %p156 = scmp.ne.s32.totalorder %s144, %s145
    %p157 = scmp.eq.s32.totalorder %s30, 1
    %p158 = por %p156, %p157
    %p160 = scmp.ne.s32.totalorder %s145, %s159
    %p161 = scmp.eq.s32.totalorder %s30, 0
    %p162 = por %p160, %p161
    %s164 = sadd.s32 %s163, 1
    %p167 = scmp.eq.s32.totalorder %s24, 1
    %p168 = scmp.ne.s32.totalorder %s163, %s165
    %p169 = scmp.eq.s32.totalorder %s24, 0
    %p170 = por %p168, %p169
    %p171 = scmp.ne.s32.totalorder %s163, %s165
    %p172 = scmp.eq.s32.totalorder %s29, 1
    %p173 = por %p171, %p172
    %p174 = scmp.ne.s32.totalorder %s165, %s166
    %p175 = scmp.eq.s32.totalorder %s29, 0
    %p176 = por %p174, %p175
    %p177 = scmp.ne.s32.totalorder %s165, %s166
    %p178 = scmp.eq.s32.totalorder %s30, 1
    %p179 = por %p177, %p178
    %p181 = scmp.ne.s32.totalorder %s166, %s180
    %p182 = scmp.eq.s32.totalorder %s30, 0
    %p183 = por %p181, %p182
    %s185 = sadd.s32 %s184, 1
    %p188 = scmp.eq.s32.totalorder %s24, 1
    %p189 = scmp.ne.s32.totalorder %s184, %s186
    %p190 = scmp.eq.s32.totalorder %s24, 0
    %p191 = por %p189, %p190
    %p192 = scmp.ne.s32.totalorder %s184, %s186
    %p193 = scmp.eq.s32.totalorder %s29, 1
    %p194 = por %p192, %p193
    %p195 = scmp.ne.s32.totalorder %s186, %s187
    %p196 = scmp.eq.s32.totalorder %s29, 0
    %p197 = por %p195, %p196
    %p198 = scmp.ne.s32.totalorder %s186, %s187
    %p199 = scmp.eq.s32.totalorder %s30, 1
    %p200 = por %p198, %p199
    %p202 = scmp.ne.s32.totalorder %s187, %s201
    %p203 = scmp.eq.s32.totalorder %s30, 0
    %p204 = por %p202, %p203
    %s206 = sadd.s32 %s205, 1
    %p209 = scmp.eq.s32.totalorder %s24, 1
    %p210 = scmp.ne.s32.totalorder %s205, %s207
    %p211 = scmp.eq.s32.totalorder %s24, 0
    %p212 = por %p210, %p211
    %p213 = scmp.ne.s32.totalorder %s205, %s207
    %p214 = scmp.eq.s32.totalorder %s29, 1
    %p215 = por %p213, %p214
    %p216 = scmp.ne.s32.totalorder %s207, %s208
    %p217 = scmp.eq.s32.totalorder %s29, 0
    %p218 = por %p216, %p217
    %p219 = scmp.ne.s32.totalorder %s207, %s208
    %p220 = scmp.eq.s32.totalorder %s30, 1
    %p221 = por %p219, %p220
    %p223 = scmp.ne.s32.totalorder %s208, %s222
    %p224 = scmp.eq.s32.totalorder %s30, 0
    %p225 = por %p223, %p224
    %s227 = sadd.s32 %s226, 1
    %p230 = scmp.eq.s32.totalorder %s24, 1
    %p231 = scmp.ne.s32.totalorder %s226, %s228
    %p232 = scmp.eq.s32.totalorder %s24, 0
    %p233 = por %p231, %p232
    %p234 = scmp.ne.s32.totalorder %s226, %s228
    %p235 = scmp.eq.s32.totalorder %s29, 1
    %p236 = por %p234, %p235
    %p237 = scmp.ne.s32.totalorder %s228, %s229
    %p238 = scmp.eq.s32.totalorder %s29, 0
    %p239 = por %p237, %p238
    %p240 = scmp.ne.s32.totalorder %s228, %s229
    %p241 = scmp.eq.s32.totalorder %s30, 1
    %p242 = por %p240, %p241
    %p244 = scmp.ne.s32.totalorder %s229, %s243
    %p245 = scmp.eq.s32.totalorder %s30, 0
    %p246 = por %p244, %p245
    %s248 = sadd.s32 %s247, 1
    %p251 = scmp.eq.s32.totalorder %s24, 1
    %p252 = scmp.ne.s32.totalorder %s247, %s249
    %p253 = scmp.eq.s32.totalorder %s24, 0
    %p254 = por %p252, %p253
    %p255 = scmp.ne.s32.totalorder %s247, %s249
    %p256 = scmp.eq.s32.totalorder %s29, 1
    %p257 = por %p255, %p256
    %p258 = scmp.ne.s32.totalorder %s249, %s250
    %p259 = scmp.eq.s32.totalorder %s29, 0
    %p260 = por %p258, %p259
    %p261 = scmp.ne.s32.totalorder %s249, %s250
    %p262 = scmp.eq.s32.totalorder %s30, 1
    %p263 = por %p261, %p262
    %p265 = scmp.ne.s32.totalorder %s250, %s264
    %p266 = scmp.eq.s32.totalorder %s30, 0
    %p267 = por %p265, %p266
    %s269 = sadd.s32 %s268, 1
    %p272 = scmp.eq.s32.totalorder %s24, 1
    %p273 = scmp.ne.s32.totalorder %s268, %s270
    %p274 = scmp.eq.s32.totalorder %s24, 0
    %p275 = por %p273, %p274
    %p276 = scmp.ne.s32.totalorder %s268, %s270
    %p277 = scmp.eq.s32.totalorder %s29, 1
    %p278 = por %p276, %p277
    %p279 = scmp.ne.s32.totalorder %s270, %s271
    %p280 = scmp.eq.s32.totalorder %s29, 0
    %p281 = por %p279, %p280
    %p282 = scmp.ne.s32.totalorder %s270, %s271
    %p283 = scmp.eq.s32.totalorder %s30, 1
    %p284 = por %p282, %p283
    %p286 = scmp.ne.s32.totalorder %s271, %s285
    %p287 = scmp.eq.s32.totalorder %s30, 0
    %p288 = por %p286, %p287
    %s290 = sadd.s32 %s289, 1
    %p293 = scmp.eq.s32.totalorder %s24, 1
    %p294 = scmp.ne.s32.totalorder %s289, %s291
    %p295 = scmp.eq.s32.totalorder %s24, 0
    %p296 = por %p294, %p295
    %p297 = scmp.ne.s32.totalorder %s289, %s291
    %p298 = scmp.eq.s32.totalorder %s29, 1
    %p299 = por %p297, %p298
    %p300 = scmp.ne.s32.totalorder %s291, %s292
    %p301 = scmp.eq.s32.totalorder %s29, 0
    %p302 = por %p300, %p301
    %p303 = scmp.ne.s32.totalorder %s291, %s292
    %p304 = scmp.eq.s32.totalorder %s30, 1
    %p305 = por %p303, %p304
    %p307 = scmp.ne.s32.totalorder %s292, %s306
    %p308 = scmp.eq.s32.totalorder %s30, 0
    %p309 = por %p307, %p308
    %s311 = sadd.s32 %s310, 1
    %p314 = scmp.eq.s32.totalorder %s24, 1
    %p315 = scmp.ne.s32.totalorder %s310, %s312
    %p316 = scmp.eq.s32.totalorder %s24, 0
    %p317 = por %p315, %p316
    %p318 = scmp.ne.s32.totalorder %s310, %s312
    %p319 = scmp.eq.s32.totalorder %s29, 1
    %p320 = por %p318, %p319
    %p321 = scmp.ne.s32.totalorder %s312, %s313
    %p322 = scmp.eq.s32.totalorder %s29, 0
    %p323 = por %p321, %p322
    %p324 = scmp.ne.s32.totalorder %s312, %s313
    %p325 = scmp.eq.s32.totalorder %s30, 1
    %p326 = por %p324, %p325
    %p328 = scmp.ne.s32.totalorder %s313, %s327
    %p329 = scmp.eq.s32.totalorder %s30, 0
    %p330 = por %p328, %p329
    %s332 = sadd.s32 %s331, 1
    %p335 = scmp.eq.s32.totalorder %s24, 1
    %p336 = scmp.ne.s32.totalorder %s331, %s333
    %p337 = scmp.eq.s32.totalorder %s24, 0
    %p338 = por %p336, %p337
    %p339 = scmp.ne.s32.totalorder %s331, %s333
    %p340 = scmp.eq.s32.totalorder %s29, 1
    %p341 = por %p339, %p340
    %p342 = scmp.ne.s32.totalorder %s333, %s334
    %p343 = scmp.eq.s32.totalorder %s29, 0
    %p344 = por %p342, %p343
    %p345 = scmp.ne.s32.totalorder %s333, %s334
    %p346 = scmp.eq.s32.totalorder %s30, 1
    %p347 = por %p345, %p346
    %p349 = scmp.ne.s32.totalorder %s334, %s348
    %p350 = scmp.eq.s32.totalorder %s30, 0
    %p351 = por %p349, %p350
    %s353 = sadd.s32 %s352, 1
    %p356 = scmp.eq.s32.totalorder %s24, 1
    %p357 = scmp.ne.s32.totalorder %s352, %s354
    %p358 = scmp.eq.s32.totalorder %s24, 0
    %p359 = por %p357, %p358
    %p360 = scmp.ne.s32.totalorder %s352, %s354
    %p361 = scmp.eq.s32.totalorder %s29, 1
    %p362 = por %p360, %p361
    %p363 = scmp.ne.s32.totalorder %s354, %s355
    %p364 = scmp.eq.s32.totalorder %s29, 0
    %p365 = por %p363, %p364
    %p366 = scmp.ne.s32.totalorder %s354, %s355
    %p367 = scmp.eq.s32.totalorder %s30, 1
    %p368 = por %p366, %p367
    %p370 = scmp.ne.s32.totalorder %s355, %s369
    %p371 = scmp.eq.s32.totalorder %s30, 0
    %p372 = por %p370, %p371
    %s374 = sadd.s32 %s373, 1
    %p377 = scmp.eq.s32.totalorder %s24, 1
    %p378 = scmp.ne.s32.totalorder %s373, %s375
    %p379 = scmp.eq.s32.totalorder %s24, 0
    %p380 = por %p378, %p379
    %p381 = scmp.ne.s32.totalorder %s373, %s375
    %p382 = scmp.eq.s32.totalorder %s29, 1
    %p383 = por %p381, %p382
    %p384 = scmp.ne.s32.totalorder %s375, %s376
    %p385 = scmp.eq.s32.totalorder %s29, 0
    %p386 = por %p384, %p385
    %p387 = scmp.ne.s32.totalorder %s375, %s376
    %p388 = scmp.eq.s32.totalorder %s30, 1
    %p389 = por %p387, %p388
    %p391 = scmp.ne.s32.totalorder %s376, %s390
    %p392 = scmp.eq.s32.totalorder %s30, 0
    %p393 = por %p391, %p392
    %s395 = sadd.s32 %s394, 1
    %p398 = scmp.eq.s32.totalorder %s24, 1
    %p399 = scmp.ne.s32.totalorder %s394, %s396
    %p400 = scmp.eq.s32.totalorder %s24, 0
    %p401 = por %p399, %p400
    %p402 = scmp.ne.s32.totalorder %s394, %s396
    %p403 = scmp.eq.s32.totalorder %s29, 1
    %p404 = por %p402, %p403
    %p405 = scmp.ne.s32.totalorder %s396, %s397
    %p406 = scmp.eq.s32.totalorder %s29, 0
    %p407 = por %p405, %p406
    %p408 = scmp.ne.s32.totalorder %s396, %s397
    %p409 = scmp.eq.s32.totalorder %s30, 1
    %p410 = por %p408, %p409
    %p412 = scmp.ne.s32.totalorder %s397, %s411
    %p413 = scmp.eq.s32.totalorder %s30, 0
    %p414 = por %p412, %p413
    %s415 = ssub.s32 %s24, %s31
    %p416 = scmp.eq.s32.totalorder %s415, 0
    %s418 = sadd.s32 %s417, 1
    %s419 = scalar_select %p416, %s417, %s418
    %p422 = pneg %p416
    %p423 = scmp.eq.s32.totalorder %s24, 1
    %p424 = por %p422, %p423
    %p425 = scmp.ne.s32.totalorder %s417, %s420
    %p426 = scmp.eq.s32.totalorder %s24, 0
    %p427 = por %p425, %p426
    %p428 = scmp.ne.s32.totalorder %s417, %s420
    %p429 = scmp.eq.s32.totalorder %s29, 1
    %p430 = por %p428, %p429
    %p431 = scmp.ne.s32.totalorder %s420, %s421
    %p432 = scmp.eq.s32.totalorder %s29, 0
    %p433 = por %p431, %p432
    %p434 = scmp.ne.s32.totalorder %s420, %s421
    %p435 = scmp.eq.s32.totalorder %s30, 1
    %p436 = por %p434, %p435
    %p438 = scmp.ne.s32.totalorder %s421, %s437
    %p439 = scmp.eq.s32.totalorder %s30, 0
    %p440 = por %p438, %p439
    %p441 = scmp.le.s32.totalorder 1, %s24
    %p442 = scmp.lt.s32.totalorder %s24, 3
    %p443 = pnand %p441, %p442
    %p444 = pneg %p443
    // Predicated region
    $region9: #{vit_forward.1} parent=5 // pred_check
      _
    $region10: #{vit_forward.1} parent=5 // pred_check_branch
      %446 = sbr.rel (%p443) target = $region12
    $region11: #{vit_forward.1} parent=5 // pred_region
      %s447 = ssub.s32 %s24, 1
      // Predicated region
      $region13: #{vit_forward.1} parent=11 // pred_check
        %p448 = pneg %p71
      $region14: #{vit_forward.1} parent=11 // pred_check_branch
        %450 = sbr.rel (%p448) target = $region16
      $region15: #{vit_forward.1} parent=11 // pred_region
        _
      $region16: #{vit_forward.1} parent=11 // pred_fallthru
        _
      // Predicated region
      $region17: #{vit_forward.1} parent=11 // pred_check
        %p451 = pneg %p92
      $region18: #{vit_forward.1} parent=11 // pred_check_branch
        %453 = sbr.rel (%p451) target = $region20
      $region19: #{vit_forward.1} parent=11 // pred_region
        _
      $region20: #{vit_forward.1} parent=11 // pred_fallthru
        _
      // Predicated region
      $region21: #{vit_forward.1} parent=11 // pred_check
        %p454 = pneg %p113
      $region22: #{vit_forward.1} parent=11 // pred_check_branch
        %456 = sbr.rel (%p454) target = $region24
      $region23: #{vit_forward.1} parent=11 // pred_region
        _
      $region24: #{vit_forward.1} parent=11 // pred_fallthru
        _
      // Predicated region
      $region25: #{vit_forward.1} parent=11 // pred_check
        %p457 = pneg %p134
      $region26: #{vit_forward.1} parent=11 // pred_check_branch
        %459 = sbr.rel (%p457) target = $region28
      $region27: #{vit_forward.1} parent=11 // pred_region
        _
      $region28: #{vit_forward.1} parent=11 // pred_fallthru
        _
      // Predicated region
      $region29: #{vit_forward.1} parent=11 // pred_check
        %p460 = pneg %p155
      $region30: #{vit_forward.1} parent=11 // pred_check_branch
        %462 = sbr.rel (%p460) target = $region32
      $region31: #{vit_forward.1} parent=11 // pred_region
        _
      $region32: #{vit_forward.1} parent=11 // pred_fallthru
        _
      // Predicated region
      $region33: #{vit_forward.1} parent=11 // pred_check
        %p463 = pneg %p176
      $region34: #{vit_forward.1} parent=11 // pred_check_branch
        %465 = sbr.rel (%p463) target = $region36
      $region35: #{vit_forward.1} parent=11 // pred_region
        _
      $region36: #{vit_forward.1} parent=11 // pred_fallthru
        _
      // Predicated region
      $region37: #{vit_forward.1} parent=11 // pred_check
        %p466 = pneg %p197
      $region38: #{vit_forward.1} parent=11 // pred_check_branch
        %468 = sbr.rel (%p466) target = $region40
      $region39: #{vit_forward.1} parent=11 // pred_region
        _
      $region40: #{vit_forward.1} parent=11 // pred_fallthru
        _
      // Predicated region
      $region41: #{vit_forward.1} parent=11 // pred_check
        %p469 = pneg %p218
      $region42: #{vit_forward.1} parent=11 // pred_check_branch
        %471 = sbr.rel (%p469) target = $region44
      $region43: #{vit_forward.1} parent=11 // pred_region
        _
      $region44: #{vit_forward.1} parent=11 // pred_fallthru
        _
      // Predicated region
      $region45: #{vit_forward.1} parent=11 // pred_check
        %p472 = pneg %p239
      $region46: #{vit_forward.1} parent=11 // pred_check_branch
        %474 = sbr.rel (%p472) target = $region48
      $region47: #{vit_forward.1} parent=11 // pred_region
        _
      $region48: #{vit_forward.1} parent=11 // pred_fallthru
        _
      // Predicated region
      $region49: #{vit_forward.1} parent=11 // pred_check
        %p475 = pneg %p260
      $region50: #{vit_forward.1} parent=11 // pred_check_branch
        %477 = sbr.rel (%p475) target = $region52
      $region51: #{vit_forward.1} parent=11 // pred_region
        _
      $region52: #{vit_forward.1} parent=11 // pred_fallthru
        _
      // Predicated region
      $region53: #{vit_forward.1} parent=11 // pred_check
        %p478 = pneg %p281
      $region54: #{vit_forward.1} parent=11 // pred_check_branch
        %480 = sbr.rel (%p478) target = $region56
      $region55: #{vit_forward.1} parent=11 // pred_region
        _
      $region56: #{vit_forward.1} parent=11 // pred_fallthru
        _
      // Predicated region
      $region57: #{vit_forward.1} parent=11 // pred_check
        %p481 = pneg %p302
      $region58: #{vit_forward.1} parent=11 // pred_check_branch
        %483 = sbr.rel (%p481) target = $region60
      $region59: #{vit_forward.1} parent=11 // pred_region
        _
      $region60: #{vit_forward.1} parent=11 // pred_fallthru
        _
      // Predicated region
      $region61: #{vit_forward.1} parent=11 // pred_check
        %p484 = pneg %p323
      $region62: #{vit_forward.1} parent=11 // pred_check_branch
        %486 = sbr.rel (%p484) target = $region64
      $region63: #{vit_forward.1} parent=11 // pred_region
        _
      $region64: #{vit_forward.1} parent=11 // pred_fallthru
        _
      // Predicated region
      $region65: #{vit_forward.1} parent=11 // pred_check
        %p487 = pneg %p344
      $region66: #{vit_forward.1} parent=11 // pred_check_branch
        %489 = sbr.rel (%p487) target = $region68
      $region67: #{vit_forward.1} parent=11 // pred_region
        _
      $region68: #{vit_forward.1} parent=11 // pred_fallthru
        _
      // Predicated region
      $region69: #{vit_forward.1} parent=11 // pred_check
        %p490 = pneg %p365
      $region70: #{vit_forward.1} parent=11 // pred_check_branch
        %492 = sbr.rel (%p490) target = $region72
      $region71: #{vit_forward.1} parent=11 // pred_region
        _
      $region72: #{vit_forward.1} parent=11 // pred_fallthru
        _
      // Predicated region
      $region73: #{vit_forward.1} parent=11 // pred_check
        %p493 = pneg %p386
      $region74: #{vit_forward.1} parent=11 // pred_check_branch
        %495 = sbr.rel (%p493) target = $region76
      $region75: #{vit_forward.1} parent=11 // pred_region
        _
      $region76: #{vit_forward.1} parent=11 // pred_fallthru
        _
      // Predicated region
      $region77: #{vit_forward.1} parent=11 // pred_check
        %p496 = pneg %p407
      $region78: #{vit_forward.1} parent=11 // pred_check_branch
        %498 = sbr.rel (%p496) target = $region80
      $region79: #{vit_forward.1} parent=11 // pred_region
        _
      $region80: #{vit_forward.1} parent=11 // pred_fallthru
        _
    $region12: #{vit_forward.1} parent=5 // pred_fallthru
      _
    %p499 = scmp.lt.s32.totalorder %s24, 2
    // Predicated region
    $region81: #{vit_forward.1} parent=5 // pred_check
      %p500 = pneg %p499
    $region82: #{vit_forward.1} parent=5 // pred_check_branch
      %502 = sbr.rel (%p500) target = $region84
    $region83: #{vit_forward.1} parent=5 // pred_region
      // Predicated region
      $region85: #{vit_forward.1} parent=83 // pred_check
        %p503 = pneg %p44
      $region86: #{vit_forward.1} parent=83 // pred_check_branch
        %505 = sbr.rel (%p503) target = $region88
      $region87: #{vit_forward.1} parent=83 // pred_region
        %p506 = scmp.lt.s32.totalorder %s24, 1
        %s507 = scalar_select %p506, %s24, 1
        %s508 = smul.addr %s507, 6
        %s509 = smul.addr %s508, 8
        %s510 = scalar_lea.vmem %s0, %s509
      $region88: #{vit_forward.1} parent=83 // pred_fallthru
        _
    $region84: #{vit_forward.1} parent=5 // pred_fallthru
      _
    %p511 = scmp.le.s32.totalorder 1, %s24
    %p512 = scmp.lt.s32.totalorder %s24, 3
    %p513 = pnand %p511, %p512
    %p514 = pneg %p513
    // Predicated region
    $region89: #{vit_forward.1} parent=5 // pred_check
      _
    $region90: #{vit_forward.1} parent=5 // pred_check_branch
      %516 = sbr.rel (%p513) target = $region92
    $region91: #{vit_forward.1} parent=5 // pred_region
      %s517 = ssub.s32 %s24, 1
      %p518 = scmp.lt.s32.totalorder %s29, 1
      %s519 = scalar_select %p518, %s29, 1
      %s520 = smul.addr %s519, 6
      %s521 = smul.addr %s520, 8
      %s522 = scalar_lea.vmem %s0, %s521
      %p523 = pneg %p50
      %p524 = pneg %p47
      %p525 = pneg %p71
      %p526 = pneg %p68
      %p527 = pneg %p92
      %p528 = pneg %p89
      %p529 = pneg %p113
      %p530 = pneg %p110
      %p531 = pneg %p134
      %p532 = pneg %p131
      %p533 = pneg %p155
      %p534 = pneg %p152
      %p535 = pneg %p176
      %p536 = pneg %p173
      %p537 = pneg %p197
      %p538 = pneg %p194
      %p539 = pneg %p218
      %p540 = pneg %p215
      %p541 = pneg %p239
      %p542 = pneg %p236
      %p543 = pneg %p260
      %p544 = pneg %p257
      %p545 = pneg %p281
      %p546 = pneg %p278
      %p547 = pneg %p302
      %p548 = pneg %p299
      %p549 = pneg %p323
      %p550 = pneg %p320
      %p551 = pneg %p344
      %p552 = pneg %p341
      %p553 = pneg %p365
      %p554 = pneg %p362
      %p555 = pneg %p386
      %p556 = pneg %p383
      %p557 = pneg %p407
      %p558 = pneg %p404
      %p559 = pneg %p433
      %p560 = pneg %p430
      %p561 = scmp.lt.s32.totalorder %s29, 1
      %s562 = scalar_select %p561, %s29, 1
      %s563 = smul.addr %s562, 8
      %s564 = scalar_lea.vmem %s18, %s563
      %p565 = scmp.lt.s32.totalorder %s29, 1
      %s566 = scalar_select %p565, %s29, 1
      %s567 = smul.addr %s566, 6
      %s568 = smul.addr %s567, 8
      %s569 = scalar_lea.vmem %s0, %s568
      %p570 = scmp.lt.s32.totalorder %s29, 1
      %s571 = scalar_select %p570, %s29, 1
      %s572 = smul.addr %s571, 8
      %s573 = scalar_lea.vmem %s18, %s572
      %v575 = vld [vmem:[%s569] sm:$0xff]
      %v576 = vld [vmem:[%s569 + $0x8] sm:$0xff]
      %v577 = vld [vmem:[%s569 + $0x10] sm:$0xff]
      %v578 = vld [vmem:[%s569 + $0x18] sm:$0xff]
      %v579 = vld [vmem:[%s569 + $0x20] sm:$0xff]
      %v580 = vld [vmem:[%s569 + $0x28] sm:$0xff]
      %v581 = vpack.c.bf16 %v575, %v575
      %v582 = vpack.c.bf16 %v576, %v576
      %v583 = vpack.c.bf16 %v577, %v577
      %v584 = vpack.c.bf16 %v578, %v578
      %v585 = vpack.c.bf16 %v579, %v579
      %v586 = vpack.c.bf16 %v580, %v580
      %v587 = vld [vmem:[%s1] sm:$0xf]
      %v588 = vld [vmem:[%s1 + $0x4] sm:$0xf]
      %v589 = vld [vmem:[%s1 + $0x8] sm:$0xf]
      %v590 = vld [vmem:[%s1 + $0xc] sm:$0xf]
      %v591 = vld [vmem:[%s1 + $0x10] sm:$0xf]
      %v592 = vld [vmem:[%s1 + $0x14] sm:$0xf]
      %v593 = vld [vmem:[%s1 + $0x18] sm:$0xf]
      %v594 = vld [vmem:[%s1 + $0x1c] sm:$0xf]
      %v595 = vld [vmem:[%s1 + $0x20] sm:$0xf]
      %v596 = vld [vmem:[%s1 + $0x24] sm:$0xf]
      %v597 = vld [vmem:[%s1 + $0x28] sm:$0xf]
      %v598 = vld [vmem:[%s1 + $0x2c] sm:$0xf]
      %v599 = vld [vmem:[%s1 + $0x30] sm:$0xf]
      %v600 = vld [vmem:[%s1 + $0x34] sm:$0xf]
      %v601 = vld [vmem:[%s1 + $0x38] sm:$0xf]
      %v602 = vld [vmem:[%s1 + $0x3c] sm:$0xf]
      %v603 = vld [vmem:[%s1 + $0x40] sm:$0xf]
      %v604 = vld [vmem:[%s1 + $0x44] sm:$0xf]
      %v605 = vld [vmem:[%s1 + $0x48] sm:$0xf]
      %v606 = vld [vmem:[%s1 + $0x4c] sm:$0xf]
      %v607 = vld [vmem:[%s1 + $0x50] sm:$0xf]
      %v608 = vld [vmem:[%s1 + $0x54] sm:$0xf]
      %v609 = vld [vmem:[%s1 + $0x58] sm:$0xf]
      %v610 = vld [vmem:[%s1 + $0x5c] sm:$0xf]
      %v611 = vld [vmem:[%s1 + $0x60] sm:$0xf]
      %v612 = vld [vmem:[%s1 + $0x64] sm:$0xf]
      %v613 = vld [vmem:[%s1 + $0x68] sm:$0xf]
      %v614 = vld [vmem:[%s1 + $0x6c] sm:$0xf]
      %v615 = vld [vmem:[%s1 + $0x70] sm:$0xf]
      %v616 = vld [vmem:[%s1 + $0x74] sm:$0xf]
      %v617 = vld [vmem:[%s1 + $0x78] sm:$0xf]
      %v618 = vld [vmem:[%s1 + $0x7c] sm:$0xf]
      %v619 = vld [vmem:[%s1 + $0x80] sm:$0xf]
      %v620 = vld [vmem:[%s1 + $0x84] sm:$0xf]
      %v621 = vld [vmem:[%s1 + $0x88] sm:$0xf]
      %v622 = vld [vmem:[%s1 + $0x8c] sm:$0xf]
      %v623 = vld [vmem:[%s1 + $0x90] sm:$0xf]
      %v624 = vld [vmem:[%s1 + $0x94] sm:$0xf]
      %v625 = vld [vmem:[%s1 + $0x98] sm:$0xf]
      %v626 = vld [vmem:[%s1 + $0x9c] sm:$0xf]
      %v627 = vld [vmem:[%s1 + $0xa0] sm:$0xf]
      %v628 = vld [vmem:[%s1 + $0xa4] sm:$0xf]
      %v629 = vld [vmem:[%s1 + $0xa8] sm:$0xf]
      %v630 = vld [vmem:[%s1 + $0xac] sm:$0xf]
      %v631 = vld [vmem:[%s1 + $0xb0] sm:$0xf]
      %v632 = vld [vmem:[%s1 + $0xb4] sm:$0xf]
      %v633 = vld [vmem:[%s1 + $0xb8] sm:$0xf]
      %v634 = vld [vmem:[%s1 + $0xbc] sm:$0xf]
      %v635 = vld [vmem:[%s1 + $0xc0] sm:$0xf]
      %v636 = vld [vmem:[%s1 + $0xc4] sm:$0xf]
      %v637 = vld [vmem:[%s1 + $0xc8] sm:$0xf]
      %v638 = vld [vmem:[%s1 + $0xcc] sm:$0xf]
      %v639 = vld [vmem:[%s1 + $0xd0] sm:$0xf]
      %v640 = vld [vmem:[%s1 + $0xd4] sm:$0xf]
      %v641 = vld [vmem:[%s1 + $0xd8] sm:$0xf]
      %v642 = vld [vmem:[%s1 + $0xdc] sm:$0xf]
      %v643 = vld [vmem:[%s1 + $0xe0] sm:$0xf]
      %v644 = vld [vmem:[%s1 + $0xe4] sm:$0xf]
      %v645 = vld [vmem:[%s1 + $0xe8] sm:$0xf]
      %v646 = vld [vmem:[%s1 + $0xec] sm:$0xf]
      %v647 = vld [vmem:[%s1 + $0xf0] sm:$0xf]
      %v648 = vld [vmem:[%s1 + $0xf4] sm:$0xf]
      %v649 = vld [vmem:[%s1 + $0xf8] sm:$0xf]
      %v650 = vld [vmem:[%s1 + $0xfc] sm:$0xf]
      %v651 = vld [vmem:[%s1 + $0x100] sm:$0xf]
      %v652 = vld [vmem:[%s1 + $0x104] sm:$0xf]
      %v653 = vld [vmem:[%s1 + $0x108] sm:$0xf]
      %v654 = vld [vmem:[%s1 + $0x10c] sm:$0xf]
      %v655 = vld [vmem:[%s1 + $0x110] sm:$0xf]
      %v656 = vld [vmem:[%s1 + $0x114] sm:$0xf]
      %v657 = vld [vmem:[%s1 + $0x118] sm:$0xf]
      %v658 = vld [vmem:[%s1 + $0x11c] sm:$0xf]
      %v659 = vld [vmem:[%s1 + $0x120] sm:$0xf]
      %v660 = vld [vmem:[%s1 + $0x124] sm:$0xf]
      %v661 = vld [vmem:[%s1 + $0x128] sm:$0xf]
      %v662 = vld [vmem:[%s1 + $0x12c] sm:$0xf]
      %v663 = vld [vmem:[%s1 + $0x130] sm:$0xf]
      %v664 = vld [vmem:[%s1 + $0x134] sm:$0xf]
      %v665 = vld [vmem:[%s1 + $0x138] sm:$0xf]
      %v666 = vld [vmem:[%s1 + $0x13c] sm:$0xf]
      %v667 = vld [vmem:[%s1 + $0x140] sm:$0xf]
      %v668 = vld [vmem:[%s1 + $0x144] sm:$0xf]
      %v669 = vld [vmem:[%s1 + $0x148] sm:$0xf]
      %v670 = vld [vmem:[%s1 + $0x14c] sm:$0xf]
      %v671 = vld [vmem:[%s1 + $0x150] sm:$0xf]
      %v672 = vld [vmem:[%s1 + $0x154] sm:$0xf]
      %v673 = vld [vmem:[%s1 + $0x158] sm:$0xf]
      %v674 = vld [vmem:[%s1 + $0x15c] sm:$0xf]
      %v675 = vld [vmem:[%s1 + $0x160] sm:$0xf]
      %v676 = vld [vmem:[%s1 + $0x164] sm:$0xf]
      %v677 = vld [vmem:[%s1 + $0x168] sm:$0xf]
      %v678 = vld [vmem:[%s1 + $0x16c] sm:$0xf]
      %v679 = vld [vmem:[%s1 + $0x170] sm:$0xf]
      %v680 = vld [vmem:[%s1 + $0x174] sm:$0xf]
      %v681 = vld [vmem:[%s1 + $0x178] sm:$0xf]
      %v682 = vld [vmem:[%s1 + $0x17c] sm:$0xf]
      %v683 = vld [vmem:[%s2] sm:$0x1]
      %v685 = vlaneseq
      %v686 = vshrl.u32 %v685, 7
      %v687 = vsub.s32 0, %v686
      %v688 = vrot.slane %v683, %v687
      %v786 = vunpack.c.l.b16 %v587
      %v787 = vunpack.c.l.b16 %v588
      %v788 = vunpack.c.l.b16 %v589
      %v789 = vunpack.c.l.b16 %v590
      %v790 = vunpack.c.l.b16 %v591
      %v791 = vunpack.c.l.b16 %v592
      %v792 = vunpack.c.l.b16 %v593
      %v793 = vunpack.c.l.b16 %v594
      %v794 = vunpack.c.l.b16 %v595
      %v795 = vunpack.c.l.b16 %v596
      %v796 = vunpack.c.l.b16 %v597
      %v797 = vunpack.c.l.b16 %v598
      %v798 = vunpack.c.l.b16 %v599
      %v799 = vunpack.c.l.b16 %v600
      %v800 = vunpack.c.l.b16 %v601
      %v801 = vunpack.c.l.b16 %v602
      %v802 = vunpack.c.l.b16 %v603
      %v803 = vunpack.c.l.b16 %v604
      %v804 = vunpack.c.l.b16 %v605
      %v805 = vunpack.c.l.b16 %v606
      %v806 = vunpack.c.l.b16 %v607
      %v807 = vunpack.c.l.b16 %v608
      %v808 = vunpack.c.l.b16 %v609
      %v809 = vunpack.c.l.b16 %v610
      %v810 = vunpack.c.l.b16 %v611
      %v811 = vunpack.c.l.b16 %v612
      %v812 = vunpack.c.l.b16 %v613
      %v813 = vunpack.c.l.b16 %v614
      %v814 = vunpack.c.l.b16 %v615
      %v815 = vunpack.c.l.b16 %v616
      %v816 = vunpack.c.l.b16 %v617
      %v817 = vunpack.c.l.b16 %v618
      %v818 = vunpack.c.l.b16 %v619
      %v819 = vunpack.c.l.b16 %v620
      %v820 = vunpack.c.l.b16 %v621
      %v821 = vunpack.c.l.b16 %v622
      %v822 = vunpack.c.l.b16 %v623
      %v823 = vunpack.c.l.b16 %v624
      %v824 = vunpack.c.l.b16 %v625
      %v825 = vunpack.c.l.b16 %v626
      %v826 = vunpack.c.l.b16 %v627
      %v827 = vunpack.c.l.b16 %v628
      %v828 = vunpack.c.l.b16 %v629
      %v829 = vunpack.c.l.b16 %v630
      %v830 = vunpack.c.l.b16 %v631
      %v831 = vunpack.c.l.b16 %v632
      %v832 = vunpack.c.l.b16 %v633
      %v833 = vunpack.c.l.b16 %v634
      %v834 = vunpack.c.l.b16 %v635
      %v835 = vunpack.c.l.b16 %v636
      %v836 = vunpack.c.l.b16 %v637
      %v837 = vunpack.c.l.b16 %v638
      %v838 = vunpack.c.l.b16 %v639
      %v839 = vunpack.c.l.b16 %v640
      %v840 = vunpack.c.l.b16 %v641
      %v841 = vunpack.c.l.b16 %v642
      %v842 = vunpack.c.l.b16 %v643
      %v843 = vunpack.c.l.b16 %v644
      %v844 = vunpack.c.l.b16 %v645
      %v845 = vunpack.c.l.b16 %v646
      %v846 = vunpack.c.l.b16 %v647
      %v847 = vunpack.c.l.b16 %v648
      %v848 = vunpack.c.l.b16 %v649
      %v849 = vunpack.c.l.b16 %v650
      %v850 = vunpack.c.l.b16 %v651
      %v851 = vunpack.c.l.b16 %v652
      %v852 = vunpack.c.l.b16 %v653
      %v853 = vunpack.c.l.b16 %v654
      %v854 = vunpack.c.l.b16 %v655
      %v855 = vunpack.c.l.b16 %v656
      %v856 = vunpack.c.l.b16 %v657
      %v857 = vunpack.c.l.b16 %v658
      %v858 = vunpack.c.l.b16 %v659
      %v859 = vunpack.c.l.b16 %v660
      %v860 = vunpack.c.l.b16 %v661
      %v861 = vunpack.c.l.b16 %v662
      %v862 = vunpack.c.l.b16 %v663
      %v863 = vunpack.c.l.b16 %v664
      %v864 = vunpack.c.l.b16 %v665
      %v865 = vunpack.c.l.b16 %v666
      %v866 = vunpack.c.l.b16 %v667
      %v867 = vunpack.c.l.b16 %v668
      %v868 = vunpack.c.l.b16 %v669
      %v869 = vunpack.c.l.b16 %v670
      %v870 = vunpack.c.l.b16 %v671
      %v871 = vunpack.c.l.b16 %v672
      %v872 = vunpack.c.l.b16 %v673
      %v873 = vunpack.c.l.b16 %v674
      %v874 = vunpack.c.l.b16 %v675
      %v875 = vunpack.c.l.b16 %v676
      %v876 = vunpack.c.l.b16 %v677
      %v877 = vunpack.c.l.b16 %v678
      %v878 = vunpack.c.l.b16 %v679
      %v879 = vunpack.c.l.b16 %v680
      %v880 = vunpack.c.l.b16 %v681
      %v881 = vunpack.c.l.b16 %v682
      %v882 = vpack.c.b16 %v787, %v786
      %v883 = vpack.c.b16 %v789, %v788
      %v884 = vpack.c.b16 %v791, %v790
      %v885 = vpack.c.b16 %v793, %v792
      %v886 = vpack.c.b16 %v795, %v794
      %v887 = vpack.c.b16 %v797, %v796
      %v888 = vpack.c.b16 %v799, %v798
      %v889 = vpack.c.b16 %v801, %v800
      %v890 = vpack.c.b16 %v803, %v802
      %v891 = vpack.c.b16 %v805, %v804
      %v892 = vpack.c.b16 %v807, %v806
      %v893 = vpack.c.b16 %v809, %v808
      %v894 = vpack.c.b16 %v811, %v810
      %v895 = vpack.c.b16 %v813, %v812
      %v896 = vpack.c.b16 %v815, %v814
      %v897 = vpack.c.b16 %v817, %v816
      %v898 = vpack.c.b16 %v819, %v818
      %v899 = vpack.c.b16 %v821, %v820
      %v900 = vpack.c.b16 %v823, %v822
      %v901 = vpack.c.b16 %v825, %v824
      %v902 = vpack.c.b16 %v827, %v826
      %v903 = vpack.c.b16 %v829, %v828
      %v904 = vpack.c.b16 %v831, %v830
      %v905 = vpack.c.b16 %v833, %v832
      %v906 = vpack.c.b16 %v835, %v834
      %v907 = vpack.c.b16 %v837, %v836
      %v908 = vpack.c.b16 %v839, %v838
      %v909 = vpack.c.b16 %v841, %v840
      %v910 = vpack.c.b16 %v843, %v842
      %v911 = vpack.c.b16 %v845, %v844
      %v912 = vpack.c.b16 %v847, %v846
      %v913 = vpack.c.b16 %v849, %v848
      %v914 = vpack.c.b16 %v851, %v850
      %v915 = vpack.c.b16 %v853, %v852
      %v916 = vpack.c.b16 %v855, %v854
      %v917 = vpack.c.b16 %v857, %v856
      %v918 = vpack.c.b16 %v859, %v858
      %v919 = vpack.c.b16 %v861, %v860
      %v920 = vpack.c.b16 %v863, %v862
      %v921 = vpack.c.b16 %v865, %v864
      %v922 = vpack.c.b16 %v867, %v866
      %v923 = vpack.c.b16 %v869, %v868
      %v924 = vpack.c.b16 %v871, %v870
      %v925 = vpack.c.b16 %v873, %v872
      %v926 = vpack.c.b16 %v875, %v874
      %v927 = vpack.c.b16 %v877, %v876
      %v928 = vpack.c.b16 %v879, %v878
      %v929 = vpack.c.b16 %v881, %v880
      %978 = vmatprep.subr.bf16.mxu0 0
      %979 = vmatpush1.bf16.msra.mxu0 %v882
      %980 = vmatprep.subr.bf16.mxu0 0
      %981 = vmatpush1.bf16.msra.mxu0 %v883
      %982 = vmatprep.subr.bf16.mxu0 0
      %983 = vmatpush1.bf16.msra.mxu0 %v884
      %984 = vmatprep.subr.bf16.mxu0 0
      %985 = vmatpush1.bf16.msra.mxu0 %v885
      %986 = vmatprep.subr.bf16.mxu0 0
      %987 = vmatpush1.bf16.msra.mxu0 %v886
      %988 = vmatprep.subr.bf16.mxu0 0
      %989 = vmatpush1.bf16.msra.mxu0 %v887
      %990 = vmatprep.subr.bf16.mxu0 0
      %991 = vmatpush1.bf16.msra.mxu0 %v888
      %992 = vmatprep.subr.bf16.mxu0 0
      %993 = vmatpush1.bf16.msra.mxu0 %v889
      %994 = vmatprep.subr.bf16.mxu0 0
      %995 = vmatpush1.bf16.msra.mxu0 %v890
      %996 = vmatprep.subr.bf16.mxu0 0
      %997 = vmatpush1.bf16.msra.mxu0 %v891
      %998 = vmatprep.subr.bf16.mxu0 0
      %999 = vmatpush1.bf16.msra.mxu0 %v892
      %1000 = vmatprep.subr.bf16.mxu0 0
      %1001 = vmatpush1.bf16.msra.mxu0 %v893
      %1002 = vmatprep.subr.bf16.mxu0 0
      %1003 = vmatpush1.bf16.msra.mxu0 %v894
      %1004 = vmatprep.subr.bf16.mxu0 0
      %1005 = vmatpush1.bf16.msra.mxu0 %v895
      %1006 = vmatprep.subr.bf16.mxu0 0
      %1007 = vmatpush1.bf16.msra.mxu0 %v896
      %1008 = vmatprep.subr.bf16.mxu0 0
      %1009 = vmatpush1.bf16.msra.mxu0 %v897
      %1010 = vmatprep.mubr.bf16.mxu0 %v582
      %1011 = vmatmul.mubr.bf16.gmra.mrb[0].mxu0 %v581
      %v1012 = vpop.f32.mrb[0].mxu0
      %v1013 = vadd.f32 %v688, %v1012
      %v1014 = vpop.f32.mrb[0].mxu0
      %v1015 = vpop.f32.mrb[0].mxu0
      %v1016 = vpop.f32.mrb[0].mxu0
      %1017 = vdwg.mxu0
      %1018 = vmatprep.subr.bf16.mxu0 0
      %1019 = vmatpush1.bf16.msra.mxu0 %v898
      %1020 = vmatprep.subr.bf16.mxu0 0
      %1021 = vmatpush1.bf16.msra.mxu0 %v899
      %1022 = vmatprep.subr.bf16.mxu0 0
      %1023 = vmatpush1.bf16.msra.mxu0 %v900
      %1024 = vmatprep.subr.bf16.mxu0 0
      %1025 = vmatpush1.bf16.msra.mxu0 %v901
      %1026 = vmatprep.subr.bf16.mxu0 0
      %1027 = vmatpush1.bf16.msra.mxu0 %v902
      %1028 = vmatprep.subr.bf16.mxu0 0
      %1029 = vmatpush1.bf16.msra.mxu0 %v903
      %1030 = vmatprep.subr.bf16.mxu0 0
      %1031 = vmatpush1.bf16.msra.mxu0 %v904
      %1032 = vmatprep.subr.bf16.mxu0 0
      %1033 = vmatpush1.bf16.msra.mxu0 %v905
      %1034 = vmatprep.subr.bf16.mxu0 0
      %1035 = vmatpush1.bf16.msra.mxu0 %v906
      %1036 = vmatprep.subr.bf16.mxu0 0
      %1037 = vmatpush1.bf16.msra.mxu0 %v907
      %1038 = vmatprep.subr.bf16.mxu0 0
      %1039 = vmatpush1.bf16.msra.mxu0 %v908
      %1040 = vmatprep.subr.bf16.mxu0 0
      %1041 = vmatpush1.bf16.msra.mxu0 %v909
      %1042 = vmatprep.subr.bf16.mxu0 0
      %1043 = vmatpush1.bf16.msra.mxu0 %v910
      %1044 = vmatprep.subr.bf16.mxu0 0
      %1045 = vmatpush1.bf16.msra.mxu0 %v911
      %1046 = vmatprep.subr.bf16.mxu0 0
      %1047 = vmatpush1.bf16.msra.mxu0 %v912
      %1048 = vmatprep.subr.bf16.mxu0 0
      %1049 = vmatpush1.bf16.msra.mxu0 %v913
      %1050 = vmatprep.mubr.bf16.mxu0 %v584
      %1051 = vmatmul.mubr.bf16.gmra.mrb[0].mxu0 %v583
      %v1052 = vpop.f32.mrb[0].mxu0
      %v1053 = vadd.f32 %v1013, %v1052
      %v1054 = vpop.f32.mrb[0].mxu0
      %v1055 = vpop.f32.mrb[0].mxu0
      %v1056 = vpop.f32.mrb[0].mxu0
      %1057 = vdwg.mxu0
      %1058 = vmatprep.subr.bf16.mxu0 0
      %1059 = vmatpush1.bf16.msra.mxu0 %v914
      %1060 = vmatprep.subr.bf16.mxu0 0
      %1061 = vmatpush1.bf16.msra.mxu0 %v915
      %1062 = vmatprep.subr.bf16.mxu0 0
      %1063 = vmatpush1.bf16.msra.mxu0 %v916
      %1064 = vmatprep.subr.bf16.mxu0 0
      %1065 = vmatpush1.bf16.msra.mxu0 %v917
      %1066 = vmatprep.subr.bf16.mxu0 0
      %1067 = vmatpush1.bf16.msra.mxu0 %v918
      %1068 = vmatprep.subr.bf16.mxu0 0
      %1069 = vmatpush1.bf16.msra.mxu0 %v919
      %1070 = vmatprep.subr.bf16.mxu0 0
      %1071 = vmatpush1.bf16.msra.mxu0 %v920
      %1072 = vmatprep.subr.bf16.mxu0 0
      %1073 = vmatpush1.bf16.msra.mxu0 %v921
      %1074 = vmatprep.subr.bf16.mxu0 0
      %1075 = vmatpush1.bf16.msra.mxu0 %v922
      %1076 = vmatprep.subr.bf16.mxu0 0
      %1077 = vmatpush1.bf16.msra.mxu0 %v923
      %1078 = vmatprep.subr.bf16.mxu0 0
      %1079 = vmatpush1.bf16.msra.mxu0 %v924
      %1080 = vmatprep.subr.bf16.mxu0 0
      %1081 = vmatpush1.bf16.msra.mxu0 %v925
      %1082 = vmatprep.subr.bf16.mxu0 0
      %1083 = vmatpush1.bf16.msra.mxu0 %v926
      %1084 = vmatprep.subr.bf16.mxu0 0
      %1085 = vmatpush1.bf16.msra.mxu0 %v927
      %1086 = vmatprep.subr.bf16.mxu0 0
      %1087 = vmatpush1.bf16.msra.mxu0 %v928
      %1088 = vmatprep.subr.bf16.mxu0 0
      %1089 = vmatpush1.bf16.msra.mxu0 %v929
      %1090 = vmatprep.mubr.bf16.mxu0 %v586
      %1091 = vmatmul.mubr.bf16.gmra.mrb[0].mxu0 %v585
      %v1092 = vpop.f32.mrb[0].mxu0
      %v1093 = vadd.f32 %v1053, %v1092
      %v1094 = vpop.f32.mrb[0].mxu0
      %v1095 = vpop.f32.mrb[0].mxu0
      %v1096 = vpop.f32.mrb[0].mxu0
      %1097 = vdwg.mxu0
      %v1098 = vld [vmem:[%s4] sm:$0xff]
      %1100 = vset.pattern.permute.xlu0 0
      %1101 = vperm.xlu0 %1100, %v1098
      %v1102 = vpop.permute.xlu0 %1101
      %v1104 = vmul.f32 %v1093, %v1102
      %v1105 = vld [vmem:[%s3] sm:$0xff]
      %v1106 = vadd.f32 %v1104, %v1105
      %v1107 = vlaneseq
      %v1108 = vand.u32 %v1107, 127
      %vm1109 = vcmp.lt.s32.totalorder %v1108, 5
      %v1110 = vsel %vm1109, 0.0, -1e+30
      %v1111 = vld [vmem:[%s5] sm:$0x1]
      %v1112 = vld [vmem:[%s6] sm:$0x1]
      %vm1113 = vcmask 523264
      %v1114 = vsel %vm1113, %v1106, 0.0
      %1115 = vadd.xlane.f32.xlu0 %v1114
      %v1116 = vpop.xlane.xlu0 %1115
      %v1117 = vrcp.pop 64.0
      %v1118 = vmul.f32 %v1116, %v1117
      %v1119 = vsub.f32 %v1106, %v1118
      %v1120 = vmul.f32 %v1119, %v1119
      %v1121 = vsel %vm1113, %v1120, 0.0
      %1122 = vadd.xlane.f32.xlu0 %v1121
      %v1123 = vpop.xlane.xlu0 %1122
      %v1124 = vmul.f32 %v1123, %v1117
      %v1125 = vadd.f32 %v1124, 1e-05
      %v1126 = vrsqrt.pop %v1125
      %v1127 = vmul.f32 %v1119, %v1126
      %v1129 = vlaneseq
      %v1130 = vshrl.u32 %v1129, 7
      %v1131 = vsub.s32 0, %v1130
      %v1132 = vrot.slane %v1111, %v1131
      %v1134 = vmul.f32 %v1127, %v1132
      %v1136 = vlaneseq
      %v1137 = vshrl.u32 %v1136, 7
      %v1138 = vsub.s32 0, %v1137
      %v1139 = vrot.slane %v1112, %v1138
      %v1141 = vadd.f32 %v1134, %v1139
      %v1142 = vpack.c.bf16 %v1141, %v1141
      %v1143 = vld [vmem:[%s7] sm:$0xff]
      %v1144 = vld [vmem:[%s7 + $0x8] sm:$0xff]
      %v1145 = vld [vmem:[%s7 + $0x10] sm:$0xff]
      %v1146 = vld [vmem:[%s7 + $0x18] sm:$0xff]
      %v1147 = vld [vmem:[%s7 + $0x20] sm:$0xff]
      %v1148 = vld [vmem:[%s7 + $0x28] sm:$0xff]
      %v1149 = vld [vmem:[%s7 + $0x30] sm:$0xff]
      %v1150 = vld [vmem:[%s7 + $0x38] sm:$0xff]
      %v1159 = vunpack.c.l.b16 %v1143
      %v1160 = vunpack.c.h.b16 %v1143
      %v1161 = vunpack.c.l.b16 %v1144
      %v1162 = vunpack.c.h.b16 %v1144
      %v1163 = vunpack.c.l.b16 %v1145
      %v1164 = vunpack.c.h.b16 %v1145
      %v1165 = vunpack.c.l.b16 %v1146
      %v1166 = vunpack.c.h.b16 %v1146
      %v1167 = vunpack.c.l.b16 %v1147
      %v1168 = vunpack.c.h.b16 %v1147
      %v1169 = vunpack.c.l.b16 %v1148
      %v1170 = vunpack.c.h.b16 %v1148
      %v1171 = vunpack.c.l.b16 %v1149
      %v1172 = vunpack.c.h.b16 %v1149
      %v1173 = vunpack.c.l.b16 %v1150
      %v1174 = vunpack.c.h.b16 %v1150
      %v1175 = vpack.c.b16 %v1161, %v1159
      %v1176 = vpack.c.b16 %v1162, %v1160
      %v1177 = vpack.c.b16 %v1165, %v1163
      %v1178 = vpack.c.b16 %v1166, %v1164
      %v1179 = vpack.c.b16 %v1169, %v1167
      %v1180 = vpack.c.b16 %v1170, %v1168
      %v1181 = vpack.c.b16 %v1173, %v1171
      %v1182 = vpack.c.b16 %v1174, %v1172
      %v1192 = vsel %vm1113, %v1142, 0
      %1194 = vmatprep.subr.bf16.mxu0 %v1176
      %1195 = vmatpush1.bf16.msra.mxu0 %v1175
      %1196 = vmatprep.subr.bf16.mxu0 %v1178
      %1197 = vmatpush1.bf16.msra.mxu0 %v1177
      %1198 = vmatprep.subr.bf16.mxu0 %v1180
      %1199 = vmatpush1.bf16.msra.mxu0 %v1179
      %1200 = vmatprep.subr.bf16.mxu0 %v1182
      %1201 = vmatpush1.bf16.msra.mxu0 %v1181
      %1202 = vmatprep.subr.bf16.mxu0 0
      %1203 = vmatpush1.bf16.msra.mxu0 0
      %1204 = vmatprep.subr.bf16.mxu0 0
      %1205 = vmatpush1.bf16.msra.mxu0 0
      %1206 = vmatprep.subr.bf16.mxu0 0
      %1207 = vmatpush1.bf16.msra.mxu0 0
      %1208 = vmatprep.subr.bf16.mxu0 0
      %1209 = vmatpush1.bf16.msra.mxu0 0
      %1210 = vmatprep.subr.bf16.mxu0 0
      %1211 = vmatpush1.bf16.msra.mxu0 0
      %1212 = vmatprep.subr.bf16.mxu0 0
      %1213 = vmatpush1.bf16.msra.mxu0 0
      %1214 = vmatprep.subr.bf16.mxu0 0
      %1215 = vmatpush1.bf16.msra.mxu0 0
      %1216 = vmatprep.subr.bf16.mxu0 0
      %1217 = vmatpush1.bf16.msra.mxu0 0
      %1218 = vmatprep.subr.bf16.mxu0 0
      %1219 = vmatpush1.bf16.msra.mxu0 0
      %1220 = vmatprep.subr.bf16.mxu0 0
      %1221 = vmatpush1.bf16.msra.mxu0 0
      %1222 = vmatprep.subr.bf16.mxu0 0
      %1223 = vmatpush1.bf16.msra.mxu0 0
      %1224 = vmatprep.subr.bf16.mxu0 0
      %1225 = vmatpush1.bf16.msra.mxu0 0
      %1226 = vmatprep.mubr.bf16.mxu0 0
      %1227 = vmatmul.mubr.bf16.gmra.mrb[0].mxu0 %v1192
      %v1228 = vpop.f32.mrb[0].mxu0
      %v1229 = vadd.f32 0.0, %v1228
      %v1230 = vpop.f32.mrb[0].mxu0
      %v1231 = vadd.f32 0.0, %v1230
      %v1232 = vpop.f32.mrb[0].mxu0
      %v1233 = vpop.f32.mrb[0].mxu0
      %1234 = vdwg.mxu0
      %1236 = vrot.lane.b32.xlu0 %v1229, 64
      %v1237 = vpop.permute.xlu0 %1236
      %vm1238 = vcmask 130048
      %v1239 = vsel %vm1238, %v1229, 0
      %v1241 = vsel %vm1238, %v1237, 0
      %1243 = vmatprep.subr.mxu0 0.0
      %1244 = vmatpush1.xpose.msra.mxu0 %v1241
      %1245 = vmatprep.subr.mxu0 0.0
      %1246 = vmatpush1.xpose.msra.mxu0 0.0
      %1247 = vmatprep.subr.mxu0 0.0
      %1248 = vmatpush1.xpose.msra.mxu0 0.0
      %1249 = vmatprep.subr.mxu0 0.0
      %1250 = vmatpush1.xpose.msra.mxu0 0.0
      %1251 = vmatprep.subr.mxu0 0.0
      %1252 = vmatpush1.xpose.msra.mxu0 0.0
      %1253 = vmatprep.subr.mxu0 0.0
      %1254 = vmatpush1.xpose.msra.mxu0 0.0
      %1255 = vmatprep.subr.mxu0 0.0
      %1256 = vmatpush1.xpose.msra.mxu0 0.0
      %1257 = vmatprep.subr.mxu0 0.0
      %1258 = vmatpush1.xpose.msra.mxu0 0.0
      %1259 = vmatprep.subr.mxu0 0.0
      %1260 = vmatpush1.xpose.msra.mxu0 0.0
      %1261 = vmatprep.subr.mxu0 0.0
      %1262 = vmatpush1.xpose.msra.mxu0 0.0
      %1263 = vmatprep.subr.mxu0 0.0
      %1264 = vmatpush1.xpose.msra.mxu0 0.0
      %1265 = vmatprep.subr.mxu0 0.0
      %1266 = vmatpush1.xpose.msra.mxu0 0.0
      %1267 = vmatprep.subr.mxu0 0.0
      %1268 = vmatpush1.xpose.msra.mxu0 0.0
      %1269 = vmatprep.subr.mxu0 0.0
      %1270 = vmatpush1.xpose.msra.mxu0 0.0
      %1271 = vmatprep.subr.mxu0 0.0
      %1272 = vmatpush1.xpose.msra.mxu0 0.0
      %1273 = vmatprep.subr.mxu0 0.0
      %1274 = vmatpush1.xpose.msra.mxu0 0.0
      %1275 = vmatprep.subr.mxu0 0.0
      %1276 = vmatpush1.xpose.msra.mxu0 0.0
      %1277 = vmatprep.subr.mxu0 0.0
      %1278 = vmatpush1.xpose.msra.mxu0 0.0
      %1279 = vmatprep.subr.mxu0 0.0
      %1280 = vmatpush1.xpose.msra.mxu0 0.0
      %1281 = vmatprep.subr.mxu0 0.0
      %1282 = vmatpush1.xpose.msra.mxu0 0.0
      %1283 = vmatprep.subr.mxu0 0.0
      %1284 = vmatpush1.xpose.msra.mxu0 0.0
      %1285 = vmatprep.subr.mxu0 0.0
      %1286 = vmatpush1.xpose.msra.mxu0 0.0
      %1287 = vmatprep.subr.mxu0 0.0
      %1288 = vmatpush1.xpose.msra.mxu0 0.0
      %1289 = vmatprep.subr.mxu0 0.0
      %1290 = vmatpush1.xpose.msra.mxu0 0.0
      %1291 = vmatprep.subr.mxu0 0.0
      %1292 = vmatpush1.xpose.msra.mxu0 0.0
      %1293 = vmatprep.subr.mxu0 0.0
      %1294 = vmatpush1.xpose.msra.mxu0 0.0
      %1295 = vmatprep.subr.mxu0 0.0
      %1296 = vmatpush1.xpose.msra.mxu0 0.0
      %1297 = vmatprep.subr.mxu0 0.0
      %1298 = vmatpush1.xpose.msra.mxu0 0.0
      %1299 = vmatprep.subr.mxu0 0.0
      %1300 = vmatpush1.xpose.msra.mxu0 0.0
      %1301 = vmatprep.subr.mxu0 0.0
      %1302 = vmatpush1.xpose.msra.mxu0 0.0
      %1303 = vmatprep.subr.mxu0 0.0
      %1304 = vmatpush1.xpose.msra.mxu0 0.0
      %1305 = vmatprep.subr.mxu0 0.0
      %1306 = vmatpush1.xpose.msra.mxu0 0.0
      %1307 = vmatprep.mubr.f32.mxu0 0.0
      %1308 = vmatmul.mubr.f32.gmra.mrb[0].mxu0 %v1239
      %v1309 = vpop.f32.mrb[0].mxu0
      %v1310 = vadd.f32 0.0, %v1309
      %v1311 = vpop.f32.mrb[0].mxu0
      %1312 = vdwg.mxu0
      %v1313 = vmul.f32 %v1310, 0.25
      %v1314 = vadd.f32 %v1313, %v1110
      %vm1315 = vcmask 64512
      %v1316 = vsel %vm1315, %v1314, -inf
      %1317 = vmax.xlane.f32.xlu0 %v1316
      %v1318 = vpop.xlane.xlu0 %1317
      %v1319 = vsub.f32 %v1314, %v1318
      %v1320 = vmul.f32 %v1319, 1.442695
      %v1321 = vpow.pop %v1320
      %v1322 = vsel %vm1315, %v1321, 0.0
      %1323 = vadd.xlane.f32.xlu0 %v1322
      %v1324 = vpop.xlane.xlu0 %1323
      %v1325 = vrcp.pop %v1324
      %v1326 = vmul.f32 %v1321, %v1325
      %v1328 = vsel %vm1315, %v1326, 0
      %1330 = vmatprep.subr.mxu0 0.0
      %1331 = vmatpush1.msra.mxu0 %v1231
      %1332 = vmatprep.subr.mxu0 0.0
      %1333 = vmatpush1.msra.mxu0 0.0
      %1334 = vmatprep.subr.mxu0 0.0
      %1335 = vmatpush1.msra.mxu0 0.0
      %1336 = vmatprep.subr.mxu0 0.0
      %1337 = vmatpush1.msra.mxu0 0.0
      %1338 = vmatprep.subr.mxu0 0.0
      %1339 = vmatpush1.msra.mxu0 0.0
      %1340 = vmatprep.subr.mxu0 0.0
      %1341 = vmatpush1.msra.mxu0 0.0
      %1342 = vmatprep.subr.mxu0 0.0
      %1343 = vmatpush1.msra.mxu0 0.0
      %1344 = vmatprep.subr.mxu0 0.0
      %1345 = vmatpush1.msra.mxu0 0.0
      %1346 = vmatprep.subr.mxu0 0.0
      %1347 = vmatpush1.msra.mxu0 0.0
      %1348 = vmatprep.subr.mxu0 0.0
      %1349 = vmatpush1.msra.mxu0 0.0
      %1350 = vmatprep.subr.mxu0 0.0
      %1351 = vmatpush1.msra.mxu0 0.0
      %1352 = vmatprep.subr.mxu0 0.0
      %1353 = vmatpush1.msra.mxu0 0.0
      %1354 = vmatprep.subr.mxu0 0.0
      %1355 = vmatpush1.msra.mxu0 0.0
      %1356 = vmatprep.subr.mxu0 0.0
      %1357 = vmatpush1.msra.mxu0 0.0
      %1358 = vmatprep.subr.mxu0 0.0
      %1359 = vmatpush1.msra.mxu0 0.0
      %1360 = vmatprep.subr.mxu0 0.0
      %1361 = vmatpush1.msra.mxu0 0.0
      %1362 = vmatprep.subr.mxu0 0.0
      %1363 = vmatpush1.msra.mxu0 0.0
      %1364 = vmatprep.subr.mxu0 0.0
      %1365 = vmatpush1.msra.mxu0 0.0
      %1366 = vmatprep.subr.mxu0 0.0
      %1367 = vmatpush1.msra.mxu0 0.0
      %1368 = vmatprep.subr.mxu0 0.0
      %1369 = vmatpush1.msra.mxu0 0.0
      %1370 = vmatprep.subr.mxu0 0.0
      %1371 = vmatpush1.msra.mxu0 0.0
      %1372 = vmatprep.subr.mxu0 0.0
      %1373 = vmatpush1.msra.mxu0 0.0
      %1374 = vmatprep.subr.mxu0 0.0
      %1375 = vmatpush1.msra.mxu0 0.0
      %1376 = vmatprep.subr.mxu0 0.0
      %1377 = vmatpush1.msra.mxu0 0.0
      %1378 = vmatprep.subr.mxu0 0.0
      %1379 = vmatpush1.msra.mxu0 0.0
      %1380 = vmatprep.subr.mxu0 0.0
      %1381 = vmatpush1.msra.mxu0 0.0
      %1382 = vmatprep.subr.mxu0 0.0
      %1383 = vmatpush1.msra.mxu0 0.0
      %1384 = vmatprep.subr.mxu0 0.0
      %1385 = vmatpush1.msra.mxu0 0.0
      %1386 = vmatprep.subr.mxu0 0.0
      %1387 = vmatpush1.msra.mxu0 0.0
      %1388 = vmatprep.subr.mxu0 0.0
      %1389 = vmatpush1.msra.mxu0 0.0
      %1390 = vmatprep.subr.mxu0 0.0
      %1391 = vmatpush1.msra.mxu0 0.0
      %1392 = vmatprep.subr.mxu0 0.0
      %1393 = vmatpush1.msra.mxu0 0.0
      %1394 = vmatprep.mubr.f32.mxu0 0.0
      %1395 = vmatmul.mubr.f32.gmra.mrb[0].mxu0 %v1328
      %v1396 = vpop.f32.mrb[0].mxu0
      %v1397 = vadd.f32 0.0, %v1396
      %v1398 = vpop.f32.mrb[0].mxu0
      %1399 = vdwg.mxu0
      %1400 = vrot.lane.b32.xlu0 %v1229, 112
      %v1401 = vpop.permute.xlu0 %1400
      %1402 = vrot.lane.b32.xlu0 %v1229, 48
      %v1403 = vpop.permute.xlu0 %1402
      %v1404 = vsel %vm1238, %v1401, 0
      %v1406 = vsel %vm1238, %v1403, 0
      %1408 = vmatprep.subr.mxu0 0.0
      %1409 = vmatpush1.xpose.msra.mxu0 %v1406
      %1410 = vmatprep.subr.mxu0 0.0
      %1411 = vmatpush1.xpose.msra.mxu0 0.0
      %1412 = vmatprep.subr.mxu0 0.0
      %1413 = vmatpush1.xpose.msra.mxu0 0.0
      %1414 = vmatprep.subr.mxu0 0.0
      %1415 = vmatpush1.xpose.msra.mxu0 0.0
      %1416 = vmatprep.subr.mxu0 0.0
      %1417 = vmatpush1.xpose.msra.mxu0 0.0
      %1418 = vmatprep.subr.mxu0 0.0
      %1419 = vmatpush1.xpose.msra.mxu0 0.0
      %1420 = vmatprep.subr.mxu0 0.0
      %1421 = vmatpush1.xpose.msra.mxu0 0.0
      %1422 = vmatprep.subr.mxu0 0.0
      %1423 = vmatpush1.xpose.msra.mxu0 0.0
      %1424 = vmatprep.subr.mxu0 0.0
      %1425 = vmatpush1.xpose.msra.mxu0 0.0
      %1426 = vmatprep.subr.mxu0 0.0
      %1427 = vmatpush1.xpose.msra.mxu0 0.0
      %1428 = vmatprep.subr.mxu0 0.0
      %1429 = vmatpush1.xpose.msra.mxu0 0.0
      %1430 = vmatprep.subr.mxu0 0.0
      %1431 = vmatpush1.xpose.msra.mxu0 0.0
      %1432 = vmatprep.subr.mxu0 0.0
      %1433 = vmatpush1.xpose.msra.mxu0 0.0
      %1434 = vmatprep.subr.mxu0 0.0
      %1435 = vmatpush1.xpose.msra.mxu0 0.0
      %1436 = vmatprep.subr.mxu0 0.0
      %1437 = vmatpush1.xpose.msra.mxu0 0.0
      %1438 = vmatprep.subr.mxu0 0.0
      %1439 = vmatpush1.xpose.msra.mxu0 0.0
      %1440 = vmatprep.subr.mxu0 0.0
      %1441 = vmatpush1.xpose.msra.mxu0 0.0
      %1442 = vmatprep.subr.mxu0 0.0
      %1443 = vmatpush1.xpose.msra.mxu0 0.0
      %1444 = vmatprep.subr.mxu0 0.0
      %1445 = vmatpush1.xpose.msra.mxu0 0.0
      %1446 = vmatprep.subr.mxu0 0.0
      %1447 = vmatpush1.xpose.msra.mxu0 0.0
      %1448 = vmatprep.subr.mxu0 0.0
      %1449 = vmatpush1.xpose.msra.mxu0 0.0
      %1450 = vmatprep.subr.mxu0 0.0
      %1451 = vmatpush1.xpose.msra.mxu0 0.0
      %1452 = vmatprep.subr.mxu0 0.0
      %1453 = vmatpush1.xpose.msra.mxu0 0.0
      %1454 = vmatprep.subr.mxu0 0.0
      %1455 = vmatpush1.xpose.msra.mxu0 0.0
      %1456 = vmatprep.subr.mxu0 0.0
      %1457 = vmatpush1.xpose.msra.mxu0 0.0
      %1458 = vmatprep.subr.mxu0 0.0
      %1459 = vmatpush1.xpose.msra.mxu0 0.0
      %1460 = vmatprep.subr.mxu0 0.0
      %1461 = vmatpush1.xpose.msra.mxu0 0.0
      %1462 = vmatprep.subr.mxu0 0.0
      %1463 = vmatpush1.xpose.msra.mxu0 0.0
      %1464 = vmatprep.subr.mxu0 0.0
      %1465 = vmatpush1.xpose.msra.mxu0 0.0
      %1466 = vmatprep.subr.mxu0 0.0
      %1467 = vmatpush1.xpose.msra.mxu0 0.0
      %1468 = vmatprep.subr.mxu0 0.0
      %1469 = vmatpush1.xpose.msra.mxu0 0.0
      %1470 = vmatprep.subr.mxu0 0.0
      %1471 = vmatpush1.xpose.msra.mxu0 0.0
      %1472 = vmatprep.mubr.f32.mxu0 0.0
      %1473 = vmatmul.mubr.f32.gmra.mrb[0].mxu0 %v1404
      %v1474 = vpop.f32.mrb[0].mxu0
      %v1475 = vadd.f32 0.0, %v1474
      %v1476 = vpop.f32.mrb[0].mxu0
      %1477 = vdwg.mxu0
      %v1478 = vmul.f32 %v1475, 0.25
      %v1479 = vadd.f32 %v1478, %v1110
      %v1480 = vsel %vm1315, %v1479, -inf
      %1481 = vmax.xlane.f32.xlu0 %v1480
      %v1482 = vpop.xlane.xlu0 %1481
      %v1483 = vsub.f32 %v1479, %v1482
      %v1484 = vmul.f32 %v1483, 1.442695
      %v1485 = vpow.pop %v1484
      %v1486 = vsel %vm1315, %v1485, 0.0
      %1487 = vadd.xlane.f32.xlu0 %v1486
      %v1488 = vpop.xlane.xlu0 %1487
      %v1489 = vrcp.pop %v1488
      %v1490 = vmul.f32 %v1485, %v1489
      %1492 = vrot.lane.b32.xlu0 %v1231, 112
      %v1493 = vpop.permute.xlu0 %1492
      %v1496 = vsel %vm1315, %v1490, 0
      %1498 = vmatprep.subr.mxu0 0.0
      %1499 = vmatpush1.msra.mxu0 %v1493
      %1500 = vmatprep.subr.mxu0 0.0
      %1501 = vmatpush1.msra.mxu0 0.0
      %1502 = vmatprep.subr.mxu0 0.0
      %1503 = vmatpush1.msra.mxu0 0.0
      %1504 = vmatprep.subr.mxu0 0.0
      %1505 = vmatpush1.msra.mxu0 0.0
      %1506 = vmatprep.subr.mxu0 0.0
      %1507 = vmatpush1.msra.mxu0 0.0
      %1508 = vmatprep.subr.mxu0 0.0
      %1509 = vmatpush1.msra.mxu0 0.0
      %1510 = vmatprep.subr.mxu0 0.0
      %1511 = vmatpush1.msra.mxu0 0.0
      %1512 = vmatprep.subr.mxu0 0.0
      %1513 = vmatpush1.msra.mxu0 0.0
      %1514 = vmatprep.subr.mxu0 0.0
      %1515 = vmatpush1.msra.mxu0 0.0
      %1516 = vmatprep.subr.mxu0 0.0
      %1517 = vmatpush1.msra.mxu0 0.0
      %1518 = vmatprep.subr.mxu0 0.0
      %1519 = vmatpush1.msra.mxu0 0.0
      %1520 = vmatprep.subr.mxu0 0.0
      %1521 = vmatpush1.msra.mxu0 0.0
      %1522 = vmatprep.subr.mxu0 0.0
      %1523 = vmatpush1.msra.mxu0 0.0
      %1524 = vmatprep.subr.mxu0 0.0
      %1525 = vmatpush1.msra.mxu0 0.0
      %1526 = vmatprep.subr.mxu0 0.0
      %1527 = vmatpush1.msra.mxu0 0.0
      %1528 = vmatprep.subr.mxu0 0.0
      %1529 = vmatpush1.msra.mxu0 0.0
      %1530 = vmatprep.subr.mxu0 0.0
      %1531 = vmatpush1.msra.mxu0 0.0
      %1532 = vmatprep.subr.mxu0 0.0
      %1533 = vmatpush1.msra.mxu0 0.0
      %1534 = vmatprep.subr.mxu0 0.0
      %1535 = vmatpush1.msra.mxu0 0.0
      %1536 = vmatprep.subr.mxu0 0.0
      %1537 = vmatpush1.msra.mxu0 0.0
      %1538 = vmatprep.subr.mxu0 0.0
      %1539 = vmatpush1.msra.mxu0 0.0
      %1540 = vmatprep.subr.mxu0 0.0
      %1541 = vmatpush1.msra.mxu0 0.0
      %1542 = vmatprep.subr.mxu0 0.0
      %1543 = vmatpush1.msra.mxu0 0.0
      %1544 = vmatprep.subr.mxu0 0.0
      %1545 = vmatpush1.msra.mxu0 0.0
      %1546 = vmatprep.subr.mxu0 0.0
      %1547 = vmatpush1.msra.mxu0 0.0
      %1548 = vmatprep.subr.mxu0 0.0
      %1549 = vmatpush1.msra.mxu0 0.0
      %1550 = vmatprep.subr.mxu0 0.0
      %1551 = vmatpush1.msra.mxu0 0.0
      %1552 = vmatprep.subr.mxu0 0.0
      %1553 = vmatpush1.msra.mxu0 0.0
      %1554 = vmatprep.subr.mxu0 0.0
      %1555 = vmatpush1.msra.mxu0 0.0
      %1556 = vmatprep.subr.mxu0 0.0
      %1557 = vmatpush1.msra.mxu0 0.0
      %1558 = vmatprep.subr.mxu0 0.0
      %1559 = vmatpush1.msra.mxu0 0.0
      %1560 = vmatprep.subr.mxu0 0.0
      %1561 = vmatpush1.msra.mxu0 0.0
      %1562 = vmatprep.mubr.f32.mxu0 0.0
      %1563 = vmatmul.mubr.f32.gmra.mrb[0].mxu0 %v1496
      %v1564 = vpop.f32.mrb[0].mxu0
      %v1565 = vadd.f32 0.0, %v1564
      %v1566 = vpop.f32.mrb[0].mxu0
      %1567 = vdwg.mxu0
      %1568 = vrot.lane.b32.xlu0 %v1229, 96
      %v1569 = vpop.permute.xlu0 %1568
      %1570 = vrot.lane.b32.xlu0 %v1229, 32
      %v1571 = vpop.permute.xlu0 %1570
      %v1572 = vsel %vm1238, %v1569, 0
      %v1574 = vsel %vm1238, %v1571, 0
      %1576 = vmatprep.subr.mxu0 0.0
      %1577 = vmatpush1.xpose.msra.mxu0 %v1574
      %1578 = vmatprep.subr.mxu0 0.0
      %1579 = vmatpush1.xpose.msra.mxu0 0.0
      %1580 = vmatprep.subr.mxu0 0.0
      %1581 = vmatpush1.xpose.msra.mxu0 0.0
      %1582 = vmatprep.subr.mxu0 0.0
      %1583 = vmatpush1.xpose.msra.mxu0 0.0
      %1584 = vmatprep.subr.mxu0 0.0
      %1585 = vmatpush1.xpose.msra.mxu0 0.0
      %1586 = vmatprep.subr.mxu0 0.0
      %1587 = vmatpush1.xpose.msra.mxu0 0.0
      %1588 = vmatprep.subr.mxu0 0.0
      %1589 = vmatpush1.xpose.msra.mxu0 0.0
      %1590 = vmatprep.subr.mxu0 0.0
      %1591 = vmatpush1.xpose.msra.mxu0 0.0
      %1592 = vmatprep.subr.mxu0 0.0
      %1593 = vmatpush1.xpose.msra.mxu0 0.0
      %1594 = vmatprep.subr.mxu0 0.0
      %1595 = vmatpush1.xpose.msra.mxu0 0.0
      %1596 = vmatprep.subr.mxu0 0.0
      %1597 = vmatpush1.xpose.msra.mxu0 0.0
      %1598 = vmatprep.subr.mxu0 0.0
      %1599 = vmatpush1.xpose.msra.mxu0 0.0
      %1600 = vmatprep.subr.mxu0 0.0
      %1601 = vmatpush1.xpose.msra.mxu0 0.0
      %1602 = vmatprep.subr.mxu0 0.0
      %1603 = vmatpush1.xpose.msra.mxu0 0.0
      %1604 = vmatprep.subr.mxu0 0.0
      %1605 = vmatpush1.xpose.msra.mxu0 0.0
      %1606 = vmatprep.subr.mxu0 0.0
      %1607 = vmatpush1.xpose.msra.mxu0 0.0
      %1608 = vmatprep.subr.mxu0 0.0
      %1609 = vmatpush1.xpose.msra.mxu0 0.0
      %1610 = vmatprep.subr.mxu0 0.0
      %1611 = vmatpush1.xpose.msra.mxu0 0.0
      %1612 = vmatprep.subr.mxu0 0.0
      %1613 = vmatpush1.xpose.msra.mxu0 0.0
      %1614 = vmatprep.subr.mxu0 0.0
      %1615 = vmatpush1.xpose.msra.mxu0 0.0
      %1616 = vmatprep.subr.mxu0 0.0
      %1617 = vmatpush1.xpose.msra.mxu0 0.0
      %1618 = vmatprep.subr.mxu0 0.0
      %1619 = vmatpush1.xpose.msra.mxu0 0.0
      %1620 = vmatprep.subr.mxu0 0.0
      %1621 = vmatpush1.xpose.msra.mxu0 0.0
      %1622 = vmatprep.subr.mxu0 0.0
      %1623 = vmatpush1.xpose.msra.mxu0 0.0
      %1624 = vmatprep.subr.mxu0 0.0
      %1625 = vmatpush1.xpose.msra.mxu0 0.0
      %1626 = vmatprep.subr.mxu0 0.0
      %1627 = vmatpush1.xpose.msra.mxu0 0.0
      %1628 = vmatprep.subr.mxu0 0.0
      %1629 = vmatpush1.xpose.msra.mxu0 0.0
      %1630 = vmatprep.subr.mxu0 0.0
      %1631 = vmatpush1.xpose.msra.mxu0 0.0
      %1632 = vmatprep.subr.mxu0 0.0
      %1633 = vmatpush1.xpose.msra.mxu0 0.0
      %1634 = vmatprep.subr.mxu0 0.0
      %1635 = vmatpush1.xpose.msra.mxu0 0.0
      %1636 = vmatprep.subr.mxu0 0.0
      %1637 = vmatpush1.xpose.msra.mxu0 0.0
      %1638 = vmatprep.subr.mxu0 0.0
      %1639 = vmatpush1.xpose.msra.mxu0 0.0
      %1640 = vmatprep.mubr.f32.mxu0 0.0
      %1641 = vmatmul.mubr.f32.gmra.mrb[0].mxu0 %v1572
      %v1642 = vpop.f32.mrb[0].mxu0
      %v1643 = vadd.f32 0.0, %v1642
      %v1644 = vpop.f32.mrb[0].mxu0
      %1645 = vdwg.mxu0
      %v1646 = vmul.f32 %v1643, 0.25
      %v1647 = vadd.f32 %v1646, %v1110
      %v1648 = vsel %vm1315, %v1647, -inf
      %1649 = vmax.xlane.f32.xlu0 %v1648
      %v1650 = vpop.xlane.xlu0 %1649
      %v1651 = vsub.f32 %v1647, %v1650
      %v1652 = vmul.f32 %v1651, 1.442695
      %v1653 = vpow.pop %v1652
      %v1654 = vsel %vm1315, %v1653, 0.0
      %1655 = vadd.xlane.f32.xlu0 %v1654
      %v1656 = vpop.xlane.xlu0 %1655
      %v1657 = vrcp.pop %v1656
      %v1658 = vmul.f32 %v1653, %v1657
      %1659 = vrot.lane.b32.xlu0 %v1231, 96
      %v1660 = vpop.permute.xlu0 %1659
      %v1663 = vsel %vm1315, %v1658, 0
      %1665 = vmatprep.subr.mxu0 0.0
      %1666 = vmatpush1.msra.mxu0 %v1660
      %1667 = vmatprep.subr.mxu0 0.0
      %1668 = vmatpush1.msra.mxu0 0.0
      %1669 = vmatprep.subr.mxu0 0.0
      %1670 = vmatpush1.msra.mxu0 0.0
      %1671 = vmatprep.subr.mxu0 0.0
      %1672 = vmatpush1.msra.mxu0 0.0
      %1673 = vmatprep.subr.mxu0 0.0
      %1674 = vmatpush1.msra.mxu0 0.0
      %1675 = vmatprep.subr.mxu0 0.0
      %1676 = vmatpush1.msra.mxu0 0.0
      %1677 = vmatprep.subr.mxu0 0.0
      %1678 = vmatpush1.msra.mxu0 0.0
      %1679 = vmatprep.subr.mxu0 0.0
      %1680 = vmatpush1.msra.mxu0 0.0
      %1681 = vmatprep.subr.mxu0 0.0
      %1682 = vmatpush1.msra.mxu0 0.0
      %1683 = vmatprep.subr.mxu0 0.0
      %1684 = vmatpush1.msra.mxu0 0.0
      %1685 = vmatprep.subr.mxu0 0.0
      %1686 = vmatpush1.msra.mxu0 0.0
      %1687 = vmatprep.subr.mxu0 0.0
      %1688 = vmatpush1.msra.mxu0 0.0
      %1689 = vmatprep.subr.mxu0 0.0
      %1690 = vmatpush1.msra.mxu0 0.0
      %1691 = vmatprep.subr.mxu0 0.0
      %1692 = vmatpush1.msra.mxu0 0.0
      %1693 = vmatprep.subr.mxu0 0.0
      %1694 = vmatpush1.msra.mxu0 0.0
      %1695 = vmatprep.subr.mxu0 0.0
      %1696 = vmatpush1.msra.mxu0 0.0
      %1697 = vmatprep.subr.mxu0 0.0
      %1698 = vmatpush1.msra.mxu0 0.0
      %1699 = vmatprep.subr.mxu0 0.0
      %1700 = vmatpush1.msra.mxu0 0.0
      %1701 = vmatprep.subr.mxu0 0.0
      %1702 = vmatpush1.msra.mxu0 0.0
      %1703 = vmatprep.subr.mxu0 0.0
      %1704 = vmatpush1.msra.mxu0 0.0
      %1705 = vmatprep.subr.mxu0 0.0
      %1706 = vmatpush1.msra.mxu0 0.0
      %1707 = vmatprep.subr.mxu0 0.0
      %1708 = vmatpush1.msra.mxu0 0.0
      %1709 = vmatprep.subr.mxu0 0.0
      %1710 = vmatpush1.msra.mxu0 0.0
      %1711 = vmatprep.subr.mxu0 0.0
      %1712 = vmatpush1.msra.mxu0 0.0
      %1713 = vmatprep.subr.mxu0 0.0
      %1714 = vmatpush1.msra.mxu0 0.0
      %1715 = vmatprep.subr.mxu0 0.0
      %1716 = vmatpush1.msra.mxu0 0.0
      %1717 = vmatprep.subr.mxu0 0.0
      %1718 = vmatpush1.msra.mxu0 0.0
      %1719 = vmatprep.subr.mxu0 0.0
      %1720 = vmatpush1.msra.mxu0 0.0
      %1721 = vmatprep.subr.mxu0 0.0
      %1722 = vmatpush1.msra.mxu0 0.0
      %1723 = vmatprep.subr.mxu0 0.0
      %1724 = vmatpush1.msra.mxu0 0.0
      %1725 = vmatprep.subr.mxu0 0.0
      %1726 = vmatpush1.msra.mxu0 0.0
      %1727 = vmatprep.subr.mxu0 0.0
      %1728 = vmatpush1.msra.mxu0 0.0
      %1729 = vmatprep.mubr.f32.mxu0 0.0
      %1730 = vmatmul.mubr.f32.gmra.mrb[0].mxu0 %v1663
      %v1731 = vpop.f32.mrb[0].mxu0
      %v1732 = vadd.f32 0.0, %v1731
      %v1733 = vpop.f32.mrb[0].mxu0
      %1734 = vdwg.mxu0
      %1735 = vrot.lane.b32.xlu0 %v1229, 80
      %v1736 = vpop.permute.xlu0 %1735
      %1737 = vrot.lane.b32.xlu0 %v1229, 16
      %v1738 = vpop.permute.xlu0 %1737
      %v1739 = vsel %vm1238, %v1736, 0
      %v1741 = vsel %vm1238, %v1738, 0
      %1743 = vmatprep.subr.mxu0 0.0
      %1744 = vmatpush1.xpose.msra.mxu0 %v1741
      %1745 = vmatprep.subr.mxu0 0.0
      %1746 = vmatpush1.xpose.msra.mxu0 0.0
      %1747 = vmatprep.subr.mxu0 0.0
      %1748 = vmatpush1.xpose.msra.mxu0 0.0
      %1749 = vmatprep.subr.mxu0 0.0
      %1750 = vmatpush1.xpose.msra.mxu0 0.0
      %1751 = vmatprep.subr.mxu0 0.0
      %1752 = vmatpush1.xpose.msra.mxu0 0.0
      %1753 = vmatprep.subr.mxu0 0.0
      %1754 = vmatpush1.xpose.msra.mxu0 0.0
      %1755 = vmatprep.subr.mxu0 0.0
      %1756 = vmatpush1.xpose.msra.mxu0 0.0
      %1757 = vmatprep.subr.mxu0 0.0
      %1758 = vmatpush1.xpose.msra.mxu0 0.0
      %1759 = vmatprep.subr.mxu0 0.0
      %1760 = vmatpush1.xpose.msra.mxu0 0.0
      %1761 = vmatprep.subr.mxu0 0.0
      %1762 = vmatpush1.xpose.msra.mxu0 0.0
      %1763 = vmatprep.subr.mxu0 0.0
      %1764 = vmatpush1.xpose.msra.mxu0 0.0
      %1765 = vmatprep.subr.mxu0 0.0
      %1766 = vmatpush1.xpose.msra.mxu0 0.0
      %1767 = vmatprep.subr.mxu0 0.0
      %1768 = vmatpush1.xpose.msra.mxu0 0.0
      %1769 = vmatprep.subr.mxu0 0.0
      %1770 = vmatpush1.xpose.msra.mxu0 0.0
      %1771 = vmatprep.subr.mxu0 0.0
      %1772 = vmatpush1.xpose.msra.mxu0 0.0
      %1773 = vmatprep.subr.mxu0 0.0
      %1774 = vmatpush1.xpose.msra.mxu0 0.0
      %1775 = vmatprep.subr.mxu0 0.0
      %1776 = vmatpush1.xpose.msra.mxu0 0.0
      %1777 = vmatprep.subr.mxu0 0.0
      %1778 = vmatpush1.xpose.msra.mxu0 0.0
      %1779 = vmatprep.subr.mxu0 0.0
      %1780 = vmatpush1.xpose.msra.mxu0 0.0
      %1781 = vmatprep.subr.mxu0 0.0
      %1782 = vmatpush1.xpose.msra.mxu0 0.0
      %1783 = vmatprep.subr.mxu0 0.0
      %1784 = vmatpush1.xpose.msra.mxu0 0.0
      %1785 = vmatprep.subr.mxu0 0.0
      %1786 = vmatpush1.xpose.msra.mxu0 0.0
      %1787 = vmatprep.subr.mxu0 0.0
      %1788 = vmatpush1.xpose.msra.mxu0 0.0
      %1789 = vmatprep.subr.mxu0 0.0
      %1790 = vmatpush1.xpose.msra.mxu0 0.0
      %1791 = vmatprep.subr.mxu0 0.0
      %1792 = vmatpush1.xpose.msra.mxu0 0.0
      %1793 = vmatprep.subr.mxu0 0.0
      %1794 = vmatpush1.xpose.msra.mxu0 0.0
      %1795 = vmatprep.subr.mxu0 0.0
      %1796 = vmatpush1.xpose.msra.mxu0 0.0
      %1797 = vmatprep.subr.mxu0 0.0
      %1798 = vmatpush1.xpose.msra.mxu0 0.0
      %1799 = vmatprep.subr.mxu0 0.0
      %1800 = vmatpush1.xpose.msra.mxu0 0.0
      %1801 = vmatprep.subr.mxu0 0.0
      %1802 = vmatpush1.xpose.msra.mxu0 0.0
      %1803 = vmatprep.subr.mxu0 0.0
      %1804 = vmatpush1.xpose.msra.mxu0 0.0
      %1805 = vmatprep.subr.mxu0 0.0
      %1806 = vmatpush1.xpose.msra.mxu0 0.0
      %1807 = vmatprep.mubr.f32.mxu0 0.0
      %1808 = vmatmul.mubr.f32.gmra.mrb[0].mxu0 %v1739
      %v1809 = vpop.f32.mrb[0].mxu0
      %v1810 = vadd.f32 0.0, %v1809
      %v1811 = vpop.f32.mrb[0].mxu0
      %1812 = vdwg.mxu0
      %v1813 = vmul.f32 %v1810, 0.25
      %v1814 = vadd.f32 %v1813, %v1110
      %v1815 = vsel %vm1315, %v1814, -inf
      %1816 = vmax.xlane.f32.xlu0 %v1815
      %v1817 = vpop.xlane.xlu0 %1816
      %v1818 = vsub.f32 %v1814, %v1817
      %v1819 = vmul.f32 %v1818, 1.442695
      %v1820 = vpow.pop %v1819
      %v1821 = vsel %vm1315, %v1820, 0.0
      %1822 = vadd.xlane.f32.xlu0 %v1821
      %v1823 = vpop.xlane.xlu0 %1822
      %v1824 = vrcp.pop %v1823
      %v1825 = vmul.f32 %v1820, %v1824
      %1826 = vrot.lane.b32.xlu0 %v1231, 80
      %v1827 = vpop.permute.xlu0 %1826
      %v1830 = vsel %vm1315, %v1825, 0
      %1832 = vmatprep.subr.mxu0 0.0
      %1833 = vmatpush1.msra.mxu0 %v1827
      %1834 = vmatprep.subr.mxu0 0.0
      %1835 = vmatpush1.msra.mxu0 0.0
      %1836 = vmatprep.subr.mxu0 0.0
      %1837 = vmatpush1.msra.mxu0 0.0
      %1838 = vmatprep.subr.mxu0 0.0
      %1839 = vmatpush1.msra.mxu0 0.0
      %1840 = vmatprep.subr.mxu0 0.0
      %1841 = vmatpush1.msra.mxu0 0.0
      %1842 = vmatprep.subr.mxu0 0.0
      %1843 = vmatpush1.msra.mxu0 0.0
      %1844 = vmatprep.subr.mxu0 0.0
      %1845 = vmatpush1.msra.mxu0 0.0
      %1846 = vmatprep.subr.mxu0 0.0
      %1847 = vmatpush1.msra.mxu0 0.0
      %1848 = vmatprep.subr.mxu0 0.0
      %1849 = vmatpush1.msra.mxu0 0.0
      %1850 = vmatprep.subr.mxu0 0.0
      %1851 = vmatpush1.msra.mxu0 0.0
      %1852 = vmatprep.subr.mxu0 0.0
      %1853 = vmatpush1.msra.mxu0 0.0
      %1854 = vmatprep.subr.mxu0 0.0
      %1855 = vmatpush1.msra.mxu0 0.0
      %1856 = vmatprep.subr.mxu0 0.0
      %1857 = vmatpush1.msra.mxu0 0.0
      %1858 = vmatprep.subr.mxu0 0.0
      %1859 = vmatpush1.msra.mxu0 0.0
      %1860 = vmatprep.subr.mxu0 0.0
      %1861 = vmatpush1.msra.mxu0 0.0
      %1862 = vmatprep.subr.mxu0 0.0
      %1863 = vmatpush1.msra.mxu0 0.0
      %1864 = vmatprep.subr.mxu0 0.0
      %1865 = vmatpush1.msra.mxu0 0.0
      %1866 = vmatprep.subr.mxu0 0.0
      %1867 = vmatpush1.msra.mxu0 0.0
      %1868 = vmatprep.subr.mxu0 0.0
      %1869 = vmatpush1.msra.mxu0 0.0
      %1870 = vmatprep.subr.mxu0 0.0
      %1871 = vmatpush1.msra.mxu0 0.0
      %1872 = vmatprep.subr.mxu0 0.0
      %1873 = vmatpush1.msra.mxu0 0.0
      %1874 = vmatprep.subr.mxu0 0.0
      %1875 = vmatpush1.msra.mxu0 0.0
      %1876 = vmatprep.subr.mxu0 0.0
      %1877 = vmatpush1.msra.mxu0 0.0
      %1878 = vmatprep.subr.mxu0 0.0
      %1879 = vmatpush1.msra.mxu0 0.0
      %1880 = vmatprep.subr.mxu0 0.0
      %1881 = vmatpush1.msra.mxu0 0.0
      %1882 = vmatprep.subr.mxu0 0.0
      %1883 = vmatpush1.msra.mxu0 0.0
      %1884 = vmatprep.subr.mxu0 0.0
      %1885 = vmatpush1.msra.mxu0 0.0
      %1886 = vmatprep.subr.mxu0 0.0
      %1887 = vmatpush1.msra.mxu0 0.0
      %1888 = vmatprep.subr.mxu0 0.0
      %1889 = vmatpush1.msra.mxu0 0.0
      %1890 = vmatprep.subr.mxu0 0.0
      %1891 = vmatpush1.msra.mxu0 0.0
      %1892 = vmatprep.subr.mxu0 0.0
      %1893 = vmatpush1.msra.mxu0 0.0
      %1894 = vmatprep.subr.mxu0 0.0
      %1895 = vmatpush1.msra.mxu0 0.0
      %1896 = vmatprep.mubr.f32.mxu0 0.0
      %1897 = vmatmul.mubr.f32.gmra.mrb[0].mxu0 %v1830
      %v1898 = vpop.f32.mrb[0].mxu0
      %v1899 = vadd.f32 0.0, %v1898
      %v1900 = vpop.f32.mrb[0].mxu0
      %1901 = vdwg.mxu0
      %1903 = vrot.lane.b32.xlu0 %v1565, 16
      %v1904 = vpop.permute.xlu0 %1903
      %1907 = vrot.lane.b32.xlu0 %v1732, 32
      %v1908 = vpop.permute.xlu0 %1907
      %1911 = vrot.lane.b32.xlu0 %v1899, 48
      %v1912 = vpop.permute.xlu0 %1911
      %v1914 = vsel %vm1238, %v1397, %v1904
      %vm1915 = vcmask 261120
      %v1916 = vsel %vm1915, %v1914, %v1908
      %vm1917 = vcmask 392192
      %v1918 = vsel %vm1917, %v1916, %v1912
      %v1919 = vpack.c.bf16 %v1918, %v1918
      %v1920 = vld [vmem:[%s8] sm:$0xf]
      %v1921 = vld [vmem:[%s8 + $0x4] sm:$0xf]
      %v1922 = vld [vmem:[%s8 + $0x8] sm:$0xf]
      %v1923 = vld [vmem:[%s8 + $0xc] sm:$0xf]
      %v1924 = vld [vmem:[%s8 + $0x10] sm:$0xf]
      %v1925 = vld [vmem:[%s8 + $0x14] sm:$0xf]
      %v1926 = vld [vmem:[%s8 + $0x18] sm:$0xf]
      %v1927 = vld [vmem:[%s8 + $0x1c] sm:$0xf]
      %v1936 = vunpack.c.l.b16 %v1920
      %v1937 = vunpack.c.l.b16 %v1921
      %v1938 = vunpack.c.l.b16 %v1922
      %v1939 = vunpack.c.l.b16 %v1923
      %v1940 = vunpack.c.l.b16 %v1924
      %v1941 = vunpack.c.l.b16 %v1925
      %v1942 = vunpack.c.l.b16 %v1926
      %v1943 = vunpack.c.l.b16 %v1927
      %v1944 = vpack.c.b16 %v1937, %v1936
      %v1945 = vpack.c.b16 %v1939, %v1938
      %v1946 = vpack.c.b16 %v1941, %v1940
      %v1947 = vpack.c.b16 %v1943, %v1942
      %v1953 = vsel %vm1113, %v1919, 0
      %1955 = vmatprep.subr.bf16.mxu0 0
      %1956 = vmatpush1.bf16.msra.mxu0 %v1944
      %1957 = vmatprep.subr.bf16.mxu0 0
      %1958 = vmatpush1.bf16.msra.mxu0 %v1945
      %1959 = vmatprep.subr.bf16.mxu0 0
      %1960 = vmatpush1.bf16.msra.mxu0 %v1946
      %1961 = vmatprep.subr.bf16.mxu0 0
      %1962 = vmatpush1.bf16.msra.mxu0 %v1947
      %1963 = vmatprep.subr.bf16.mxu0 0
      %1964 = vmatpush1.bf16.msra.mxu0 0
      %1965 = vmatprep.subr.bf16.mxu0 0
      %1966 = vmatpush1.bf16.msra.mxu0 0
      %1967 = vmatprep.subr.bf16.mxu0 0
      %1968 = vmatpush1.bf16.msra.mxu0 0
      %1969 = vmatprep.subr.bf16.mxu0 0
      %1970 = vmatpush1.bf16.msra.mxu0 0
      %1971 = vmatprep.subr.bf16.mxu0 0
      %1972 = vmatpush1.bf16.msra.mxu0 0
      %1973 = vmatprep.subr.bf16.mxu0 0
      %1974 = vmatpush1.bf16.msra.mxu0 0
      %1975 = vmatprep.subr.bf16.mxu0 0
      %1976 = vmatpush1.bf16.msra.mxu0 0
      %1977 = vmatprep.subr.bf16.mxu0 0
      %1978 = vmatpush1.bf16.msra.mxu0 0
      %1979 = vmatprep.subr.bf16.mxu0 0
      %1980 = vmatpush1.bf16.msra.mxu0 0
      %1981 = vmatprep.subr.bf16.mxu0 0
      %1982 = vmatpush1.bf16.msra.mxu0 0
      %1983 = vmatprep.subr.bf16.mxu0 0
      %1984 = vmatpush1.bf16.msra.mxu0 0
      %1985 = vmatprep.subr.bf16.mxu0 0
      %1986 = vmatpush1.bf16.msra.mxu0 0
      %1987 = vmatprep.mubr.bf16.mxu0 0
      %1988 = vmatmul.mubr.bf16.gmra.mrb[0].mxu0 %v1953
      %v1989 = vpop.f32.mrb[0].mxu0
      %v1990 = vadd.f32 0.0, %v1989
      %v1991 = vpop.f32.mrb[0].mxu0
      %v1992 = vpop.f32.mrb[0].mxu0
      %v1993 = vpop.f32.mrb[0].mxu0
      %1994 = vdwg.mxu0
      %v1995 = vadd.f32 %v1106, %v1990
      %v1996 = vld [vmem:[%s9] sm:$0x1]
      %v1998 = vlaneseq
      %v1999 = vshrl.u32 %v1998, 7
      %v2000 = vsub.s32 0, %v1999
      %v2001 = vrot.slane %v1996, %v2000
      %v2003 = vadd.f32 %v1995, %v2001
      %v2004 = vld [vmem:[%s10] sm:$0x1]
      %v2005 = vld [vmem:[%s11] sm:$0x1]
      %v2006 = vsel %vm1113, %v2003, 0.0
      %2007 = vadd.xlane.f32.xlu0 %v2006
      %v2008 = vpop.xlane.xlu0 %2007
      %v2009 = vmul.f32 %v2008, %v1117
      %v2010 = vsub.f32 %v2003, %v2009
      %v2011 = vmul.f32 %v2010, %v2010
      %v2012 = vsel %vm1113, %v2011, 0.0
      %2013 = vadd.xlane.f32.xlu0 %v2012
      %v2014 = vpop.xlane.xlu0 %2013
      %v2015 = vmul.f32 %v2014, %v1117
      %v2016 = vadd.f32 %v2015, 1e-05
      %v2017 = vrsqrt.pop %v2016
      %v2018 = vmul.f32 %v2010, %v2017
      %v2020 = vlaneseq
      %v2021 = vshrl.u32 %v2020, 7
      %v2022 = vsub.s32 0, %v2021
      %v2023 = vrot.slane %v2004, %v2022
      %v2025 = vmul.f32 %v2018, %v2023
      %v2027 = vlaneseq
      %v2028 = vshrl.u32 %v2027, 7
      %v2029 = vsub.s32 0, %v2028
      %v2030 = vrot.slane %v2005, %v2029
      %v2032 = vadd.f32 %v2025, %v2030
      %v2033 = vpack.c.bf16 %v2032, %v2032
      %v2034 = vld [vmem:[%s12] sm:$0xf]
      %v2035 = vld [vmem:[%s12 + $0x4] sm:$0xf]
      %v2036 = vld [vmem:[%s12 + $0x8] sm:$0xf]
      %v2037 = vld [vmem:[%s12 + $0xc] sm:$0xf]
      %v2038 = vld [vmem:[%s12 + $0x10] sm:$0xf]
      %v2039 = vld [vmem:[%s12 + $0x14] sm:$0xf]
      %v2040 = vld [vmem:[%s12 + $0x18] sm:$0xf]
      %v2041 = vld [vmem:[%s12 + $0x1c] sm:$0xf]
      %v2042 = vld [vmem:[%s13] sm:$0x1]
      %v2044 = vlaneseq
      %v2045 = vshrl.u32 %v2044, 7
      %v2046 = vsub.s32 0, %v2045
      %v2047 = vrot.slane %v2042, %v2046
      %v2057 = vunpack.c.l.b16 %v2034
      %v2058 = vunpack.c.l.b16 %v2035
      %v2059 = vunpack.c.l.b16 %v2036
      %v2060 = vunpack.c.l.b16 %v2037
      %v2061 = vunpack.c.l.b16 %v2038
      %v2062 = vunpack.c.l.b16 %v2039
      %v2063 = vunpack.c.l.b16 %v2040
      %v2064 = vunpack.c.l.b16 %v2041
      %v2065 = vpack.c.b16 %v2058, %v2057
      %v2066 = vpack.c.b16 %v2060, %v2059
      %v2067 = vpack.c.b16 %v2062, %v2061
      %v2068 = vpack.c.b16 %v2064, %v2063
      %v2074 = vsel %vm1113, %v2033, 0
      %2076 = vmatprep.subr.bf16.mxu0 0
      %2077 = vmatpush1.bf16.msra.mxu0 %v2065
      %2078 = vmatprep.subr.bf16.mxu0 0
      %2079 = vmatpush1.bf16.msra.mxu0 %v2066
      %2080 = vmatprep.subr.bf16.mxu0 0
      %2081 = vmatpush1.bf16.msra.mxu0 %v2067
      %2082 = vmatprep.subr.bf16.mxu0 0
      %2083 = vmatpush1.bf16.msra.mxu0 %v2068
      %2084 = vmatprep.subr.bf16.mxu0 0
      %2085 = vmatpush1.bf16.msra.mxu0 0
      %2086 = vmatprep.subr.bf16.mxu0 0
      %2087 = vmatpush1.bf16.msra.mxu0 0
      %2088 = vmatprep.subr.bf16.mxu0 0
      %2089 = vmatpush1.bf16.msra.mxu0 0
      %2090 = vmatprep.subr.bf16.mxu0 0
      %2091 = vmatpush1.bf16.msra.mxu0 0
      %2092 = vmatprep.subr.bf16.mxu0 0
      %2093 = vmatpush1.bf16.msra.mxu0 0
      %2094 = vmatprep.subr.bf16.mxu0 0
      %2095 = vmatpush1.bf16.msra.mxu0 0
      %2096 = vmatprep.subr.bf16.mxu0 0
      %2097 = vmatpush1.bf16.msra.mxu0 0
      %2098 = vmatprep.subr.bf16.mxu0 0
      %2099 = vmatpush1.bf16.msra.mxu0 0
      %2100 = vmatprep.subr.bf16.mxu0 0
      %2101 = vmatpush1.bf16.msra.mxu0 0
      %2102 = vmatprep.subr.bf16.mxu0 0
      %2103 = vmatpush1.bf16.msra.mxu0 0
      %2104 = vmatprep.subr.bf16.mxu0 0
      %2105 = vmatpush1.bf16.msra.mxu0 0
      %2106 = vmatprep.subr.bf16.mxu0 0
      %2107 = vmatpush1.bf16.msra.mxu0 0
      %2108 = vmatprep.mubr.bf16.mxu0 0
      %2109 = vmatmul.mubr.bf16.gmra.mrb[0].mxu0 %v2074
      %v2110 = vpop.f32.mrb[0].mxu0
      %v2111 = vadd.f32 %v2047, %v2110
      %v2112 = vpop.f32.mrb[0].mxu0
      %v2113 = vpop.f32.mrb[0].mxu0
      %v2114 = vpop.f32.mrb[0].mxu0
      %2115 = vdwg.mxu0
      %v2116 = vmul.f32 %v2111, 0.5
      %v2117 = vmul.f32 %v2111, 0.70710677
      %v2118 = verf.f32.pop %v2117
      %v2119 = vadd.f32 %v2118, 1.0
      %v2120 = vmul.f32 %v2116, %v2119
      %v2121 = vpack.c.bf16 %v2120, %v2120
      %v2122 = vld [vmem:[%s14] sm:$0xf]
      %v2123 = vld [vmem:[%s14 + $0x4] sm:$0xf]
      %v2124 = vld [vmem:[%s14 + $0x8] sm:$0xf]
      %v2125 = vld [vmem:[%s14 + $0xc] sm:$0xf]
      %v2126 = vld [vmem:[%s14 + $0x10] sm:$0xf]
      %v2127 = vld [vmem:[%s14 + $0x14] sm:$0xf]
      %v2128 = vld [vmem:[%s14 + $0x18] sm:$0xf]
      %v2129 = vld [vmem:[%s14 + $0x1c] sm:$0xf]
      %v2130 = vld [vmem:[%s14 + $0x20] sm:$0xf]
      %v2131 = vld [vmem:[%s14 + $0x24] sm:$0xf]
      %v2132 = vld [vmem:[%s14 + $0x28] sm:$0xf]
      %v2133 = vld [vmem:[%s14 + $0x2c] sm:$0xf]
      %v2134 = vld [vmem:[%s14 + $0x30] sm:$0xf]
      %v2135 = vld [vmem:[%s14 + $0x34] sm:$0xf]
      %v2136 = vld [vmem:[%s14 + $0x38] sm:$0xf]
      %v2137 = vld [vmem:[%s14 + $0x3c] sm:$0xf]
      %v2138 = vld [vmem:[%s15] sm:$0x1]
      %v2140 = vlaneseq
      %v2141 = vshrl.u32 %v2140, 7
      %v2142 = vsub.s32 0, %v2141
      %v2143 = vrot.slane %v2138, %v2142
      %v2161 = vunpack.c.l.b16 %v2122
      %v2162 = vunpack.c.l.b16 %v2123
      %v2163 = vunpack.c.l.b16 %v2124
      %v2164 = vunpack.c.l.b16 %v2125
      %v2165 = vunpack.c.l.b16 %v2126
      %v2166 = vunpack.c.l.b16 %v2127
      %v2167 = vunpack.c.l.b16 %v2128
      %v2168 = vunpack.c.l.b16 %v2129
      %v2169 = vunpack.c.l.b16 %v2130
      %v2170 = vunpack.c.l.b16 %v2131
      %v2171 = vunpack.c.l.b16 %v2132
      %v2172 = vunpack.c.l.b16 %v2133
      %v2173 = vunpack.c.l.b16 %v2134
      %v2174 = vunpack.c.l.b16 %v2135
      %v2175 = vunpack.c.l.b16 %v2136
      %v2176 = vunpack.c.l.b16 %v2137
      %v2177 = vpack.c.b16 %v2162, %v2161
      %v2178 = vpack.c.b16 %v2164, %v2163
      %v2179 = vpack.c.b16 %v2166, %v2165
      %v2180 = vpack.c.b16 %v2168, %v2167
      %v2181 = vpack.c.b16 %v2170, %v2169
      %v2182 = vpack.c.b16 %v2172, %v2171
      %v2183 = vpack.c.b16 %v2174, %v2173
      %v2184 = vpack.c.b16 %v2176, %v2175
      %2193 = vmatprep.subr.bf16.mxu0 0
      %2194 = vmatpush1.bf16.msra.mxu0 %v2177
      %2195 = vmatprep.subr.bf16.mxu0 0
      %2196 = vmatpush1.bf16.msra.mxu0 %v2178
      %2197 = vmatprep.subr.bf16.mxu0 0
      %2198 = vmatpush1.bf16.msra.mxu0 %v2179
      %2199 = vmatprep.subr.bf16.mxu0 0
      %2200 = vmatpush1.bf16.msra.mxu0 %v2180
      %2201 = vmatprep.subr.bf16.mxu0 0
      %2202 = vmatpush1.bf16.msra.mxu0 %v2181
      %2203 = vmatprep.subr.bf16.mxu0 0
      %2204 = vmatpush1.bf16.msra.mxu0 %v2182
      %2205 = vmatprep.subr.bf16.mxu0 0
      %2206 = vmatpush1.bf16.msra.mxu0 %v2183
      %2207 = vmatprep.subr.bf16.mxu0 0
      %2208 = vmatpush1.bf16.msra.mxu0 %v2184
      %2209 = vmatprep.subr.bf16.mxu0 0
      %2210 = vmatpush1.bf16.msra.mxu0 0
      %2211 = vmatprep.subr.bf16.mxu0 0
      %2212 = vmatpush1.bf16.msra.mxu0 0
      %2213 = vmatprep.subr.bf16.mxu0 0
      %2214 = vmatpush1.bf16.msra.mxu0 0
      %2215 = vmatprep.subr.bf16.mxu0 0
      %2216 = vmatpush1.bf16.msra.mxu0 0
      %2217 = vmatprep.subr.bf16.mxu0 0
      %2218 = vmatpush1.bf16.msra.mxu0 0
      %2219 = vmatprep.subr.bf16.mxu0 0
      %2220 = vmatpush1.bf16.msra.mxu0 0
      %2221 = vmatprep.subr.bf16.mxu0 0
      %2222 = vmatpush1.bf16.msra.mxu0 0
      %2223 = vmatprep.subr.bf16.mxu0 0
      %2224 = vmatpush1.bf16.msra.mxu0 0
      %2225 = vmatprep.mubr.bf16.mxu0 0
      %2226 = vmatmul.mubr.bf16.gmra.mrb[0].mxu0 %v2121
      %v2227 = vpop.f32.mrb[0].mxu0
      %v2228 = vadd.f32 %v2143, %v2227
      %v2229 = vpop.f32.mrb[0].mxu0
      %v2230 = vpop.f32.mrb[0].mxu0
      %v2231 = vpop.f32.mrb[0].mxu0
      %2232 = vdwg.mxu0
      %v2233 = vadd.f32 %v2003, %v2228
      %s2234 = scalar_lea.vmem %s5, 1
      %v2235 = vld [vmem:[%s2234] sm:$0x1]
      %s2236 = scalar_lea.vmem %s6, 1
      %v2237 = vld [vmem:[%s2236] sm:$0x1]
      %v2238 = vsel %vm1113, %v2233, 0.0
      %2239 = vadd.xlane.f32.xlu0 %v2238
      %v2240 = vpop.xlane.xlu0 %2239
      %v2241 = vmul.f32 %v2240, %v1117
      %v2242 = vsub.f32 %v2233, %v2241
      %v2243 = vmul.f32 %v2242, %v2242
      %v2244 = vsel %vm1113, %v2243, 0.0
      %2245 = vadd.xlane.f32.xlu0 %v2244
      %v2246 = vpop.xlane.xlu0 %2245
      %v2247 = vmul.f32 %v2246, %v1117
      %v2248 = vadd.f32 %v2247, 1e-05
      %v2249 = vrsqrt.pop %v2248
      %v2250 = vmul.f32 %v2242, %v2249
      %v2252 = vlaneseq
      %v2253 = vshrl.u32 %v2252, 7
      %v2254 = vsub.s32 0, %v2253
      %v2255 = vrot.slane %v2235, %v2254
      %v2257 = vmul.f32 %v2250, %v2255
      %v2259 = vlaneseq
      %v2260 = vshrl.u32 %v2259, 7
      %v2261 = vsub.s32 0, %v2260
      %v2262 = vrot.slane %v2237, %v2261
      %v2264 = vadd.f32 %v2257, %v2262
      %v2265 = vpack.c.bf16 %v2264, %v2264
      %s2266 = scalar_lea.vmem %s7, 64
      %v2267 = vld [vmem:[%s2266] sm:$0xff]
      %v2268 = vld [vmem:[%s2266 + $0x8] sm:$0xff]
      %v2269 = vld [vmem:[%s2266 + $0x10] sm:$0xff]
      %v2270 = vld [vmem:[%s2266 + $0x18] sm:$0xff]
      %v2271 = vld [vmem:[%s2266 + $0x20] sm:$0xff]
      %v2272 = vld [vmem:[%s2266 + $0x28] sm:$0xff]
      %v2273 = vld [vmem:[%s2266 + $0x30] sm:$0xff]
      %v2274 = vld [vmem:[%s2266 + $0x38] sm:$0xff]
      %v2283 = vunpack.c.l.b16 %v2267
      %v2284 = vunpack.c.h.b16 %v2267
      %v2285 = vunpack.c.l.b16 %v2268
      %v2286 = vunpack.c.h.b16 %v2268
      %v2287 = vunpack.c.l.b16 %v2269
      %v2288 = vunpack.c.h.b16 %v2269
      %v2289 = vunpack.c.l.b16 %v2270
      %v2290 = vunpack.c.h.b16 %v2270
      %v2291 = vunpack.c.l.b16 %v2271
      %v2292 = vunpack.c.h.b16 %v2271
      %v2293 = vunpack.c.l.b16 %v2272
      %v2294 = vunpack.c.h.b16 %v2272
      %v2295 = vunpack.c.l.b16 %v2273
      %v2296 = vunpack.c.h.b16 %v2273
      %v2297 = vunpack.c.l.b16 %v2274
      %v2298 = vunpack.c.h.b16 %v2274
      %v2299 = vpack.c.b16 %v2285, %v2283
      %v2300 = vpack.c.b16 %v2286, %v2284
      %v2301 = vpack.c.b16 %v2289, %v2287
      %v2302 = vpack.c.b16 %v2290, %v2288
      %v2303 = vpack.c.b16 %v2293, %v2291
      %v2304 = vpack.c.b16 %v2294, %v2292
      %v2305 = vpack.c.b16 %v2297, %v2295
      %v2306 = vpack.c.b16 %v2298, %v2296
      %v2316 = vsel %vm1113, %v2265, 0
      %2318 = vmatprep.subr.bf16.mxu0 %v2300
      %2319 = vmatpush1.bf16.msra.mxu0 %v2299
      %2320 = vmatprep.subr.bf16.mxu0 %v2302
      %2321 = vmatpush1.bf16.msra.mxu0 %v2301
      %2322 = vmatprep.subr.bf16.mxu0 %v2304
      %2323 = vmatpush1.bf16.msra.mxu0 %v2303
      %2324 = vmatprep.subr.bf16.mxu0 %v2306
      %2325 = vmatpush1.bf16.msra.mxu0 %v2305
      %2326 = vmatprep.subr.bf16.mxu0 0
      %2327 = vmatpush1.bf16.msra.mxu0 0
      %2328 = vmatprep.subr.bf16.mxu0 0
      %2329 = vmatpush1.bf16.msra.mxu0 0
      %2330 = vmatprep.subr.bf16.mxu0 0
      %2331 = vmatpush1.bf16.msra.mxu0 0
      %2332 = vmatprep.subr.bf16.mxu0 0
      %2333 = vmatpush1.bf16.msra.mxu0 0
      %2334 = vmatprep.subr.bf16.mxu0 0
      %2335 = vmatpush1.bf16.msra.mxu0 0
      %2336 = vmatprep.subr.bf16.mxu0 0
      %2337 = vmatpush1.bf16.msra.mxu0 0
      %2338 = vmatprep.subr.bf16.mxu0 0
      %2339 = vmatpush1.bf16.msra.mxu0 0
      %2340 = vmatprep.subr.bf16.mxu0 0
      %2341 = vmatpush1.bf16.msra.mxu0 0
      %2342 = vmatprep.subr.bf16.mxu0 0
      %2343 = vmatpush1.bf16.msra.mxu0 0
      %2344 = vmatprep.subr.bf16.mxu0 0
      %2345 = vmatpush1.bf16.msra.mxu0 0
      %2346 = vmatprep.subr.bf16.mxu0 0
      %2347 = vmatpush1.bf16.msra.mxu0 0
      %2348 = vmatprep.subr.bf16.mxu0 0
      %2349 = vmatpush1.bf16.msra.mxu0 0
      %2350 = vmatprep.mubr.bf16.mxu0 0
      %2351 = vmatmul.mubr.bf16.gmra.mrb[0].mxu0 %v2316
      %v2352 = vpop.f32.mrb[0].mxu0
      %v2353 = vadd.f32 0.0, %v2352
      %v2354 = vpop.f32.mrb[0].mxu0
      %v2355 = vadd.f32 0.0, %v2354
      %v2356 = vpop.f32.mrb[0].mxu0
      %v2357 = vpop.f32.mrb[0].mxu0
      %2358 = vdwg.mxu0
      %2360 = vrot.lane.b32.xlu0 %v2353, 64
      %v2361 = vpop.permute.xlu0 %2360
      %v2362 = vsel %vm1238, %v2353, 0
      %v2364 = vsel %vm1238, %v2361, 0
      %2366 = vmatprep.subr.mxu0 0.0
      %2367 = vmatpush1.xpose.msra.mxu0 %v2364
      %2368 = vmatprep.subr.mxu0 0.0
      %2369 = vmatpush1.xpose.msra.mxu0 0.0
      %2370 = vmatprep.subr.mxu0 0.0
      %2371 = vmatpush1.xpose.msra.mxu0 0.0
      %2372 = vmatprep.subr.mxu0 0.0
      %2373 = vmatpush1.xpose.msra.mxu0 0.0
      %2374 = vmatprep.subr.mxu0 0.0
      %2375 = vmatpush1.xpose.msra.mxu0 0.0
      %2376 = vmatprep.subr.mxu0 0.0
      %2377 = vmatpush1.xpose.msra.mxu0 0.0
      %2378 = vmatprep.subr.mxu0 0.0
      %2379 = vmatpush1.xpose.msra.mxu0 0.0
      %2380 = vmatprep.subr.mxu0 0.0
      %2381 = vmatpush1.xpose.msra.mxu0 0.0
      %2382 = vmatprep.subr.mxu0 0.0
      %2383 = vmatpush1.xpose.msra.mxu0 0.0
      %2384 = vmatprep.subr.mxu0 0.0
      %2385 = vmatpush1.xpose.msra.mxu0 0.0
      %2386 = vmatprep.subr.mxu0 0.0
      %2387 = vmatpush1.xpose.msra.mxu0 0.0
      %2388 = vmatprep.subr.mxu0 0.0
      %2389 = vmatpush1.xpose.msra.mxu0 0.0
      %2390 = vmatprep.subr.mxu0 0.0
      %2391 = vmatpush1.xpose.msra.mxu0 0.0
      %2392 = vmatprep.subr.mxu0 0.0
      %2393 = vmatpush1.xpose.msra.mxu0 0.0
      %2394 = vmatprep.subr.mxu0 0.0
      %2395 = vmatpush1.xpose.msra.mxu0 0.0
      %2396 = vmatprep.subr.mxu0 0.0
      %2397 = vmatpush1.xpose.msra.mxu0 0.0
      %2398 = vmatprep.subr.mxu0 0.0
      %2399 = vmatpush1.xpose.msra.mxu0 0.0
      %2400 = vmatprep.subr.mxu0 0.0
      %2401 = vmatpush1.xpose.msra.mxu0 0.0
      %2402 = vmatprep.subr.mxu0 0.0
      %2403 = vmatpush1.xpose.msra.mxu0 0.0
      %2404 = vmatprep.subr.mxu0 0.0
      %2405 = vmatpush1.xpose.msra.mxu0 0.0
      %2406 = vmatprep.subr.mxu0 0.0
      %2407 = vmatpush1.xpose.msra.mxu0 0.0
      %2408 = vmatprep.subr.mxu0 0.0
      %2409 = vmatpush1.xpose.msra.mxu0 0.0
      %2410 = vmatprep.subr.mxu0 0.0
      %2411 = vmatpush1.xpose.msra.mxu0 0.0
      %2412 = vmatprep.subr.mxu0 0.0
      %2413 = vmatpush1.xpose.msra.mxu0 0.0
      %2414 = vmatprep.subr.mxu0 0.0
      %2415 = vmatpush1.xpose.msra.mxu0 0.0
      %2416 = vmatprep.subr.mxu0 0.0
      %2417 = vmatpush1.xpose.msra.mxu0 0.0
      %2418 = vmatprep.subr.mxu0 0.0
      %2419 = vmatpush1.xpose.msra.mxu0 0.0
      %2420 = vmatprep.subr.mxu0 0.0
      %2421 = vmatpush1.xpose.msra.mxu0 0.0
      %2422 = vmatprep.subr.mxu0 0.0
      %2423 = vmatpush1.xpose.msra.mxu0 0.0
      %2424 = vmatprep.subr.mxu0 0.0
      %2425 = vmatpush1.xpose.msra.mxu0 0.0
      %2426 = vmatprep.subr.mxu0 0.0
      %2427 = vmatpush1.xpose.msra.mxu0 0.0
      %2428 = vmatprep.subr.mxu0 0.0
      %2429 = vmatpush1.xpose.msra.mxu0 0.0
      %2430 = vmatprep.mubr.f32.mxu0 0.0
      %2431 = vmatmul.mubr.f32.gmra.mrb[0].mxu0 %v2362
      %v2432 = vpop.f32.mrb[0].mxu0
      %v2433 = vadd.f32 0.0, %v2432
      %v2434 = vpop.f32.mrb[0].mxu0
      %2435 = vdwg.mxu0
      %v2436 = vmul.f32 %v2433, 0.25
      %v2437 = vadd.f32 %v2436, %v1110
      %v2438 = vsel %vm1315, %v2437, -inf
      %2439 = vmax.xlane.f32.xlu0 %v2438
      %v2440 = vpop.xlane.xlu0 %2439
      %v2441 = vsub.f32 %v2437, %v2440
      %v2442 = vmul.f32 %v2441, 1.442695
      %v2443 = vpow.pop %v2442
      %v2444 = vsel %vm1315, %v2443, 0.0
      %2445 = vadd.xlane.f32.xlu0 %v2444
      %v2446 = vpop.xlane.xlu0 %2445
      %v2447 = vrcp.pop %v2446
      %v2448 = vmul.f32 %v2443, %v2447
      %v2450 = vsel %vm1315, %v2448, 0
      %2452 = vmatprep.subr.mxu0 0.0
      %2453 = vmatpush1.msra.mxu0 %v2355
      %2454 = vmatprep.subr.mxu0 0.0
      %2455 = vmatpush1.msra.mxu0 0.0
      %2456 = vmatprep.subr.mxu0 0.0
      %2457 = vmatpush1.msra.mxu0 0.0
      %2458 = vmatprep.subr.mxu0 0.0
      %2459 = vmatpush1.msra.mxu0 0.0
      %2460 = vmatprep.subr.mxu0 0.0
      %2461 = vmatpush1.msra.mxu0 0.0
      %2462 = vmatprep.subr.mxu0 0.0
      %2463 = vmatpush1.msra.mxu0 0.0
      %2464 = vmatprep.subr.mxu0 0.0
      %2465 = vmatpush1.msra.mxu0 0.0
      %2466 = vmatprep.subr.mxu0 0.0
      %2467 = vmatpush1.msra.mxu0 0.0
      %2468 = vmatprep.subr.mxu0 0.0
      %2469 = vmatpush1.msra.mxu0 0.0
      %2470 = vmatprep.subr.mxu0 0.0
      %2471 = vmatpush1.msra.mxu0 0.0
      %2472 = vmatprep.subr.mxu0 0.0
      %2473 = vmatpush1.msra.mxu0 0.0
      %2474 = vmatprep.subr.mxu0 0.0
      %2475 = vmatpush1.msra.mxu0 0.0
      %2476 = vmatprep.subr.mxu0 0.0
      %2477 = vmatpush1.msra.mxu0 0.0
      %2478 = vmatprep.subr.mxu0 0.0
      %2479 = vmatpush1.msra.mxu0 0.0
      %2480 = vmatprep.subr.mxu0 0.0
      %2481 = vmatpush1.msra.mxu0 0.0
      %2482 = vmatprep.subr.mxu0 0.0
      %2483 = vmatpush1.msra.mxu0 0.0
      %2484 = vmatprep.subr.mxu0 0.0
      %2485 = vmatpush1.msra.mxu0 0.0
      %2486 = vmatprep.subr.mxu0 0.0
      %2487 = vmatpush1.msra.mxu0 0.0
      %2488 = vmatprep.subr.mxu0 0.0
      %2489 = vmatpush1.msra.mxu0 0.0
      %2490 = vmatprep.subr.mxu0 0.0
      %2491 = vmatpush1.msra.mxu0 0.0
      %2492 = vmatprep.subr.mxu0 0.0
      %2493 = vmatpush1.msra.mxu0 0.0
      %2494 = vmatprep.subr.mxu0 0.0
      %2495 = vmatpush1.msra.mxu0 0.0
      %2496 = vmatprep.subr.mxu0 0.0
      %2497 = vmatpush1.msra.mxu0 0.0
      %2498 = vmatprep.subr.mxu0 0.0
      %2499 = vmatpush1.msra.mxu0 0.0
      %2500 = vmatprep.subr.mxu0 0.0
      %2501 = vmatpush1.msra.mxu0 0.0
      %2502 = vmatprep.subr.mxu0 0.0
      %2503 = vmatpush1.msra.mxu0 0.0
      %2504 = vmatprep.subr.mxu0 0.0
      %2505 = vmatpush1.msra.mxu0 0.0
      %2506 = vmatprep.subr.mxu0 0.0
      %2507 = vmatpush1.msra.mxu0 0.0
      %2508 = vmatprep.subr.mxu0 0.0
      %2509 = vmatpush1.msra.mxu0 0.0
      %2510 = vmatprep.subr.mxu0 0.0
      %2511 = vmatpush1.msra.mxu0 0.0
      %2512 = vmatprep.subr.mxu0 0.0
      %2513 = vmatpush1.msra.mxu0 0.0
      %2514 = vmatprep.subr.mxu0 0.0
      %2515 = vmatpush1.msra.mxu0 0.0
      %2516 = vmatprep.mubr.f32.mxu0 0.0
      %2517 = vmatmul.mubr.f32.gmra.mrb[0].mxu0 %v2450
      %v2518 = vpop.f32.mrb[0].mxu0
      %v2519 = vadd.f32 0.0, %v2518
      %v2520 = vpop.f32.mrb[0].mxu0
      %2521 = vdwg.mxu0
      %2522 = vrot.lane.b32.xlu0 %v2353, 112
      %v2523 = vpop.permute.xlu0 %2522
      %2524 = vrot.lane.b32.xlu0 %v2353, 48
      %v2525 = vpop.permute.xlu0 %2524
      %v2526 = vsel %vm1238, %v2523, 0
      %v2528 = vsel %vm1238, %v2525, 0
      %2530 = vmatprep.subr.mxu0 0.0
      %2531 = vmatpush1.xpose.msra.mxu0 %v2528
      %2532 = vmatprep.subr.mxu0 0.0
      %2533 = vmatpush1.xpose.msra.mxu0 0.0
      %2534 = vmatprep.subr.mxu0 0.0
      %2535 = vmatpush1.xpose.msra.mxu0 0.0
      %2536 = vmatprep.subr.mxu0 0.0
      %2537 = vmatpush1.xpose.msra.mxu0 0.0
      %2538 = vmatprep.subr.mxu0 0.0
      %2539 = vmatpush1.xpose.msra.mxu0 0.0
      %2540 = vmatprep.subr.mxu0 0.0
      %2541 = vmatpush1.xpose.msra.mxu0 0.0
      %2542 = vmatprep.subr.mxu0 0.0
      %2543 = vmatpush1.xpose.msra.mxu0 0.0
      %2544 = vmatprep.subr.mxu0 0.0
      %2545 = vmatpush1.xpose.msra.mxu0 0.0
      %2546 = vmatprep.subr.mxu0 0.0
      %2547 = vmatpush1.xpose.msra.mxu0 0.0
      %2548 = vmatprep.subr.mxu0 0.0
      %2549 = vmatpush1.xpose.msra.mxu0 0.0
      %2550 = vmatprep.subr.mxu0 0.0
      %2551 = vmatpush1.xpose.msra.mxu0 0.0
      %2552 = vmatprep.subr.mxu0 0.0
      %2553 = vmatpush1.xpose.msra.mxu0 0.0
      %2554 = vmatprep.subr.mxu0 0.0
      %2555 = vmatpush1.xpose.msra.mxu0 0.0
      %2556 = vmatprep.subr.mxu0 0.0
      %2557 = vmatpush1.xpose.msra.mxu0 0.0
      %2558 = vmatprep.subr.mxu0 0.0
      %2559 = vmatpush1.xpose.msra.mxu0 0.0
      %2560 = vmatprep.subr.mxu0 0.0
      %2561 = vmatpush1.xpose.msra.mxu0 0.0
      %2562 = vmatprep.subr.mxu0 0.0
      %2563 = vmatpush1.xpose.msra.mxu0 0.0
      %2564 = vmatprep.subr.mxu0 0.0
      %2565 = vmatpush1.xpose.msra.mxu0 0.0
      %2566 = vmatprep.subr.mxu0 0.0
      %2567 = vmatpush1.xpose.msra.mxu0 0.0
      %2568 = vmatprep.subr.mxu0 0.0
      %2569 = vmatpush1.xpose.msra.mxu0 0.0
      %2570 = vmatprep.subr.mxu0 0.0
      %2571 = vmatpush1.xpose.msra.mxu0 0.0
      %2572 = vmatprep.subr.mxu0 0.0
      %2573 = vmatpush1.xpose.msra.mxu0 0.0
      %2574 = vmatprep.subr.mxu0 0.0
      %2575 = vmatpush1.xpose.msra.mxu0 0.0
      %2576 = vmatprep.subr.mxu0 0.0
      %2577 = vmatpush1.xpose.msra.mxu0 0.0
      %2578 = vmatprep.subr.mxu0 0.0
      %2579 = vmatpush1.xpose.msra.mxu0 0.0
      %2580 = vmatprep.subr.mxu0 0.0
      %2581 = vmatpush1.xpose.msra.mxu0 0.0
      %2582 = vmatprep.subr.mxu0 0.0
      %2583 = vmatpush1.xpose.msra.mxu0 0.0
      %2584 = vmatprep.subr.mxu0 0.0
      %2585 = vmatpush1.xpose.msra.mxu0 0.0
      %2586 = vmatprep.subr.mxu0 0.0
      %2587 = vmatpush1.xpose.msra.mxu0 0.0
      %2588 = vmatprep.subr.mxu0 0.0
      %2589 = vmatpush1.xpose.msra.mxu0 0.0
      %2590 = vmatprep.subr.mxu0 0.0
      %2591 = vmatpush1.xpose.msra.mxu0 0.0
      %2592 = vmatprep.subr.mxu0 0.0
      %2593 = vmatpush1.xpose.msra.mxu0 0.0
      %2594 = vmatprep.mubr.f32.mxu0 0.0
      %2595 = vmatmul.mubr.f32.gmra.mrb[0].mxu0 %v2526
      %v2596 = vpop.f32.mrb[0].mxu0
      %v2597 = vadd.f32 0.0, %v2596
      %v2598 = vpop.f32.mrb[0].mxu0
      %2599 = vdwg.mxu0
      %v2600 = vmul.f32 %v2597, 0.25
      %v2601 = vadd.f32 %v2600, %v1110
      %v2602 = vsel %vm1315, %v2601, -inf
      %2603 = vmax.xlane.f32.xlu0 %v2602
      %v2604 = vpop.xlane.xlu0 %2603
      %v2605 = vsub.f32 %v2601, %v2604
      %v2606 = vmul.f32 %v2605, 1.442695
      %v2607 = vpow.pop %v2606
      %v2608 = vsel %vm1315, %v2607, 0.0
      %2609 = vadd.xlane.f32.xlu0 %v2608
      %v2610 = vpop.xlane.xlu0 %2609
      %v2611 = vrcp.pop %v2610
      %v2612 = vmul.f32 %v2607, %v2611
      %2614 = vrot.lane.b32.xlu0 %v2355, 112
      %v2615 = vpop.permute.xlu0 %2614
      %v2618 = vsel %vm1315, %v2612, 0
      %2620 = vmatprep.subr.mxu0 0.0
      %2621 = vmatpush1.msra.mxu0 %v2615
      %2622 = vmatprep.subr.mxu0 0.0
      %2623 = vmatpush1.msra.mxu0 0.0
      %2624 = vmatprep.subr.mxu0 0.0
      %2625 = vmatpush1.msra.mxu0 0.0
      %2626 = vmatprep.subr.mxu0 0.0
      %2627 = vmatpush1.msra.mxu0 0.0
      %2628 = vmatprep.subr.mxu0 0.0
      %2629 = vmatpush1.msra.mxu0 0.0
      %2630 = vmatprep.subr.mxu0 0.0
      %2631 = vmatpush1.msra.mxu0 0.0
      %2632 = vmatprep.subr.mxu0 0.0
      %2633 = vmatpush1.msra.mxu0 0.0
      %2634 = vmatprep.subr.mxu0 0.0
      %2635 = vmatpush1.msra.mxu0 0.0
      %2636 = vmatprep.subr.mxu0 0.0
      %2637 = vmatpush1.msra.mxu0 0.0
      %2638 = vmatprep.subr.mxu0 0.0
      %2639 = vmatpush1.msra.mxu0 0.0
      %2640 = vmatprep.subr.mxu0 0.0
      %2641 = vmatpush1.msra.mxu0 0.0
      %2642 = vmatprep.subr.mxu0 0.0
      %2643 = vmatpush1.msra.mxu0 0.0
      %2644 = vmatprep.subr.mxu0 0.0
      %2645 = vmatpush1.msra.mxu0 0.0
      %2646 = vmatprep.subr.mxu0 0.0
      %2647 = vmatpush1.msra.mxu0 0.0
      %2648 = vmatprep.subr.mxu0 0.0
      %2649 = vmatpush1.msra.mxu0 0.0
      %2650 = vmatprep.subr.mxu0 0.0
      %2651 = vmatpush1.msra.mxu0 0.0
      %2652 = vmatprep.subr.mxu0 0.0
      %2653 = vmatpush1.msra.mxu0 0.0
      %2654 = vmatprep.subr.mxu0 0.0
      %2655 = vmatpush1.msra.mxu0 0.0
      %2656 = vmatprep.subr.mxu0 0.0
      %2657 = vmatpush1.msra.mxu0 0.0
      %2658 = vmatprep.subr.mxu0 0.0
      %2659 = vmatpush1.msra.mxu0 0.0
      %2660 = vmatprep.subr.mxu0 0.0
      %2661 = vmatpush1.msra.mxu0 0.0
      %2662 = vmatprep.subr.mxu0 0.0
      %2663 = vmatpush1.msra.mxu0 0.0
      %2664 = vmatprep.subr.mxu0 0.0
      %2665 = vmatpush1.msra.mxu0 0.0
      %2666 = vmatprep.subr.mxu0 0.0
      %2667 = vmatpush1.msra.mxu0 0.0
      %2668 = vmatprep.subr.mxu0 0.0
      %2669 = vmatpush1.msra.mxu0 0.0
      %2670 = vmatprep.subr.mxu0 0.0
      %2671 = vmatpush1.msra.mxu0 0.0
      %2672 = vmatprep.subr.mxu0 0.0
      %2673 = vmatpush1.msra.mxu0 0.0
      %2674 = vmatprep.subr.mxu0 0.0
      %2675 = vmatpush1.msra.mxu0 0.0
      %2676 = vmatprep.subr.mxu0 0.0
      %2677 = vmatpush1.msra.mxu0 0.0
      %2678 = vmatprep.subr.mxu0 0.0
      %2679 = vmatpush1.msra.mxu0 0.0
      %2680 = vmatprep.subr.mxu0 0.0
      %2681 = vmatpush1.msra.mxu0 0.0
      %2682 = vmatprep.subr.mxu0 0.0
      %2683 = vmatpush1.msra.mxu0 0.0
      %2684 = vmatprep.mubr.f32.mxu0 0.0
      %2685 = vmatmul.mubr.f32.gmra.mrb[0].mxu0 %v2618
      %v2686 = vpop.f32.mrb[0].mxu0
      %v2687 = vadd.f32 0.0, %v2686
      %v2688 = vpop.f32.mrb[0].mxu0
      %2689 = vdwg.mxu0
      %2690 = vrot.lane.b32.xlu0 %v2353, 96
      %v2691 = vpop.permute.xlu0 %2690
      %2692 = vrot.lane.b32.xlu0 %v2353, 32
      %v2693 = vpop.permute.xlu0 %2692
      %v2694 = vsel %vm1238, %v2691, 0
      %v2696 = vsel %vm1238, %v2693, 0
      %2698 = vmatprep.subr.mxu0 0.0
      %2699 = vmatpush1.xpose.msra.mxu0 %v2696
      %2700 = vmatprep.subr.mxu0 0.0
      %2701 = vmatpush1.xpose.msra.mxu0 0.0
      %2702 = vmatprep.subr.mxu0 0.0
      %2703 = vmatpush1.xpose.msra.mxu0 0.0
      %2704 = vmatprep.subr.mxu0 0.0
      %2705 = vmatpush1.xpose.msra.mxu0 0.0
      %2706 = vmatprep.subr.mxu0 0.0
      %2707 = vmatpush1.xpose.msra.mxu0 0.0
      %2708 = vmatprep.subr.mxu0 0.0
      %2709 = vmatpush1.xpose.msra.mxu0 0.0
      %2710 = vmatprep.subr.mxu0 0.0
      %2711 = vmatpush1.xpose.msra.mxu0 0.0
      %2712 = vmatprep.subr.mxu0 0.0
      %2713 = vmatpush1.xpose.msra.mxu0 0.0
      %2714 = vmatprep.subr.mxu0 0.0
      %2715 = vmatpush1.xpose.msra.mxu0 0.0
      %2716 = vmatprep.subr.mxu0 0.0
      %2717 = vmatpush1.xpose.msra.mxu0 0.0
      %2718 = vmatprep.subr.mxu0 0.0
      %2719 = vmatpush1.xpose.msra.mxu0 0.0
      %2720 = vmatprep.subr.mxu0 0.0
      %2721 = vmatpush1.xpose.msra.mxu0 0.0
      %2722 = vmatprep.subr.mxu0 0.0
      %2723 = vmatpush1.xpose.msra.mxu0 0.0
      %2724 = vmatprep.subr.mxu0 0.0
      %2725 = vmatpush1.xpose.msra.mxu0 0.0
      %2726 = vmatprep.subr.mxu0 0.0
      %2727 = vmatpush1.xpose.msra.mxu0 0.0
      %2728 = vmatprep.subr.mxu0 0.0
      %2729 = vmatpush1.xpose.msra.mxu0 0.0
      %2730 = vmatprep.subr.mxu0 0.0
      %2731 = vmatpush1.xpose.msra.mxu0 0.0
      %2732 = vmatprep.subr.mxu0 0.0
      %2733 = vmatpush1.xpose.msra.mxu0 0.0
      %2734 = vmatprep.subr.mxu0 0.0
      %2735 = vmatpush1.xpose.msra.mxu0 0.0
      %2736 = vmatprep.subr.mxu0 0.0
      %2737 = vmatpush1.xpose.msra.mxu0 0.0
      %2738 = vmatprep.subr.mxu0 0.0
      %2739 = vmatpush1.xpose.msra.mxu0 0.0
      %2740 = vmatprep.subr.mxu0 0.0
      %2741 = vmatpush1.xpose.msra.mxu0 0.0
      %2742 = vmatprep.subr.mxu0 0.0
      %2743 = vmatpush1.xpose.msra.mxu0 0.0
      %2744 = vmatprep.subr.mxu0 0.0
      %2745 = vmatpush1.xpose.msra.mxu0 0.0
      %2746 = vmatprep.subr.mxu0 0.0
      %2747 = vmatpush1.xpose.msra.mxu0 0.0
      %2748 = vmatprep.subr.mxu0 0.0
      %2749 = vmatpush1.xpose.msra.mxu0 0.0
      %2750 = vmatprep.subr.mxu0 0.0
      %2751 = vmatpush1.xpose.msra.mxu0 0.0
      %2752 = vmatprep.subr.mxu0 0.0
      %2753 = vmatpush1.xpose.msra.mxu0 0.0
      %2754 = vmatprep.subr.mxu0 0.0
      %2755 = vmatpush1.xpose.msra.mxu0 0.0
      %2756 = vmatprep.subr.mxu0 0.0
      %2757 = vmatpush1.xpose.msra.mxu0 0.0
      %2758 = vmatprep.subr.mxu0 0.0
      %2759 = vmatpush1.xpose.msra.mxu0 0.0
      %2760 = vmatprep.subr.mxu0 0.0
      %2761 = vmatpush1.xpose.msra.mxu0 0.0
      %2762 = vmatprep.mubr.f32.mxu0 0.0
      %2763 = vmatmul.mubr.f32.gmra.mrb[0].mxu0 %v2694
      %v2764 = vpop.f32.mrb[0].mxu0
      %v2765 = vadd.f32 0.0, %v2764
      %v2766 = vpop.f32.mrb[0].mxu0
      %2767 = vdwg.mxu0
      %v2768 = vmul.f32 %v2765, 0.25
      %v2769 = vadd.f32 %v2768, %v1110
      %v2770 = vsel %vm1315, %v2769, -inf
      %2771 = vmax.xlane.f32.xlu0 %v2770
      %v2772 = vpop.xlane.xlu0 %2771
      %v2773 = vsub.f32 %v2769, %v2772
      %v2774 = vmul.f32 %v2773, 1.442695
      %v2775 = vpow.pop %v2774
      %v2776 = vsel %vm1315, %v2775, 0.0
      %2777 = vadd.xlane.f32.xlu0 %v2776
      %v2778 = vpop.xlane.xlu0 %2777
      %v2779 = vrcp.pop %v2778
      %v2780 = vmul.f32 %v2775, %v2779
      %2781 = vrot.lane.b32.xlu0 %v2355, 96
      %v2782 = vpop.permute.xlu0 %2781
      %v2785 = vsel %vm1315, %v2780, 0
      %2787 = vmatprep.subr.mxu0 0.0
      %2788 = vmatpush1.msra.mxu0 %v2782
      %2789 = vmatprep.subr.mxu0 0.0
      %2790 = vmatpush1.msra.mxu0 0.0
      %2791 = vmatprep.subr.mxu0 0.0
      %2792 = vmatpush1.msra.mxu0 0.0
      %2793 = vmatprep.subr.mxu0 0.0
      %2794 = vmatpush1.msra.mxu0 0.0
      %2795 = vmatprep.subr.mxu0 0.0
      %2796 = vmatpush1.msra.mxu0 0.0
      %2797 = vmatprep.subr.mxu0 0.0
      %2798 = vmatpush1.msra.mxu0 0.0
      %2799 = vmatprep.subr.mxu0 0.0
      %2800 = vmatpush1.msra.mxu0 0.0
      %2801 = vmatprep.subr.mxu0 0.0
      %2802 = vmatpush1.msra.mxu0 0.0
      %2803 = vmatprep.subr.mxu0 0.0
      %2804 = vmatpush1.msra.mxu0 0.0
      %2805 = vmatprep.subr.mxu0 0.0
      %2806 = vmatpush1.msra.mxu0 0.0
      %2807 = vmatprep.subr.mxu0 0.0
      %2808 = vmatpush1.msra.mxu0 0.0
      %2809 = vmatprep.subr.mxu0 0.0
      %2810 = vmatpush1.msra.mxu0 0.0
      %2811 = vmatprep.subr.mxu0 0.0
      %2812 = vmatpush1.msra.mxu0 0.0
      %2813 = vmatprep.subr.mxu0 0.0
      %2814 = vmatpush1.msra.mxu0 0.0
      %2815 = vmatprep.subr.mxu0 0.0
      %2816 = vmatpush1.msra.mxu0 0.0
      %2817 = vmatprep.subr.mxu0 0.0
      %2818 = vmatpush1.msra.mxu0 0.0
      %2819 = vmatprep.subr.mxu0 0.0
      %2820 = vmatpush1.msra.mxu0 0.0
      %2821 = vmatprep.subr.mxu0 0.0
      %2822 = vmatpush1.msra.mxu0 0.0
      %2823 = vmatprep.subr.mxu0 0.0
      %2824 = vmatpush1.msra.mxu0 0.0
      %2825 = vmatprep.subr.mxu0 0.0
      %2826 = vmatpush1.msra.mxu0 0.0
      %2827 = vmatprep.subr.mxu0 0.0
      %2828 = vmatpush1.msra.mxu0 0.0
      %2829 = vmatprep.subr.mxu0 0.0
      %2830 = vmatpush1.msra.mxu0 0.0
      %2831 = vmatprep.subr.mxu0 0.0
      %2832 = vmatpush1.msra.mxu0 0.0
      %2833 = vmatprep.subr.mxu0 0.0
      %2834 = vmatpush1.msra.mxu0 0.0
      %2835 = vmatprep.subr.mxu0 0.0
      %2836 = vmatpush1.msra.mxu0 0.0
      %2837 = vmatprep.subr.mxu0 0.0
      %2838 = vmatpush1.msra.mxu0 0.0
      %2839 = vmatprep.subr.mxu0 0.0
      %2840 = vmatpush1.msra.mxu0 0.0
      %2841 = vmatprep.subr.mxu0 0.0
      %2842 = vmatpush1.msra.mxu0 0.0
      %2843 = vmatprep.subr.mxu0 0.0
      %2844 = vmatpush1.msra.mxu0 0.0
      %2845 = vmatprep.subr.mxu0 0.0
      %2846 = vmatpush1.msra.mxu0 0.0
      %2847 = vmatprep.subr.mxu0 0.0
      %2848 = vmatpush1.msra.mxu0 0.0
      %2849 = vmatprep.subr.mxu0 0.0
      %2850 = vmatpush1.msra.mxu0 0.0
      %2851 = vmatprep.mubr.f32.mxu0 0.0
      %2852 = vmatmul.mubr.f32.gmra.mrb[0].mxu0 %v2785
      %v2853 = vpop.f32.mrb[0].mxu0
      %v2854 = vadd.f32 0.0, %v2853
      %v2855 = vpop.f32.mrb[0].mxu0
      %2856 = vdwg.mxu0
      %2857 = vrot.lane.b32.xlu0 %v2353, 80
      %v2858 = vpop.permute.xlu0 %2857
      %2859 = vrot.lane.b32.xlu0 %v2353, 16
      %v2860 = vpop.permute.xlu0 %2859
      %v2861 = vsel %vm1238, %v2858, 0
      %v2863 = vsel %vm1238, %v2860, 0
      %2865 = vmatprep.subr.mxu0 0.0
      %2866 = vmatpush1.xpose.msra.mxu0 %v2863
      %2867 = vmatprep.subr.mxu0 0.0
      %2868 = vmatpush1.xpose.msra.mxu0 0.0
      %2869 = vmatprep.subr.mxu0 0.0
      %2870 = vmatpush1.xpose.msra.mxu0 0.0
      %2871 = vmatprep.subr.mxu0 0.0
      %2872 = vmatpush1.xpose.msra.mxu0 0.0
      %2873 = vmatprep.subr.mxu0 0.0
      %2874 = vmatpush1.xpose.msra.mxu0 0.0
      %2875 = vmatprep.subr.mxu0 0.0
      %2876 = vmatpush1.xpose.msra.mxu0 0.0
      %2877 = vmatprep.subr.mxu0 0.0
      %2878 = vmatpush1.xpose.msra.mxu0 0.0
      %2879 = vmatprep.subr.mxu0 0.0
      %2880 = vmatpush1.xpose.msra.mxu0 0.0
      %2881 = vmatprep.subr.mxu0 0.0
      %2882 = vmatpush1.xpose.msra.mxu0 0.0
      %2883 = vmatprep.subr.mxu0 0.0
      %2884 = vmatpush1.xpose.msra.mxu0 0.0
      %2885 = vmatprep.subr.mxu0 0.0
      %2886 = vmatpush1.xpose.msra.mxu0 0.0
      %2887 = vmatprep.subr.mxu0 0.0
      %2888 = vmatpush1.xpose.msra.mxu0 0.0
      %2889 = vmatprep.subr.mxu0 0.0
      %2890 = vmatpush1.xpose.msra.mxu0 0.0
      %2891 = vmatprep.subr.mxu0 0.0
      %2892 = vmatpush1.xpose.msra.mxu0 0.0
      %2893 = vmatprep.subr.mxu0 0.0
      %2894 = vmatpush1.xpose.msra.mxu0 0.0
      %2895 = vmatprep.subr.mxu0 0.0
      %2896 = vmatpush1.xpose.msra.mxu0 0.0
      %2897 = vmatprep.subr.mxu0 0.0
      %2898 = vmatpush1.xpose.msra.mxu0 0.0
      %2899 = vmatprep.subr.mxu0 0.0
      %2900 = vmatpush1.xpose.msra.mxu0 0.0
      %2901 = vmatprep.subr.mxu0 0.0
      %2902 = vmatpush1.xpose.msra.mxu0 0.0
      %2903 = vmatprep.subr.mxu0 0.0
      %2904 = vmatpush1.xpose.msra.mxu0 0.0
      %2905 = vmatprep.subr.mxu0 0.0
      %2906 = vmatpush1.xpose.msra.mxu0 0.0
      %2907 = vmatprep.subr.mxu0 0.0
      %2908 = vmatpush1.xpose.msra.mxu0 0.0
      %2909 = vmatprep.subr.mxu0 0.0
      %2910 = vmatpush1.xpose.msra.mxu0 0.0
      %2911 = vmatprep.subr.mxu0 0.0
      %2912 = vmatpush1.xpose.msra.mxu0 0.0
      %2913 = vmatprep.subr.mxu0 0.0
      %2914 = vmatpush1.xpose.msra.mxu0 0.0
      %2915 = vmatprep.subr.mxu0 0.0
      %2916 = vmatpush1.xpose.msra.mxu0 0.0
      %2917 = vmatprep.subr.mxu0 0.0
      %2918 = vmatpush1.xpose.msra.mxu0 0.0
      %2919 = vmatprep.subr.mxu0 0.0
      %2920 = vmatpush1.xpose.msra.mxu0 0.0
      %2921 = vmatprep.subr.mxu0 0.0
      %2922 = vmatpush1.xpose.msra.mxu0 0.0
      %2923 = vmatprep.subr.mxu0 0.0
      %2924 = vmatpush1.xpose.msra.mxu0 0.0
      %2925 = vmatprep.subr.mxu0 0.0
      %2926 = vmatpush1.xpose.msra.mxu0 0.0
      %2927 = vmatprep.subr.mxu0 0.0
      %2928 = vmatpush1.xpose.msra.mxu0 0.0
      %2929 = vmatprep.mubr.f32.mxu0 0.0
      %2930 = vmatmul.mubr.f32.gmra.mrb[0].mxu0 %v2861
      %v2931 = vpop.f32.mrb[0].mxu0
      %v2932 = vadd.f32 0.0, %v2931
      %v2933 = vpop.f32.mrb[0].mxu0
      %2934 = vdwg.mxu0
      %v2935 = vmul.f32 %v2932, 0.25
      %v2936 = vadd.f32 %v2935, %v1110
      %v2937 = vsel %vm1315, %v2936, -inf
      %2938 = vmax.xlane.f32.xlu0 %v2937
      %v2939 = vpop.xlane.xlu0 %2938
      %v2940 = vsub.f32 %v2936, %v2939
      %v2941 = vmul.f32 %v2940, 1.442695
      %v2942 = vpow.pop %v2941
      %v2943 = vsel %vm1315, %v2942, 0.0
      %2944 = vadd.xlane.f32.xlu0 %v2943
      %v2945 = vpop.xlane.xlu0 %2944
      %v2946 = vrcp.pop %v2945
      %v2947 = vmul.f32 %v2942, %v2946
      %2948 = vrot.lane.b32.xlu0 %v2355, 80
      %v2949 = vpop.permute.xlu0 %2948
      %v2952 = vsel %vm1315, %v2947, 0
      %2954 = vmatprep.subr.mxu0 0.0
      %2955 = vmatpush1.msra.mxu0 %v2949
      %2956 = vmatprep.subr.mxu0 0.0
      %2957 = vmatpush1.msra.mxu0 0.0
      %2958 = vmatprep.subr.mxu0 0.0
      %2959 = vmatpush1.msra.mxu0 0.0
      %2960 = vmatprep.subr.mxu0 0.0
      %2961 = vmatpush1.msra.mxu0 0.0
      %2962 = vmatprep.subr.mxu0 0.0
      %2963 = vmatpush1.msra.mxu0 0.0
      %2964 = vmatprep.subr.mxu0 0.0
      %2965 = vmatpush1.msra.mxu0 0.0
      %2966 = vmatprep.subr.mxu0 0.0
      %2967 = vmatpush1.msra.mxu0 0.0
      %2968 = vmatprep.subr.mxu0 0.0
      %2969 = vmatpush1.msra.mxu0 0.0
      %2970 = vmatprep.subr.mxu0 0.0
      %2971 = vmatpush1.msra.mxu0 0.0
      %2972 = vmatprep.subr.mxu0 0.0
      %2973 = vmatpush1.msra.mxu0 0.0
      %2974 = vmatprep.subr.mxu0 0.0
      %2975 = vmatpush1.msra.mxu0 0.0
      %2976 = vmatprep.subr.mxu0 0.0
      %2977 = vmatpush1.msra.mxu0 0.0
      %2978 = vmatprep.subr.mxu0 0.0
      %2979 = vmatpush1.msra.mxu0 0.0
      %2980 = vmatprep.subr.mxu0 0.0
      %2981 = vmatpush1.msra.mxu0 0.0
      %2982 = vmatprep.subr.mxu0 0.0
      %2983 = vmatpush1.msra.mxu0 0.0
      %2984 = vmatprep.subr.mxu0 0.0
      %2985 = vmatpush1.msra.mxu0 0.0
      %2986 = vmatprep.subr.mxu0 0.0
      %2987 = vmatpush1.msra.mxu0 0.0
      %2988 = vmatprep.subr.mxu0 0.0
      %2989 = vmatpush1.msra.mxu0 0.0
      %2990 = vmatprep.subr.mxu0 0.0
      %2991 = vmatpush1.msra.mxu0 0.0
      %2992 = vmatprep.subr.mxu0 0.0
      %2993 = vmatpush1.msra.mxu0 0.0
      %2994 = vmatprep.subr.mxu0 0.0
      %2995 = vmatpush1.msra.mxu0 0.0
      %2996 = vmatprep.subr.mxu0 0.0
      %2997 = vmatpush1.msra.mxu0 0.0
      %2998 = vmatprep.subr.mxu0 0.0
      %2999 = vmatpush1.msra.mxu0 0.0
      %3000 = vmatprep.subr.mxu0 0.0
      %3001 = vmatpush1.msra.mxu0 0.0
      %3002 = vmatprep.subr.mxu0 0.0
      %3003 = vmatpush1.msra.mxu0 0.0
      %3004 = vmatprep.subr.mxu0 0.0
      %3005 = vmatpush1.msra.mxu0 0.0
      %3006 = vmatprep.subr.mxu0 0.0
      %3007 = vmatpush1.msra.mxu0 0.0
      %3008 = vmatprep.subr.mxu0 0.0
      %3009 = vmatpush1.msra.mxu0 0.0
      %3010 = vmatprep.subr.mxu0 0.0
      %3011 = vmatpush1.msra.mxu0 0.0
      %3012 = vmatprep.subr.mxu0 0.0
      %3013 = vmatpush1.msra.mxu0 0.0
      %3014 = vmatprep.subr.mxu0 0.0
      %3015 = vmatpush1.msra.mxu0 0.0
      %3016 = vmatprep.subr.mxu0 0.0
      %3017 = vmatpush1.msra.mxu0 0.0
      %3018 = vmatprep.mubr.f32.mxu0 0.0
      %3019 = vmatmul.mubr.f32.gmra.mrb[0].mxu0 %v2952
      %v3020 = vpop.f32.mrb[0].mxu0
      %v3021 = vadd.f32 0.0, %v3020
      %v3022 = vpop.f32.mrb[0].mxu0
      %3023 = vdwg.mxu0
      %3025 = vrot.lane.b32.xlu0 %v2687, 16
      %v3026 = vpop.permute.xlu0 %3025
      %3029 = vrot.lane.b32.xlu0 %v2854, 32
      %v3030 = vpop.permute.xlu0 %3029
      %3033 = vrot.lane.b32.xlu0 %v3021, 48
      %v3034 = vpop.permute.xlu0 %3033
      %v3036 = vsel %vm1238, %v2519, %v3026
      %v3037 = vsel %vm1915, %v3036, %v3030
      %v3038 = vsel %vm1917, %v3037, %v3034
      %v3039 = vpack.c.bf16 %v3038, %v3038
      %s3040 = scalar_lea.vmem %s8, 32
      %v3041 = vld [vmem:[%s3040] sm:$0xf]
      %v3042 = vld [vmem:[%s3040 + $0x4] sm:$0xf]
      %v3043 = vld [vmem:[%s3040 + $0x8] sm:$0xf]
      %v3044 = vld [vmem:[%s3040 + $0xc] sm:$0xf]
      %v3045 = vld [vmem:[%s3040 + $0x10] sm:$0xf]
      %v3046 = vld [vmem:[%s3040 + $0x14] sm:$0xf]
      %v3047 = vld [vmem:[%s3040 + $0x18] sm:$0xf]
      %v3048 = vld [vmem:[%s3040 + $0x1c] sm:$0xf]
      %v3057 = vunpack.c.l.b16 %v3041
      %v3058 = vunpack.c.l.b16 %v3042
      %v3059 = vunpack.c.l.b16 %v3043
      %v3060 = vunpack.c.l.b16 %v3044
      %v3061 = vunpack.c.l.b16 %v3045
      %v3062 = vunpack.c.l.b16 %v3046
      %v3063 = vunpack.c.l.b16 %v3047
      %v3064 = vunpack.c.l.b16 %v3048
      %v3065 = vpack.c.b16 %v3058, %v3057
      %v3066 = vpack.c.b16 %v3060, %v3059
      %v3067 = vpack.c.b16 %v3062, %v3061
      %v3068 = vpack.c.b16 %v3064, %v3063
      %v3074 = vsel %vm1113, %v3039, 0
      %3076 = vmatprep.subr.bf16.mxu0 0
      %3077 = vmatpush1.bf16.msra.mxu0 %v3065
      %3078 = vmatprep.subr.bf16.mxu0 0
      %3079 = vmatpush1.bf16.msra.mxu0 %v3066
      %3080 = vmatprep.subr.bf16.mxu0 0
      %3081 = vmatpush1.bf16.msra.mxu0 %v3067
      %3082 = vmatprep.subr.bf16.mxu0 0
      %3083 = vmatpush1.bf16.msra.mxu0 %v3068
      %3084 = vmatprep.subr.bf16.mxu0 0
      %3085 = vmatpush1.bf16.msra.mxu0 0
      %3086 = vmatprep.subr.bf16.mxu0 0
      %3087 = vmatpush1.bf16.msra.mxu0 0
      %3088 = vmatprep.subr.bf16.mxu0 0
      %3089 = vmatpush1.bf16.msra.mxu0 0
      %3090 = vmatprep.subr.bf16.mxu0 0
      %3091 = vmatpush1.bf16.msra.mxu0 0
      %3092 = vmatprep.subr.bf16.mxu0 0
      %3093 = vmatpush1.bf16.msra.mxu0 0
      %3094 = vmatprep.subr.bf16.mxu0 0
      %3095 = vmatpush1.bf16.msra.mxu0 0
      %3096 = vmatprep.subr.bf16.mxu0 0
      %3097 = vmatpush1.bf16.msra.mxu0 0
      %3098 = vmatprep.subr.bf16.mxu0 0
      %3099 = vmatpush1.bf16.msra.mxu0 0
      %3100 = vmatprep.subr.bf16.mxu0 0
      %3101 = vmatpush1.bf16.msra.mxu0 0
      %3102 = vmatprep.subr.bf16.mxu0 0
      %3103 = vmatpush1.bf16.msra.mxu0 0
      %3104 = vmatprep.subr.bf16.mxu0 0
      %3105 = vmatpush1.bf16.msra.mxu0 0
      %3106 = vmatprep.subr.bf16.mxu0 0
      %3107 = vmatpush1.bf16.msra.mxu0 0
      %3108 = vmatprep.mubr.bf16.mxu0 0
      %3109 = vmatmul.mubr.bf16.gmra.mrb[0].mxu0 %v3074
      %v3110 = vpop.f32.mrb[0].mxu0
      %v3111 = vadd.f32 0.0, %v3110
      %v3112 = vpop.f32.mrb[0].mxu0
      %v3113 = vpop.f32.mrb[0].mxu0
      %v3114 = vpop.f32.mrb[0].mxu0
      %3115 = vdwg.mxu0
      %v3116 = vadd.f32 %v2233, %v3111
      %s3117 = scalar_lea.vmem %s9, 1
      %v3118 = vld [vmem:[%s3117] sm:$0x1]
      %v3120 = vlaneseq
      %v3121 = vshrl.u32 %v3120, 7
      %v3122 = vsub.s32 0, %v3121
      %v3123 = vrot.slane %v3118, %v3122
      %v3125 = vadd.f32 %v3116, %v3123
      %s3126 = scalar_lea.vmem %s10, 1
      %v3127 = vld [vmem:[%s3126] sm:$0x1]
      %s3128 = scalar_lea.vmem %s11, 1
      %v3129 = vld [vmem:[%s3128] sm:$0x1]
      %v3130 = vsel %vm1113, %v3125, 0.0
      %3131 = vadd.xlane.f32.xlu0 %v3130
      %v3132 = vpop.xlane.xlu0 %3131
      %v3133 = vmul.f32 %v3132, %v1117
      %v3134 = vsub.f32 %v3125, %v3133
      %v3135 = vmul.f32 %v3134, %v3134
      %v3136 = vsel %vm1113, %v3135, 0.0
      %3137 = vadd.xlane.f32.xlu0 %v3136
      %v3138 = vpop.xlane.xlu0 %3137
      %v3139 = vmul.f32 %v3138, %v1117
      %v3140 = vadd.f32 %v3139, 1e-05
      %v3141 = vrsqrt.pop %v3140
      %v3142 = vmul.f32 %v3134, %v3141
      %v3144 = vlaneseq
      %v3145 = vshrl.u32 %v3144, 7
      %v3146 = vsub.s32 0, %v3145
      %v3147 = vrot.slane %v3127, %v3146
      %v3149 = vmul.f32 %v3142, %v3147
      %v3151 = vlaneseq
      %v3152 = vshrl.u32 %v3151, 7
      %v3153 = vsub.s32 0, %v3152
      %v3154 = vrot.slane %v3129, %v3153
      %v3156 = vadd.f32 %v3149, %v3154
      %v3157 = vpack.c.bf16 %v3156, %v3156
      %s3158 = scalar_lea.vmem %s12, 32
      %v3159 = vld [vmem:[%s3158] sm:$0xf]
      %v3160 = vld [vmem:[%s3158 + $0x4] sm:$0xf]
      %v3161 = vld [vmem:[%s3158 + $0x8] sm:$0xf]
      %v3162 = vld [vmem:[%s3158 + $0xc] sm:$0xf]
      %v3163 = vld [vmem:[%s3158 + $0x10] sm:$0xf]
      %v3164 = vld [vmem:[%s3158 + $0x14] sm:$0xf]
      %v3165 = vld [vmem:[%s3158 + $0x18] sm:$0xf]
      %v3166 = vld [vmem:[%s3158 + $0x1c] sm:$0xf]
      %s3167 = scalar_lea.vmem %s13, 1
      %v3168 = vld [vmem:[%s3167] sm:$0x1]
      %v3170 = vlaneseq
      %v3171 = vshrl.u32 %v3170, 7
      %v3172 = vsub.s32 0, %v3171
      %v3173 = vrot.slane %v3168, %v3172
      %v3183 = vunpack.c.l.b16 %v3159
      %v3184 = vunpack.c.l.b16 %v3160
      %v3185 = vunpack.c.l.b16 %v3161
      %v3186 = vunpack.c.l.b16 %v3162
      %v3187 = vunpack.c.l.b16 %v3163
      %v3188 = vunpack.c.l.b16 %v3164
      %v3189 = vunpack.c.l.b16 %v3165
      %v3190 = vunpack.c.l.b16 %v3166
      %v3191 = vpack.c.b16 %v3184, %v3183
      %v3192 = vpack.c.b16 %v3186, %v3185
      %v3193 = vpack.c.b16 %v3188, %v3187
      %v3194 = vpack.c.b16 %v3190, %v3189
      %v3200 = vsel %vm1113, %v3157, 0
      %3202 = vmatprep.subr.bf16.mxu0 0
      %3203 = vmatpush1.bf16.msra.mxu0 %v3191
      %3204 = vmatprep.subr.bf16.mxu0 0
      %3205 = vmatpush1.bf16.msra.mxu0 %v3192
      %3206 = vmatprep.subr.bf16.mxu0 0
      %3207 = vmatpush1.bf16.msra.mxu0 %v3193
      %3208 = vmatprep.subr.bf16.mxu0 0
      %3209 = vmatpush1.bf16.msra.mxu0 %v3194
      %3210 = vmatprep.subr.bf16.mxu0 0
      %3211 = vmatpush1.bf16.msra.mxu0 0
      %3212 = vmatprep.subr.bf16.mxu0 0
      %3213 = vmatpush1.bf16.msra.mxu0 0
      %3214 = vmatprep.subr.bf16.mxu0 0
      %3215 = vmatpush1.bf16.msra.mxu0 0
      %3216 = vmatprep.subr.bf16.mxu0 0
      %3217 = vmatpush1.bf16.msra.mxu0 0
      %3218 = vmatprep.subr.bf16.mxu0 0
      %3219 = vmatpush1.bf16.msra.mxu0 0
      %3220 = vmatprep.subr.bf16.mxu0 0
      %3221 = vmatpush1.bf16.msra.mxu0 0
      %3222 = vmatprep.subr.bf16.mxu0 0
      %3223 = vmatpush1.bf16.msra.mxu0 0
      %3224 = vmatprep.subr.bf16.mxu0 0
      %3225 = vmatpush1.bf16.msra.mxu0 0
      %3226 = vmatprep.subr.bf16.mxu0 0
      %3227 = vmatpush1.bf16.msra.mxu0 0
      %3228 = vmatprep.subr.bf16.mxu0 0
      %3229 = vmatpush1.bf16.msra.mxu0 0
      %3230 = vmatprep.subr.bf16.mxu0 0
      %3231 = vmatpush1.bf16.msra.mxu0 0
      %3232 = vmatprep.subr.bf16.mxu0 0
      %3233 = vmatpush1.bf16.msra.mxu0 0
      %3234 = vmatprep.mubr.bf16.mxu0 0
      %3235 = vmatmul.mubr.bf16.gmra.mrb[0].mxu0 %v3200
      %v3236 = vpop.f32.mrb[0].mxu0
      %v3237 = vadd.f32 %v3173, %v3236
      %v3238 = vpop.f32.mrb[0].mxu0
      %v3239 = vpop.f32.mrb[0].mxu0
      %v3240 = vpop.f32.mrb[0].mxu0
      %3241 = vdwg.mxu0
      %v3242 = vmul.f32 %v3237, 0.5
      %v3243 = vmul.f32 %v3237, 0.70710677
      %v3244 = verf.f32.pop %v3243
      %v3245 = vadd.f32 %v3244, 1.0
      %v3246 = vmul.f32 %v3242, %v3245
      %v3247 = vpack.c.bf16 %v3246, %v3246
      %s3248 = scalar_lea.vmem %s14, 64
      %v3249 = vld [vmem:[%s3248] sm:$0xf]
      %v3250 = vld [vmem:[%s3248 + $0x4] sm:$0xf]
      %v3251 = vld [vmem:[%s3248 + $0x8] sm:$0xf]
      %v3252 = vld [vmem:[%s3248 + $0xc] sm:$0xf]
      %v3253 = vld [vmem:[%s3248 + $0x10] sm:$0xf]
      %v3254 = vld [vmem:[%s3248 + $0x14] sm:$0xf]
      %v3255 = vld [vmem:[%s3248 + $0x18] sm:$0xf]
      %v3256 = vld [vmem:[%s3248 + $0x1c] sm:$0xf]
      %v3257 = vld [vmem:[%s3248 + $0x20] sm:$0xf]
      %v3258 = vld [vmem:[%s3248 + $0x24] sm:$0xf]
      %v3259 = vld [vmem:[%s3248 + $0x28] sm:$0xf]
      %v3260 = vld [vmem:[%s3248 + $0x2c] sm:$0xf]
      %v3261 = vld [vmem:[%s3248 + $0x30] sm:$0xf]
      %v3262 = vld [vmem:[%s3248 + $0x34] sm:$0xf]
      %v3263 = vld [vmem:[%s3248 + $0x38] sm:$0xf]
      %v3264 = vld [vmem:[%s3248 + $0x3c] sm:$0xf]
      %s3265 = scalar_lea.vmem %s15, 1
      %v3266 = vld [vmem:[%s3265] sm:$0x1]
      %v3268 = vlaneseq
      %v3269 = vshrl.u32 %v3268, 7
      %v3270 = vsub.s32 0, %v3269
      %v3271 = vrot.slane %v3266, %v3270
      %v3289 = vunpack.c.l.b16 %v3249
      %v3290 = vunpack.c.l.b16 %v3250
      %v3291 = vunpack.c.l.b16 %v3251
      %v3292 = vunpack.c.l.b16 %v3252
      %v3293 = vunpack.c.l.b16 %v3253
      %v3294 = vunpack.c.l.b16 %v3254
      %v3295 = vunpack.c.l.b16 %v3255
      %v3296 = vunpack.c.l.b16 %v3256
      %v3297 = vunpack.c.l.b16 %v3257
      %v3298 = vunpack.c.l.b16 %v3258
      %v3299 = vunpack.c.l.b16 %v3259
      %v3300 = vunpack.c.l.b16 %v3260
      %v3301 = vunpack.c.l.b16 %v3261
      %v3302 = vunpack.c.l.b16 %v3262
      %v3303 = vunpack.c.l.b16 %v3263
      %v3304 = vunpack.c.l.b16 %v3264
      %v3305 = vpack.c.b16 %v3290, %v3289
      %v3306 = vpack.c.b16 %v3292, %v3291
      %v3307 = vpack.c.b16 %v3294, %v3293
      %v3308 = vpack.c.b16 %v3296, %v3295
      %v3309 = vpack.c.b16 %v3298, %v3297
      %v3310 = vpack.c.b16 %v3300, %v3299
      %v3311 = vpack.c.b16 %v3302, %v3301
      %v3312 = vpack.c.b16 %v3304, %v3303
      %3321 = vmatprep.subr.bf16.mxu0 0
      %3322 = vmatpush1.bf16.msra.mxu0 %v3305
      %3323 = vmatprep.subr.bf16.mxu0 0
      %3324 = vmatpush1.bf16.msra.mxu0 %v3306
      %3325 = vmatprep.subr.bf16.mxu0 0
      %3326 = vmatpush1.bf16.msra.mxu0 %v3307
      %3327 = vmatprep.subr.bf16.mxu0 0
      %3328 = vmatpush1.bf16.msra.mxu0 %v3308
      %3329 = vmatprep.subr.bf16.mxu0 0
      %3330 = vmatpush1.bf16.msra.mxu0 %v3309
      %3331 = vmatprep.subr.bf16.mxu0 0
      %3332 = vmatpush1.bf16.msra.mxu0 %v3310
      %3333 = vmatprep.subr.bf16.mxu0 0
      %3334 = vmatpush1.bf16.msra.mxu0 %v3311
      %3335 = vmatprep.subr.bf16.mxu0 0
      %3336 = vmatpush1.bf16.msra.mxu0 %v3312
      %3337 = vmatprep.subr.bf16.mxu0 0
      %3338 = vmatpush1.bf16.msra.mxu0 0
      %3339 = vmatprep.subr.bf16.mxu0 0
      %3340 = vmatpush1.bf16.msra.mxu0 0
      %3341 = vmatprep.subr.bf16.mxu0 0
      %3342 = vmatpush1.bf16.msra.mxu0 0
      %3343 = vmatprep.subr.bf16.mxu0 0
      %3344 = vmatpush1.bf16.msra.mxu0 0
      %3345 = vmatprep.subr.bf16.mxu0 0
      %3346 = vmatpush1.bf16.msra.mxu0 0
      %3347 = vmatprep.subr.bf16.mxu0 0
      %3348 = vmatpush1.bf16.msra.mxu0 0
      %3349 = vmatprep.subr.bf16.mxu0 0
      %3350 = vmatpush1.bf16.msra.mxu0 0
      %3351 = vmatprep.subr.bf16.mxu0 0
      %3352 = vmatpush1.bf16.msra.mxu0 0
      %3353 = vmatprep.mubr.bf16.mxu0 0
      %3354 = vmatmul.mubr.bf16.gmra.mrb[0].mxu0 %v3247
      %v3355 = vpop.f32.mrb[0].mxu0
      %v3356 = vadd.f32 %v3271, %v3355
      %v3357 = vpop.f32.mrb[0].mxu0
      %v3358 = vpop.f32.mrb[0].mxu0
      %v3359 = vpop.f32.mrb[0].mxu0
      %3360 = vdwg.mxu0
      %v3361 = vadd.f32 %v3125, %v3356
      %v3362 = vpack.c.bf16 %v3361, %v3361
      %v3363 = vld [vmem:[%s16] sm:$0xf]
      %v3364 = vld [vmem:[%s16 + $0x4] sm:$0xf]
      %v3365 = vld [vmem:[%s16 + $0x8] sm:$0xf]
      %v3366 = vld [vmem:[%s16 + $0xc] sm:$0xf]
      %v3367 = vld [vmem:[%s16 + $0x10] sm:$0xf]
      %v3368 = vld [vmem:[%s16 + $0x14] sm:$0xf]
      %v3369 = vld [vmem:[%s16 + $0x18] sm:$0xf]
      %v3370 = vld [vmem:[%s16 + $0x1c] sm:$0xf]
      %v3371 = vld [vmem:[%s17] sm:$0x1]
      %v3373 = vlaneseq
      %v3374 = vshrl.u32 %v3373, 7
      %v3375 = vsub.s32 0, %v3374
      %v3376 = vrot.slane %v3371, %v3375
      %v3386 = vunpack.c.l.b16 %v3363
      %v3387 = vunpack.c.l.b16 %v3364
      %v3388 = vunpack.c.l.b16 %v3365
      %v3389 = vunpack.c.l.b16 %v3366
      %v3390 = vunpack.c.l.b16 %v3367
      %v3391 = vunpack.c.l.b16 %v3368
      %v3392 = vunpack.c.l.b16 %v3369
      %v3393 = vunpack.c.l.b16 %v3370
      %v3394 = vpack.c.b16 %v3387, %v3386
      %v3395 = vpack.c.b16 %v3389, %v3388
      %v3396 = vpack.c.b16 %v3391, %v3390
      %v3397 = vpack.c.b16 %v3393, %v3392
      %v3403 = vsel %vm1113, %v3362, 0
      %3405 = vmatprep.subr.bf16.mxu0 0
      %3406 = vmatpush1.bf16.msra.mxu0 %v3394
      %3407 = vmatprep.subr.bf16.mxu0 0
      %3408 = vmatpush1.bf16.msra.mxu0 %v3395
      %3409 = vmatprep.subr.bf16.mxu0 0
      %3410 = vmatpush1.bf16.msra.mxu0 %v3396
      %3411 = vmatprep.subr.bf16.mxu0 0
      %3412 = vmatpush1.bf16.msra.mxu0 %v3397
      %3413 = vmatprep.subr.bf16.mxu0 0
      %3414 = vmatpush1.bf16.msra.mxu0 0
      %3415 = vmatprep.subr.bf16.mxu0 0
      %3416 = vmatpush1.bf16.msra.mxu0 0
      %3417 = vmatprep.subr.bf16.mxu0 0
      %3418 = vmatpush1.bf16.msra.mxu0 0
      %3419 = vmatprep.subr.bf16.mxu0 0
      %3420 = vmatpush1.bf16.msra.mxu0 0
      %3421 = vmatprep.subr.bf16.mxu0 0
      %3422 = vmatpush1.bf16.msra.mxu0 0
      %3423 = vmatprep.subr.bf16.mxu0 0
      %3424 = vmatpush1.bf16.msra.mxu0 0
      %3425 = vmatprep.subr.bf16.mxu0 0
      %3426 = vmatpush1.bf16.msra.mxu0 0
      %3427 = vmatprep.subr.bf16.mxu0 0
      %3428 = vmatpush1.bf16.msra.mxu0 0
      %3429 = vmatprep.subr.bf16.mxu0 0
      %3430 = vmatpush1.bf16.msra.mxu0 0
      %3431 = vmatprep.subr.bf16.mxu0 0
      %3432 = vmatpush1.bf16.msra.mxu0 0
      %3433 = vmatprep.subr.bf16.mxu0 0
      %3434 = vmatpush1.bf16.msra.mxu0 0
      %3435 = vmatprep.subr.bf16.mxu0 0
      %3436 = vmatpush1.bf16.msra.mxu0 0
      %3437 = vmatprep.mubr.bf16.mxu0 0
      %3438 = vmatmul.mubr.bf16.gmra.mrb[0].mxu0 %v3403
      %v3439 = vpop.f32.mrb[0].mxu0
      %v3440 = vadd.f32 %v3376, %v3439
      %v3441 = vpop.f32.mrb[0].mxu0
      %v3442 = vpop.f32.mrb[0].mxu0
      %v3443 = vpop.f32.mrb[0].mxu0
      %3444 = vdwg.mxu0
      %3445 = vst [vmem:[%s573] sm:$0xff] %v3440
      %p3446 = scmp.lt.s32.totalorder %s29, 1
      %s3447 = scalar_select %p3446, %s29, 1
      %s3448 = smul.addr %s3447, 8
      %s3449 = scalar_lea.vmem %s18, %s3448
      // Predicated region
      $region93: #{vit_forward.1} parent=91 // pred_check
        %p3450 = pneg %p430
      $region94: #{vit_forward.1} parent=91 // pred_check_branch
        %3452 = sbr.rel (%p3450) target = $region96
      $region95: #{vit_forward.1} parent=91 // pred_region
        _
      $region96: #{vit_forward.1} parent=91 // pred_fallthru
        _
    $region92: #{vit_forward.1} parent=5 // pred_fallthru
      _
    %p3453 = scmp.le.s32.totalorder 2, %s24
    // Predicated region
    $region97: #{vit_forward.1} parent=5 // pred_check
      %p3454 = pneg %p3453
    $region98: #{vit_forward.1} parent=5 // pred_check_branch
      %3456 = sbr.rel (%p3454) target = $region100
    $region99: #{vit_forward.1} parent=5 // pred_region
      %s3457 = ssub.s32 %s24, 2
      // Predicated region
      $region101: #{vit_forward.1} parent=99 // pred_check
        %p3458 = pneg %p436
      $region102: #{vit_forward.1} parent=99 // pred_check_branch
        %3460 = sbr.rel (%p3458) target = $region104
      $region103: #{vit_forward.1} parent=99 // pred_region
        %p3461 = scmp.lt.s32.totalorder %s30, 1
        %s3462 = scalar_select %p3461, %s30, 1
        %s3463 = smul.addr %s3462, 8
        %s3464 = scalar_lea.vmem %s18, %s3463
      $region104: #{vit_forward.1} parent=99 // pred_fallthru
        _
    $region100: #{vit_forward.1} parent=5 // pred_fallthru
      _
  $region6: #{vit_forward.1} parent=0 // loop_footer
    %s28 = sadd.s32 1, %s24
  $region7: #{vit_forward.1} parent=0 // loop_footer_branch
    %23 = sbr.rel target = $region3
  $region8: #{vit_forward.1} parent=0 // loop_exit
    _

</llo_original>
